<compile_context>
chip_gen: v6e
topology: v6e:2x2x1
jax: 0.10.0
libtpu: 0.0.40
codegen_flags: <defaults>
</compile_context>

<pallas_src>
import functools

import jax
import jax.numpy as jnp
from jax.experimental import pallas as pl
from jax.experimental.pallas import tpu as pltpu

EPS = 1e-5  # PyTorch LayerNorm default eps


def _layernorm(x, gamma, beta):
    # x: (L, C) f32; gamma/beta: (1, C) f32
    mu = jnp.mean(x, axis=-1, keepdims=True)
    var = jnp.mean((x - mu) ** 2, axis=-1, keepdims=True)
    return (x - mu) * jax.lax.rsqrt(var + EPS) * gamma + beta


def _cab_kernel(num_heads, head_dim, scale, approx_gelu,
                q_ref, kv_ref, qape_ref, kape_ref, pos_ref,
                g1q_ref, b1q_ref, g1kv_ref, b1kv_ref,
                wq_ref, wk_ref, wv_ref, wp_ref, bp_ref,
                g2_ref, b2_ref, w1_ref, bfc1_ref, w2_ref, bfc2_ref,
                o_ref, k_scr, v_scr):
    H, hd = num_heads, head_dim
    bf16 = jnp.bfloat16
    f32 = jnp.float32

    # ---- cache per-head K/V once per batch element (first q tile) ----------
    @pl.when(pl.program_id(1) == 0)
    def _cache_kv():
        kv_in = kv_ref[0]                                        # (Lkv, C) f32
        kvn = _layernorm(kv_in, g1kv_ref[...], b1kv_ref[...])
        xk = (kvn + kape_ref[0].astype(f32)).astype(bf16)        # k = kv + k_ape
        xv = kvn.astype(bf16)
        # lane-dense (Lkv, C) x (C, C) projections -> full MXU width
        k_full = jnp.dot(xk, wk_ref[...], preferred_element_type=f32).astype(bf16)
        v_full = jnp.dot(xv, wv_ref[...], preferred_element_type=f32).astype(bf16)
        # head split via static lane slices into attention-ready scratch layout
        for h in range(H):
            k_scr[h, :, :] = k_full[:, h * hd:(h + 1) * hd]
            v_scr[h, :, :] = v_full[:, h * hd:(h + 1) * hd]

    # ---- Q projection for this q tile (softmax scale folded into q) --------
    q_in = q_ref[0]                                              # (TQ, C) f32
    qn = _layernorm(q_in, g1q_ref[...], b1q_ref[...])
    xq = ((qn + qape_ref[0].astype(f32)) * scale).astype(bf16)
    q_full = jnp.dot(xq, wq_ref[...], preferred_element_type=f32).astype(bf16)  # (TQ, C)
    q_h = jnp.stack([q_full[:, h * hd:(h + 1) * hd] for h in range(H)], axis=0)  # (H,TQ,hd)

    # ---- attention: head-batched contractions against cached K/V -----------
    s = jnp.einsum('hqd,hkd->hqk', q_h, k_scr[...],
                   preferred_element_type=f32)                   # (H, TQ, Lkv) f32
    s = s + pos_ref[0].astype(f32)                               # untied positional bias
    s = s - jnp.max(s, axis=-1, keepdims=True)
    p = jnp.exp(s)
    denom = jnp.sum(p, axis=-1, keepdims=True)                   # (H, TQ, 1)
    ctx = jnp.einsum('hqk,hkd->hqd', p.astype(bf16), v_scr[...],
                     preferred_element_type=f32)                 # (H, TQ, hd) f32
    # normalize after PV: touches (H,TQ,hd) instead of (H,TQ,Lkv)
    ctx = (ctx * pl.reciprocal(denom, approx=True)).astype(bf16)

    # ---- output projection: lane-concat heads, single (TQ,C)x(C,C) matmul --
    ctx_m = jnp.concatenate([ctx[h] for h in range(H)], axis=-1)  # (TQ, C) bf16
    attn_out = jnp.dot(ctx_m, wp_ref[...], preferred_element_type=f32) + bp_ref[...]

    # ---- residual 1 ----
    x = q_in + attn_out

    # ---- norm2 + MLP ----
    y = _layernorm(x, g2_ref[...], b2_ref[...])
    h1 = jnp.dot(y.astype(bf16), w1_ref[...],
                 preferred_element_type=f32) + bfc1_ref[...]
    h1 = jax.nn.gelu(h1, approximate=approx_gelu)    # tanh GELU -> EUP (default)
    m = jnp.dot(h1.astype(bf16), w2_ref[...],
                preferred_element_type=f32) + bfc2_ref[...]

    # ---- residual 2 ----
    o_ref[0] = (x + m).astype(o_ref.dtype)


def cross_attention_block(q, kv, q_ape, k_ape, attn_pos, params, num_heads,
                          approx_gelu=True):
    B, Lq, C = q.shape
    Lkv = kv.shape[1]
    H = num_heads
    assert C % H == 0
    hd = C // H
    scale = hd ** (-0.5)
    hidden = params["w_fc1"].shape[1]

    # ---- generation-aware VMEM budget / q-tile size ------------------------
    try:
        vmem_cap = int(pltpu.get_tpu_info().vmem_capacity_bytes)
    except Exception:  # conservative fallback if the query is unavailable
        vmem_cap = 64 * 1024 * 1024
    big_vmem = vmem_cap > 64 * 1024 * 1024           # v5e / v6e: 128 MiB per TC
    vmem_limit = min(int(vmem_cap * 3 // 4), 100 * 1024 * 1024)

    max_tq = 512 if big_vmem else 256                # cap tiles on 64-MiB v7x
    tq = Lq
    for cand in (512, 256, 128):
        if cand <= max_tq and Lq >= cand and Lq % cand == 0:
            tq = cand
            break
    # TODO(synk): no padding/masking path for ragged Lq -- falls back to tq=Lq.
    n_tq = Lq // tq

    bf16 = jnp.bfloat16
    # Full (C, C) / (C, hidden) weights -> lane-dense MXU matmuls in-kernel.
    wq = params["w_q"].astype(bf16)
    wk = params["w_k"].astype(bf16)
    wv = params["w_v"].astype(bf16)
    wp = params["w_proj"].astype(bf16)
    w1 = params["w_fc1"].astype(bf16)
    w2 = params["w_fc2"].astype(bf16)
    # Stream positional inputs as bf16 (attn_pos dominates HBM traffic).
    q_ape = q_ape.astype(bf16)
    k_ape = k_ape.astype(bf16)
    attn_pos = attn_pos.astype(bf16)

    kernel = functools.partial(_cab_kernel, H, hd, scale, approx_gelu)

    qtile_spec = pl.BlockSpec((1, tq, C), lambda b, t: (b, t, 0))
    kvfull_spec = pl.BlockSpec((1, Lkv, C), lambda b, t: (b, 0, 0))
    pos_spec = pl.BlockSpec((1, H, tq, Lkv), lambda b, t: (b, 0, t, 0))

    # NOTE: weight specs keep default double-buffering; pipeline_mode=Buffered(1)
    # support varies across jax versions, so it is skipped for robustness.
    def full(*shape):
        return pl.BlockSpec(shape, lambda b, t: (0,) * len(shape))

    in_specs = [
        qtile_spec,                # q
        kvfull_spec,               # kv
        qtile_spec,                # q_ape
        kvfull_spec,               # k_ape
        pos_spec,                  # attn_pos
        full(1, C), full(1, C),    # norm1_q gamma, beta
        full(1, C), full(1, C),    # norm1_kv gamma, beta
        full(C, C),                # Wq
        full(C, C),                # Wk
        full(C, C),                # Wv
        full(C, C),                # Wproj
        full(1, C),                # bproj
        full(1, C), full(1, C),    # norm2 gamma, beta
        full(C, hidden), full(1, hidden),   # fc1
        full(hidden, C), full(1, C),        # fc2
    ]

    return pl.pallas_call(
        kernel,
        out_shape=jax.ShapeDtypeStruct((B, Lq, C), jnp.float32),
        grid_spec=pltpu.PrefetchScalarGridSpec(
            num_scalar_prefetch=0,
            grid=(B, n_tq),
            in_specs=in_specs,
            out_specs=pl.BlockSpec((1, tq, C), lambda b, t: (b, t, 0)),
            scratch_shapes=[
                pltpu.VMEM((H, Lkv, hd), bf16),   # cached per-head K
                pltpu.VMEM((H, Lkv, hd), bf16),   # cached per-head V
            ],
        ),
        compiler_params=pltpu.CompilerParams(
            dimension_semantics=("parallel", "arbitrary"),
            vmem_limit_bytes=vmem_limit,
        ),
    )(q, kv, q_ape, k_ape, attn_pos,
      params["g1q"], params["b1q"], params["g1kv"], params["b1kv"],
      wq, wk, wv, wp, params["b_proj"],
      params["g2"], params["b2"],
      w1, params["b_fc1"], w2, params["b_fc2"])


def make_params(key, C, mlp_ratio=4.0):
    hidden = int(C * mlp_ratio)
    ks = jax.random.split(key, 8)
    std = 0.02
    return {
        # LayerNorm affine params, stored as (1, C) for 2-D VMEM layout
        "g1q": jnp.ones((1, C), jnp.float32),  "b1q": jnp.zeros((1, C), jnp.float32),
        "g1kv": jnp.ones((1, C), jnp.float32), "b1kv": jnp.zeros((1, C), jnp.float32),
        "g2": jnp.ones((1, C), jnp.float32),   "b2": jnp.zeros((1, C), jnp.float32),
        # Linear weights, pre-transposed to (in, out); qkv_bias=False
        "w_q": jax.random.normal(ks[0], (C, C), jnp.float32) * std,
        "w_k": jax.random.normal(ks[1], (C, C), jnp.float32) * std,
        "w_v": jax.random.normal(ks[2], (C, C), jnp.float32) * std,
        "w_proj": jax.random.normal(ks[3], (C, C), jnp.float32) * std,
        "b_proj": jax.random.normal(ks[4], (1, C), jnp.float32) * std,
        "w_fc1": jax.random.normal(ks[5], (C, hidden), jnp.float32) * std,
        "b_fc1": jnp.zeros((1, hidden), jnp.float32),
        "w_fc2": jax.random.normal(ks[6], (hidden, C), jnp.float32) * std,
        "b_fc2": jnp.zeros((1, C), jnp.float32),
    }


def reference(q, kv, q_ape, k_ape, attn_pos, params, num_heads):
    # Pure-JAX f32 mirror of the PyTorch CrossAttentionBlock forward.
    B, Lq, C = q.shape
    H = num_heads
    hd = C // H
    scale = hd ** (-0.5)

    def ln(x, g, b):
        mu = x.mean(-1, keepdims=True)
        var = ((x - mu) ** 2).mean(-1, keepdims=True)
        return (x - mu) / jnp.sqrt(var + EPS) * g + b

    qn = ln(q, params["g1q"], params["b1q"])
    kvn = ln(kv, params["g1kv"], params["b1kv"])
    qp = (qn + q_ape) @ params["w_q"]
    kp = (kvn + k_ape) @ params["w_k"]
    vp = kvn @ params["w_v"]

    def split(x):
        Bn, L, _ = x.shape
        return x.reshape(Bn, L, H, hd).transpose(0, 2, 1, 3)

    qh, kh, vh = split(qp), split(kp), split(vp)
    attn = (qh @ kh.transpose(0, 1, 3, 2)) * scale + attn_pos
    attn = jax.nn.softmax(attn, axis=-1)
    ctx = (attn @ vh).transpose(0, 2, 1, 3).reshape(B, Lq, C)
    attn_out = ctx @ params["w_proj"] + params["b_proj"]
    x = q + attn_out
    y = ln(x, params["g2"], params["b2"])
    h1 = jax.nn.gelu(y @ params["w_fc1"] + params["b_fc1"], approximate=False)
    m = h1 @ params["w_fc2"] + params["b_fc2"]
    return x + m


if __name__ == "__main__":
    B, Lq, Lkv, C, H = 2, 16, 32, 64, 4

    key = jax.random.PRNGKey(0)
    k_q, k_kv, k_qa, k_ka, k_pos, k_par = jax.random.split(key, 6)

    q = jax.random.normal(k_q, (B, Lq, C), jnp.float32)
    kv = jax.random.normal(k_kv, (B, Lkv, C), jnp.float32)
    q_ape = jax.random.normal(k_qa, (B, Lq, C), jnp.float32) * 0.1
    k_ape = jax.random.normal(k_ka, (B, Lkv, C), jnp.float32) * 0.1
    attn_pos = jax.random.normal(k_pos, (B, H, Lq, Lkv), jnp.float32) * 0.1

    params = make_params(k_par, C)

    out = cross_attention_block(q, kv, q_ape, k_ape, attn_pos, params, num_heads=H)
    out = jax.block_until_ready(out)

    ref = jax.block_until_ready(reference(q, kv, q_ape, k_ape, attn_pos, params, H))

    assert out.shape == (B, Lq, C) and out.dtype == jnp.float32
    assert bool(jnp.all(jnp.isfinite(out)))
    max_err = float(jnp.max(jnp.abs(out - ref)))
    assert max_err < 7.5e-2, f"max abs error vs reference: {max_err}"
    print("KERNEL_OK")
</pallas_src>

<mosaic_0001>
module attributes {stable_mosaic.version = 11 : i64} {
  func.func @_cab_kernel(%arg0: i32, %arg1: i32, %arg2: memref<1x16x64xf32, #tpu.memory_space<vmem>>, %arg3: memref<1x32x64xf32, #tpu.memory_space<vmem>>, %arg4: memref<1x16x64xbf16, #tpu.memory_space<vmem>>, %arg5: memref<1x32x64xbf16, #tpu.memory_space<vmem>>, %arg6: memref<1x4x16x32xbf16, #tpu.memory_space<vmem>>, %arg7: memref<1x64xf32, #tpu.memory_space<vmem>>, %arg8: memref<1x64xf32, #tpu.memory_space<vmem>>, %arg9: memref<1x64xf32, #tpu.memory_space<vmem>>, %arg10: memref<1x64xf32, #tpu.memory_space<vmem>>, %arg11: memref<64x64xbf16, #tpu.memory_space<vmem>>, %arg12: memref<64x64xbf16, #tpu.memory_space<vmem>>, %arg13: memref<64x64xbf16, #tpu.memory_space<vmem>>, %arg14: memref<64x64xbf16, #tpu.memory_space<vmem>>, %arg15: memref<1x64xf32, #tpu.memory_space<vmem>>, %arg16: memref<1x64xf32, #tpu.memory_space<vmem>>, %arg17: memref<1x64xf32, #tpu.memory_space<vmem>>, %arg18: memref<64x256xbf16, #tpu.memory_space<vmem>>, %arg19: memref<1x256xf32, #tpu.memory_space<vmem>>, %arg20: memref<256x64xbf16, #tpu.memory_space<vmem>>, %arg21: memref<1x64xf32, #tpu.memory_space<vmem>>, %arg22: memref<1x16x64xf32, #tpu.memory_space<vmem>>, %arg23: memref<4x32x16xbf16, #tpu.memory_space<vmem>>, %arg24: memref<4x32x16xbf16, #tpu.memory_space<vmem>>) attributes {dimension_semantics = [#tpu.dimension_semantics<parallel>, #tpu.dimension_semantics<arbitrary>], iteration_bounds = array<i64: 2, 1>, scalar_prefetch = 0 : i64, scratch_operands = 2 : i64, tpu.core_type = #tpu.core_type<tc>, window_params = [{transform_indices = @transform_0, window_bounds = array<i64: 1, 16, 64>}, {transform_indices = @transform_1, window_bounds = array<i64: 1, 32, 64>}, {transform_indices = @transform_2, window_bounds = array<i64: 1, 16, 64>}, {transform_indices = @transform_3, window_bounds = array<i64: 1, 32, 64>}, {transform_indices = @transform_4, window_bounds = array<i64: 1, 4, 16, 32>}, {pipeline_mode = #tpu.pipeline_mode<synchronous>, transform_indices = @transform_5, window_bounds = array<i64: 1, 64>}, {pipeline_mode = #tpu.pipeline_mode<synchronous>, transform_indices = @transform_6, window_bounds = array<i64: 1, 64>}, {pipeline_mode = #tpu.pipeline_mode<synchronous>, transform_indices = @transform_7, window_bounds = array<i64: 1, 64>}, {pipeline_mode = #tpu.pipeline_mode<synchronous>, transform_indices = @transform_8, window_bounds = array<i64: 1, 64>}, {pipeline_mode = #tpu.pipeline_mode<synchronous>, transform_indices = @transform_9, window_bounds = array<i64: 64, 64>}, {pipeline_mode = #tpu.pipeline_mode<synchronous>, transform_indices = @transform_10, window_bounds = array<i64: 64, 64>}, {pipeline_mode = #tpu.pipeline_mode<synchronous>, transform_indices = @transform_11, window_bounds = array<i64: 64, 64>}, {pipeline_mode = #tpu.pipeline_mode<synchronous>, transform_indices = @transform_12, window_bounds = array<i64: 64, 64>}, {pipeline_mode = #tpu.pipeline_mode<synchronous>, transform_indices = @transform_13, window_bounds = array<i64: 1, 64>}, {pipeline_mode = #tpu.pipeline_mode<synchronous>, transform_indices = @transform_14, window_bounds = array<i64: 1, 64>}, {pipeline_mode = #tpu.pipeline_mode<synchronous>, transform_indices = @transform_15, window_bounds = array<i64: 1, 64>}, {pipeline_mode = #tpu.pipeline_mode<synchronous>, transform_indices = @transform_16, window_bounds = array<i64: 64, 256>}, {pipeline_mode = #tpu.pipeline_mode<synchronous>, transform_indices = @transform_17, window_bounds = array<i64: 1, 256>}, {pipeline_mode = #tpu.pipeline_mode<synchronous>, transform_indices = @transform_18, window_bounds = array<i64: 256, 64>}, {pipeline_mode = #tpu.pipeline_mode<synchronous>, transform_indices = @transform_19, window_bounds = array<i64: 1, 64>}, {transform_indices = @transform_20, window_bounds = array<i64: 1, 16, 64>}]} {
    %c0_i32 = arith.constant 0 : i32
    %0 = arith.cmpi eq, %arg1, %c0_i32 : i32
    %1 = arith.extui %0 : i1 to i32
    %c0_i32_0 = arith.constant 0 : i32
    %2 = arith.cmpi ne, %1, %c0_i32_0 : i32
    scf.if %2 {
      %c0_63 = arith.constant 0 : index
      %c0_64 = arith.constant 0 : index
      %c0_65 = arith.constant 0 : index
      %136 = vector.load %arg3[%c0_63, %c0_64, %c0_65] : memref<1x32x64xf32, #tpu.memory_space<vmem>>, vector<1x32x64xf32>
      %137 = vector.shape_cast %136 : vector<1x32x64xf32> to vector<32x64xf32>
      %c0_66 = arith.constant 0 : index
      %c0_67 = arith.constant 0 : index
      %138 = vector.load %arg9[%c0_66, %c0_67] : memref<1x64xf32, #tpu.memory_space<vmem>>, vector<1x64xf32>
      %c0_68 = arith.constant 0 : index
      %c0_69 = arith.constant 0 : index
      %139 = vector.load %arg10[%c0_68, %c0_69] : memref<1x64xf32, #tpu.memory_space<vmem>>, vector<1x64xf32>
      %cst_70 = arith.constant dense<0.000000e+00> : vector<32xf32>
      %140 = vector.multi_reduction <add>, %137, %cst_70 [1] : vector<32x64xf32> to vector<32xf32>
      %141 = vector.shape_cast %140 : vector<32xf32> to vector<32x1xf32>
      %cst_71 = arith.constant 6.400000e+01 : f32
      %142 = vector.broadcast %cst_71 : f32 to vector<32x1xf32>
      %143 = arith.divf %141, %142 : vector<32x1xf32>
      %144 = vector.broadcast %143 : vector<32x1xf32> to vector<32x64xf32>
      %145 = arith.subf %137, %144 : vector<32x64xf32>
      %146 = arith.mulf %145, %145 : vector<32x64xf32>
      %cst_72 = arith.constant dense<0.000000e+00> : vector<32xf32>
      %147 = vector.multi_reduction <add>, %146, %cst_72 [1] : vector<32x64xf32> to vector<32xf32>
      %148 = vector.shape_cast %147 : vector<32xf32> to vector<32x1xf32>
      %cst_73 = arith.constant 6.400000e+01 : f32
      %149 = vector.broadcast %cst_73 : f32 to vector<32x1xf32>
      %150 = arith.divf %148, %149 : vector<32x1xf32>
      %151 = vector.broadcast %143 : vector<32x1xf32> to vector<32x64xf32>
      %152 = arith.subf %137, %151 : vector<32x64xf32>
      %cst_74 = arith.constant 9.99999974E-6 : f32
      %153 = vector.broadcast %cst_74 : f32 to vector<32x1xf32>
      %154 = arith.addf %150, %153 : vector<32x1xf32>
      %155 = math.rsqrt %154 : vector<32x1xf32>
      %156 = vector.broadcast %155 : vector<32x1xf32> to vector<32x64xf32>
      %157 = arith.mulf %152, %156 : vector<32x64xf32>
      %158 = vector.broadcast %138 : vector<1x64xf32> to vector<32x64xf32>
      %159 = arith.mulf %157, %158 : vector<32x64xf32>
      %160 = vector.broadcast %139 : vector<1x64xf32> to vector<32x64xf32>
      %161 = arith.addf %159, %160 : vector<32x64xf32>
      %c0_75 = arith.constant 0 : index
      %c0_76 = arith.constant 0 : index
      %c0_77 = arith.constant 0 : index
      %162 = vector.load %arg5[%c0_75, %c0_76, %c0_77] : memref<1x32x64xbf16, #tpu.memory_space<vmem>>, vector<1x32x64xbf16>
      %163 = vector.shape_cast %162 : vector<1x32x64xbf16> to vector<32x64xbf16>
      %164 = arith.extf %163 : vector<32x64xbf16> to vector<32x64xf32>
      %165 = arith.addf %161, %164 : vector<32x64xf32>
      %166 = arith.truncf %165 : vector<32x64xf32> to vector<32x64xbf16>
      %167 = arith.truncf %161 : vector<32x64xf32> to vector<32x64xbf16>
      %c0_78 = arith.constant 0 : index
      %c0_79 = arith.constant 0 : index
      %168 = vector.load %arg12[%c0_78, %c0_79] : memref<64x64xbf16, #tpu.memory_space<vmem>>, vector<64x64xbf16>
      %cst_80 = arith.constant dense<0.000000e+00> : vector<32x64xf32>
      %169 = tpu.matmul %166, %168, %cst_80 {dimension_numbers = #tpu.dot_dimension_numbers<[1], [0], [0], [1], [0, 0, 1, 1], [], []>} : vector<32x64xbf16>, vector<64x64xbf16>, vector<32x64xf32> -> vector<32x64xf32>
      %170 = arith.truncf %169 : vector<32x64xf32> to vector<32x64xbf16>
      %c0_81 = arith.constant 0 : index
      %c0_82 = arith.constant 0 : index
      %171 = vector.load %arg13[%c0_81, %c0_82] : memref<64x64xbf16, #tpu.memory_space<vmem>>, vector<64x64xbf16>
      %cst_83 = arith.constant dense<0.000000e+00> : vector<32x64xf32>
      %172 = tpu.matmul %167, %171, %cst_83 {dimension_numbers = #tpu.dot_dimension_numbers<[1], [0], [0], [1], [0, 0, 1, 1], [], []>} : vector<32x64xbf16>, vector<64x64xbf16>, vector<32x64xf32> -> vector<32x64xf32>
      %173 = arith.truncf %172 : vector<32x64xf32> to vector<32x64xbf16>
      %174 = vector.extract_strided_slice %170 {offsets = [0, 0], sizes = [32, 16], strides = [1, 1]} : vector<32x64xbf16> to vector<32x16xbf16>
      %c0_84 = arith.constant 0 : index
      %c0_85 = arith.constant 0 : index
      %c0_86 = arith.constant 0 : index
      %175 = vector.load %arg23[%c0_84, %c0_85, %c0_86] : memref<4x32x16xbf16, #tpu.memory_space<vmem>>, vector<1x32x16xbf16>
      %176 = vector.shape_cast %175 : vector<1x32x16xbf16> to vector<32x16xbf16>
      %177 = vector.shape_cast %174 : vector<32x16xbf16> to vector<1x32x16xbf16>
      tpu.vector_store %arg23[%c0_84, %c0_85, %c0_86], %177 {strides = array<i32>} : memref<4x32x16xbf16, #tpu.memory_space<vmem>>, vector<1x32x16xbf16>,
      %178 = vector.extract_strided_slice %173 {offsets = [0, 0], sizes = [32, 16], strides = [1, 1]} : vector<32x64xbf16> to vector<32x16xbf16>
      %c0_87 = arith.constant 0 : index
      %c0_88 = arith.constant 0 : index
      %c0_89 = arith.constant 0 : index
      %179 = vector.load %arg24[%c0_87, %c0_88, %c0_89] : memref<4x32x16xbf16, #tpu.memory_space<vmem>>, vector<1x32x16xbf16>
      %180 = vector.shape_cast %179 : vector<1x32x16xbf16> to vector<32x16xbf16>
      %181 = vector.shape_cast %178 : vector<32x16xbf16> to vector<1x32x16xbf16>
      tpu.vector_store %arg24[%c0_87, %c0_88, %c0_89], %181 {strides = array<i32>} : memref<4x32x16xbf16, #tpu.memory_space<vmem>>, vector<1x32x16xbf16>,
      %182 = vector.extract_strided_slice %170 {offsets = [0, 16], sizes = [32, 16], strides = [1, 1]} : vector<32x64xbf16> to vector<32x16xbf16>
      %c1 = arith.constant 1 : index
      %c0_90 = arith.constant 0 : index
      %c0_91 = arith.constant 0 : index
      %183 = vector.load %arg23[%c1, %c0_90, %c0_91] : memref<4x32x16xbf16, #tpu.memory_space<vmem>>, vector<1x32x16xbf16>
      %184 = vector.shape_cast %183 : vector<1x32x16xbf16> to vector<32x16xbf16>
      %185 = vector.shape_cast %182 : vector<32x16xbf16> to vector<1x32x16xbf16>
      tpu.vector_store %arg23[%c1, %c0_90, %c0_91], %185 {strides = array<i32>} : memref<4x32x16xbf16, #tpu.memory_space<vmem>>, vector<1x32x16xbf16>,
      %186 = vector.extract_strided_slice %173 {offsets = [0, 16], sizes = [32, 16], strides = [1, 1]} : vector<32x64xbf16> to vector<32x16xbf16>
      %c1_92 = arith.constant 1 : index
      %c0_93 = arith.constant 0 : index
      %c0_94 = arith.constant 0 : index
      %187 = vector.load %arg24[%c1_92, %c0_93, %c0_94] : memref<4x32x16xbf16, #tpu.memory_space<vmem>>, vector<1x32x16xbf16>
      %188 = vector.shape_cast %187 : vector<1x32x16xbf16> to vector<32x16xbf16>
      %189 = vector.shape_cast %186 : vector<32x16xbf16> to vector<1x32x16xbf16>
      tpu.vector_store %arg24[%c1_92, %c0_93, %c0_94], %189 {strides = array<i32>} : memref<4x32x16xbf16, #tpu.memory_space<vmem>>, vector<1x32x16xbf16>,
      %190 = vector.extract_strided_slice %170 {offsets = [0, 32], sizes = [32, 16], strides = [1, 1]} : vector<32x64xbf16> to vector<32x16xbf16>
      %c2 = arith.constant 2 : index
      %c0_95 = arith.constant 0 : index
      %c0_96 = arith.constant 0 : index
      %191 = vector.load %arg23[%c2, %c0_95, %c0_96] : memref<4x32x16xbf16, #tpu.memory_space<vmem>>, vector<1x32x16xbf16>
      %192 = vector.shape_cast %191 : vector<1x32x16xbf16> to vector<32x16xbf16>
      %193 = vector.shape_cast %190 : vector<32x16xbf16> to vector<1x32x16xbf16>
      tpu.vector_store %arg23[%c2, %c0_95, %c0_96], %193 {strides = array<i32>} : memref<4x32x16xbf16, #tpu.memory_space<vmem>>, vector<1x32x16xbf16>,
      %194 = vector.extract_strided_slice %173 {offsets = [0, 32], sizes = [32, 16], strides = [1, 1]} : vector<32x64xbf16> to vector<32x16xbf16>
      %c2_97 = arith.constant 2 : index
      %c0_98 = arith.constant 0 : index
      %c0_99 = arith.constant 0 : index
      %195 = vector.load %arg24[%c2_97, %c0_98, %c0_99] : memref<4x32x16xbf16, #tpu.memory_space<vmem>>, vector<1x32x16xbf16>
      %196 = vector.shape_cast %195 : vector<1x32x16xbf16> to vector<32x16xbf16>
      %197 = vector.shape_cast %194 : vector<32x16xbf16> to vector<1x32x16xbf16>
      tpu.vector_store %arg24[%c2_97, %c0_98, %c0_99], %197 {strides = array<i32>} : memref<4x32x16xbf16, #tpu.memory_space<vmem>>, vector<1x32x16xbf16>,
      %198 = vector.extract_strided_slice %170 {offsets = [0, 48], sizes = [32, 16], strides = [1, 1]} : vector<32x64xbf16> to vector<32x16xbf16>
      %c3 = arith.constant 3 : index
      %c0_100 = arith.constant 0 : index
      %c0_101 = arith.constant 0 : index
      %199 = vector.load %arg23[%c3, %c0_100, %c0_101] : memref<4x32x16xbf16, #tpu.memory_space<vmem>>, vector<1x32x16xbf16>
      %200 = vector.shape_cast %199 : vector<1x32x16xbf16> to vector<32x16xbf16>
      %201 = vector.shape_cast %198 : vector<32x16xbf16> to vector<1x32x16xbf16>
      tpu.vector_store %arg23[%c3, %c0_100, %c0_101], %201 {strides = array<i32>} : memref<4x32x16xbf16, #tpu.memory_space<vmem>>, vector<1x32x16xbf16>,
      %202 = vector.extract_strided_slice %173 {offsets = [0, 48], sizes = [32, 16], strides = [1, 1]} : vector<32x64xbf16> to vector<32x16xbf16>
      %c3_102 = arith.constant 3 : index
      %c0_103 = arith.constant 0 : index
      %c0_104 = arith.constant 0 : index
      %203 = vector.load %arg24[%c3_102, %c0_103, %c0_104] : memref<4x32x16xbf16, #tpu.memory_space<vmem>>, vector<1x32x16xbf16>
      %204 = vector.shape_cast %203 : vector<1x32x16xbf16> to vector<32x16xbf16>
      %205 = vector.shape_cast %202 : vector<32x16xbf16> to vector<1x32x16xbf16>
      tpu.vector_store %arg24[%c3_102, %c0_103, %c0_104], %205 {strides = array<i32>} : memref<4x32x16xbf16, #tpu.memory_space<vmem>>, vector<1x32x16xbf16>,
    } else {
    }
    %c0 = arith.constant 0 : index
    %c0_1 = arith.constant 0 : index
    %c0_2 = arith.constant 0 : index
    %3 = vector.load %arg2[%c0, %c0_1, %c0_2] : memref<1x16x64xf32, #tpu.memory_space<vmem>>, vector<1x16x64xf32>
    %4 = vector.shape_cast %3 : vector<1x16x64xf32> to vector<16x64xf32>
    %c0_3 = arith.constant 0 : index
    %c0_4 = arith.constant 0 : index
    %5 = vector.load %arg7[%c0_3, %c0_4] : memref<1x64xf32, #tpu.memory_space<vmem>>, vector<1x64xf32>
    %c0_5 = arith.constant 0 : index
    %c0_6 = arith.constant 0 : index
    %6 = vector.load %arg8[%c0_5, %c0_6] : memref<1x64xf32, #tpu.memory_space<vmem>>, vector<1x64xf32>
    %cst = arith.constant dense<0.000000e+00> : vector<16xf32>
    %7 = vector.multi_reduction <add>, %4, %cst [1] : vector<16x64xf32> to vector<16xf32>
    %8 = vector.shape_cast %7 : vector<16xf32> to vector<16x1xf32>
    %cst_7 = arith.constant 6.400000e+01 : f32
    %9 = vector.broadcast %cst_7 : f32 to vector<16x1xf32>
    %10 = arith.divf %8, %9 : vector<16x1xf32>
    %11 = vector.broadcast %10 : vector<16x1xf32> to vector<16x64xf32>
    %12 = arith.subf %4, %11 : vector<16x64xf32>
    %13 = arith.mulf %12, %12 : vector<16x64xf32>
    %cst_8 = arith.constant dense<0.000000e+00> : vector<16xf32>
    %14 = vector.multi_reduction <add>, %13, %cst_8 [1] : vector<16x64xf32> to vector<16xf32>
    %15 = vector.shape_cast %14 : vector<16xf32> to vector<16x1xf32>
    %cst_9 = arith.constant 6.400000e+01 : f32
    %16 = vector.broadcast %cst_9 : f32 to vector<16x1xf32>
    %17 = arith.divf %15, %16 : vector<16x1xf32>
    %18 = vector.broadcast %10 : vector<16x1xf32> to vector<16x64xf32>
    %19 = arith.subf %4, %18 : vector<16x64xf32>
    %cst_10 = arith.constant 9.99999974E-6 : f32
    %20 = vector.broadcast %cst_10 : f32 to vector<16x1xf32>
    %21 = arith.addf %17, %20 : vector<16x1xf32>
    %22 = math.rsqrt %21 : vector<16x1xf32>
    %23 = vector.broadcast %22 : vector<16x1xf32> to vector<16x64xf32>
    %24 = arith.mulf %19, %23 : vector<16x64xf32>
    %25 = vector.broadcast %5 : vector<1x64xf32> to vector<16x64xf32>
    %26 = arith.mulf %24, %25 : vector<16x64xf32>
    %27 = vector.broadcast %6 : vector<1x64xf32> to vector<16x64xf32>
    %28 = arith.addf %26, %27 : vector<16x64xf32>
    %c0_11 = arith.constant 0 : index
    %c0_12 = arith.constant 0 : index
    %c0_13 = arith.constant 0 : index
    %29 = vector.load %arg4[%c0_11, %c0_12, %c0_13] : memref<1x16x64xbf16, #tpu.memory_space<vmem>>, vector<1x16x64xbf16>
    %30 = vector.shape_cast %29 : vector<1x16x64xbf16> to vector<16x64xbf16>
    %31 = arith.extf %30 : vector<16x64xbf16> to vector<16x64xf32>
    %32 = arith.addf %28, %31 : vector<16x64xf32>
    %cst_14 = arith.constant 2.500000e-01 : f32
    %33 = vector.broadcast %cst_14 : f32 to vector<16x64xf32>
    %34 = arith.mulf %32, %33 : vector<16x64xf32>
    %35 = arith.truncf %34 : vector<16x64xf32> to vector<16x64xbf16>
    %c0_15 = arith.constant 0 : index
    %c0_16 = arith.constant 0 : index
    %36 = vector.load %arg11[%c0_15, %c0_16] : memref<64x64xbf16, #tpu.memory_space<vmem>>, vector<64x64xbf16>
    %cst_17 = arith.constant dense<0.000000e+00> : vector<16x64xf32>
    %37 = tpu.matmul %35, %36, %cst_17 {dimension_numbers = #tpu.dot_dimension_numbers<[1], [0], [0], [1], [0, 0, 1, 1], [], []>} : vector<16x64xbf16>, vector<64x64xbf16>, vector<16x64xf32> -> vector<16x64xf32>
    %38 = arith.truncf %37 : vector<16x64xf32> to vector<16x64xbf16>
    %39 = vector.extract_strided_slice %38 {offsets = [0, 0], sizes = [16, 16], strides = [1, 1]} : vector<16x64xbf16> to vector<16x16xbf16>
    %40 = vector.extract_strided_slice %38 {offsets = [0, 16], sizes = [16, 16], strides = [1, 1]} : vector<16x64xbf16> to vector<16x16xbf16>
    %41 = vector.extract_strided_slice %38 {offsets = [0, 32], sizes = [16, 16], strides = [1, 1]} : vector<16x64xbf16> to vector<16x16xbf16>
    %42 = vector.extract_strided_slice %38 {offsets = [0, 48], sizes = [16, 16], strides = [1, 1]} : vector<16x64xbf16> to vector<16x16xbf16>
    %43 = vector.shape_cast %39 : vector<16x16xbf16> to vector<1x16x16xbf16>
    %44 = vector.shape_cast %40 : vector<16x16xbf16> to vector<1x16x16xbf16>
    %45 = vector.shape_cast %41 : vector<16x16xbf16> to vector<1x16x16xbf16>
    %46 = vector.shape_cast %42 : vector<16x16xbf16> to vector<1x16x16xbf16>
    %47 = tpu.concatenate %43, %44, %45, %46 in 0 : vector<1x16x16xbf16>, vector<1x16x16xbf16>, vector<1x16x16xbf16>, vector<1x16x16xbf16> -> vector<4x16x16xbf16>
    %c0_18 = arith.constant 0 : index
    %c0_19 = arith.constant 0 : index
    %c0_20 = arith.constant 0 : index
    %48 = vector.load %arg23[%c0_18, %c0_19, %c0_20] : memref<4x32x16xbf16, #tpu.memory_space<vmem>>, vector<4x32x16xbf16>
    "tpu.trace_start"() <{level = 10 : i32, message = "hqd,hkd->hqk"}> : () -> ()
    %cst_21 = arith.constant dense<0.000000e+00> : vector<4x16x32xf32>
    %49 = tpu.matmul %47, %48, %cst_21 {dimension_numbers = #tpu.dot_dimension_numbers<[2], [2], [1], [1], [0, 0, 0, 1, 1, 1], [0], [0]>} : vector<4x16x16xbf16>, vector<4x32x16xbf16>, vector<4x16x32xf32> -> vector<4x16x32xf32>
    "tpu.trace_stop"() : () -> ()
    %c0_22 = arith.constant 0 : index
    %c0_23 = arith.constant 0 : index
    %c0_24 = arith.constant 0 : index
    %c0_25 = arith.constant 0 : index
    %50 = vector.load %arg6[%c0_22, %c0_23, %c0_24, %c0_25] : memref<1x4x16x32xbf16, #tpu.memory_space<vmem>>, vector<1x4x16x32xbf16>
    %51 = vector.shape_cast %50 : vector<1x4x16x32xbf16> to vector<4x16x32xbf16>
    %52 = arith.extf %51 : vector<4x16x32xbf16> to vector<4x16x32xf32>
    %53 = arith.addf %49, %52 : vector<4x16x32xf32>
    %cst_26 = arith.constant dense<0xFF800000> : vector<4x16xf32>
    %54 = vector.multi_reduction <maximumf>, %53, %cst_26 [2] : vector<4x16x32xf32> to vector<4x16xf32>
    %55 = vector.shape_cast %54 : vector<4x16xf32> to vector<4x16x1xf32>
    %56 = vector.broadcast %55 : vector<4x16x1xf32> to vector<4x16x32xf32>
    %57 = arith.subf %53, %56 : vector<4x16x32xf32>
    %58 = math.exp %57 : vector<4x16x32xf32>
    %cst_27 = arith.constant dense<0.000000e+00> : vector<4x16xf32>
    %59 = vector.multi_reduction <add>, %58, %cst_27 [2] : vector<4x16x32xf32> to vector<4x16xf32>
    %60 = vector.shape_cast %59 : vector<4x16xf32> to vector<4x16x1xf32>
    %61 = arith.truncf %58 : vector<4x16x32xf32> to vector<4x16x32xbf16>
    %c0_28 = arith.constant 0 : index
    %c0_29 = arith.constant 0 : index
    %c0_30 = arith.constant 0 : index
    %62 = vector.load %arg24[%c0_28, %c0_29, %c0_30] : memref<4x32x16xbf16, #tpu.memory_space<vmem>>, vector<4x32x16xbf16>
    "tpu.trace_start"() <{level = 10 : i32, message = "hqk,hkd->hqd"}> : () -> ()
    %cst_31 = arith.constant dense<0.000000e+00> : vector<4x16x16xf32>
    %63 = tpu.matmul %61, %62, %cst_31 {dimension_numbers = #tpu.dot_dimension_numbers<[2], [1], [1], [2], [0, 0, 0, 1, 1, 2], [0], [0]>} : vector<4x16x32xbf16>, vector<4x32x16xbf16>, vector<4x16x16xf32> -> vector<4x16x16xf32>
    "tpu.trace_stop"() : () -> ()
    %64 = tpu.reciprocal %60 {approx = true} : vector<4x16x1xf32> -> vector<4x16x1xf32>
    %65 = vector.broadcast %64 : vector<4x16x1xf32> to vector<4x16x16xf32>
    %66 = arith.mulf %63, %65 : vector<4x16x16xf32>
    %67 = arith.truncf %66 : vector<4x16x16xf32> to vector<4x16x16xbf16>
    %68 = vector.extract_strided_slice %67 {offsets = [0, 0, 0], sizes = [1, 16, 16], strides = [1, 1, 1]} : vector<4x16x16xbf16> to vector<1x16x16xbf16>
    %69 = vector.shape_cast %68 : vector<1x16x16xbf16> to vector<16x16xbf16>
    %70 = vector.extract_strided_slice %67 {offsets = [1, 0, 0], sizes = [1, 16, 16], strides = [1, 1, 1]} : vector<4x16x16xbf16> to vector<1x16x16xbf16>
    %71 = vector.shape_cast %70 : vector<1x16x16xbf16> to vector<16x16xbf16>
    %72 = vector.extract_strided_slice %67 {offsets = [2, 0, 0], sizes = [1, 16, 16], strides = [1, 1, 1]} : vector<4x16x16xbf16> to vector<1x16x16xbf16>
    %73 = vector.shape_cast %72 : vector<1x16x16xbf16> to vector<16x16xbf16>
    %74 = vector.extract_strided_slice %67 {offsets = [3, 0, 0], sizes = [1, 16, 16], strides = [1, 1, 1]} : vector<4x16x16xbf16> to vector<1x16x16xbf16>
    %75 = vector.shape_cast %74 : vector<1x16x16xbf16> to vector<16x16xbf16>
    %76 = tpu.concatenate %69, %71, %73, %75 in 1 : vector<16x16xbf16>, vector<16x16xbf16>, vector<16x16xbf16>, vector<16x16xbf16> -> vector<16x64xbf16>
    %c0_32 = arith.constant 0 : index
    %c0_33 = arith.constant 0 : index
    %77 = vector.load %arg14[%c0_32, %c0_33] : memref<64x64xbf16, #tpu.memory_space<vmem>>, vector<64x64xbf16>
    %cst_34 = arith.constant dense<0.000000e+00> : vector<16x64xf32>
    %78 = tpu.matmul %76, %77, %cst_34 {dimension_numbers = #tpu.dot_dimension_numbers<[1], [0], [0], [1], [0, 0, 1, 1], [], []>} : vector<16x64xbf16>, vector<64x64xbf16>, vector<16x64xf32> -> vector<16x64xf32>
    %c0_35 = arith.constant 0 : index
    %c0_36 = arith.constant 0 : index
    %79 = vector.load %arg15[%c0_35, %c0_36] : memref<1x64xf32, #tpu.memory_space<vmem>>, vector<1x64xf32>
    %80 = vector.broadcast %79 : vector<1x64xf32> to vector<16x64xf32>
    %81 = arith.addf %78, %80 : vector<16x64xf32>
    %82 = arith.addf %4, %81 : vector<16x64xf32>
    %c0_37 = arith.constant 0 : index
    %c0_38 = arith.constant 0 : index
    %83 = vector.load %arg16[%c0_37, %c0_38] : memref<1x64xf32, #tpu.memory_space<vmem>>, vector<1x64xf32>
    %c0_39 = arith.constant 0 : index
    %c0_40 = arith.constant 0 : index
    %84 = vector.load %arg17[%c0_39, %c0_40] : memref<1x64xf32, #tpu.memory_space<vmem>>, vector<1x64xf32>
    %cst_41 = arith.constant dense<0.000000e+00> : vector<16xf32>
    %85 = vector.multi_reduction <add>, %82, %cst_41 [1] : vector<16x64xf32> to vector<16xf32>
    %86 = vector.shape_cast %85 : vector<16xf32> to vector<16x1xf32>
    %cst_42 = arith.constant 6.400000e+01 : f32
    %87 = vector.broadcast %cst_42 : f32 to vector<16x1xf32>
    %88 = arith.divf %86, %87 : vector<16x1xf32>
    %89 = vector.broadcast %88 : vector<16x1xf32> to vector<16x64xf32>
    %90 = arith.subf %82, %89 : vector<16x64xf32>
    %91 = arith.mulf %90, %90 : vector<16x64xf32>
    %cst_43 = arith.constant dense<0.000000e+00> : vector<16xf32>
    %92 = vector.multi_reduction <add>, %91, %cst_43 [1] : vector<16x64xf32> to vector<16xf32>
    %93 = vector.shape_cast %92 : vector<16xf32> to vector<16x1xf32>
    %cst_44 = arith.constant 6.400000e+01 : f32
    %94 = vector.broadcast %cst_44 : f32 to vector<16x1xf32>
    %95 = arith.divf %93, %94 : vector<16x1xf32>
    %96 = vector.broadcast %88 : vector<16x1xf32> to vector<16x64xf32>
    %97 = arith.subf %82, %96 : vector<16x64xf32>
    %cst_45 = arith.constant 9.99999974E-6 : f32
    %98 = vector.broadcast %cst_45 : f32 to vector<16x1xf32>
    %99 = arith.addf %95, %98 : vector<16x1xf32>
    %100 = math.rsqrt %99 : vector<16x1xf32>
    %101 = vector.broadcast %100 : vector<16x1xf32> to vector<16x64xf32>
    %102 = arith.mulf %97, %101 : vector<16x64xf32>
    %103 = vector.broadcast %83 : vector<1x64xf32> to vector<16x64xf32>
    %104 = arith.mulf %102, %103 : vector<16x64xf32>
    %105 = vector.broadcast %84 : vector<1x64xf32> to vector<16x64xf32>
    %106 = arith.addf %104, %105 : vector<16x64xf32>
    %107 = arith.truncf %106 : vector<16x64xf32> to vector<16x64xbf16>
    %c0_46 = arith.constant 0 : index
    %c0_47 = arith.constant 0 : index
    %108 = vector.load %arg18[%c0_46, %c0_47] : memref<64x256xbf16, #tpu.memory_space<vmem>>, vector<64x256xbf16>
    %cst_48 = arith.constant dense<0.000000e+00> : vector<16x256xf32>
    %109 = tpu.matmul %107, %108, %cst_48 {dimension_numbers = #tpu.dot_dimension_numbers<[1], [0], [0], [1], [0, 0, 1, 1], [], []>} : vector<16x64xbf16>, vector<64x256xbf16>, vector<16x256xf32> -> vector<16x256xf32>
    %c0_49 = arith.constant 0 : index
    %c0_50 = arith.constant 0 : index
    %110 = vector.load %arg19[%c0_49, %c0_50] : memref<1x256xf32, #tpu.memory_space<vmem>>, vector<1x256xf32>
    %111 = vector.broadcast %110 : vector<1x256xf32> to vector<16x256xf32>
    %112 = arith.addf %109, %111 : vector<16x256xf32>
    %113 = arith.mulf %112, %112 : vector<16x256xf32>
    %114 = arith.mulf %112, %113 : vector<16x256xf32>
    %cst_51 = arith.constant 4.471500e-02 : f32
    %115 = vector.broadcast %cst_51 : f32 to vector<16x256xf32>
    %116 = arith.mulf %115, %114 : vector<16x256xf32>
    %117 = arith.addf %112, %116 : vector<16x256xf32>
    %cst_52 = arith.constant 0.797884583 : f32
    %118 = vector.broadcast %cst_52 : f32 to vector<16x256xf32>
    %119 = arith.mulf %118, %117 : vector<16x256xf32>
    %120 = math.tanh %119 : vector<16x256xf32>
    %cst_53 = arith.constant 1.000000e+00 : f32
    %121 = vector.broadcast %cst_53 : f32 to vector<16x256xf32>
    %122 = arith.addf %121, %120 : vector<16x256xf32>
    %cst_54 = arith.constant 5.000000e-01 : f32
    %123 = vector.broadcast %cst_54 : f32 to vector<16x256xf32>
    %124 = arith.mulf %123, %122 : vector<16x256xf32>
    %125 = arith.mulf %112, %124 : vector<16x256xf32>
    %126 = arith.truncf %125 : vector<16x256xf32> to vector<16x256xbf16>
    %c0_55 = arith.constant 0 : index
    %c0_56 = arith.constant 0 : index
    %127 = vector.load %arg20[%c0_55, %c0_56] : memref<256x64xbf16, #tpu.memory_space<vmem>>, vector<256x64xbf16>
    %cst_57 = arith.constant dense<0.000000e+00> : vector<16x64xf32>
    %128 = tpu.matmul %126, %127, %cst_57 {dimension_numbers = #tpu.dot_dimension_numbers<[1], [0], [0], [1], [0, 0, 1, 1], [], []>} : vector<16x256xbf16>, vector<256x64xbf16>, vector<16x64xf32> -> vector<16x64xf32>
    %c0_58 = arith.constant 0 : index
    %c0_59 = arith.constant 0 : index
    %129 = vector.load %arg21[%c0_58, %c0_59] : memref<1x64xf32, #tpu.memory_space<vmem>>, vector<1x64xf32>
    %130 = vector.broadcast %129 : vector<1x64xf32> to vector<16x64xf32>
    %131 = arith.addf %128, %130 : vector<16x64xf32>
    %132 = arith.addf %82, %131 : vector<16x64xf32>
    %c0_60 = arith.constant 0 : index
    %c0_61 = arith.constant 0 : index
    %c0_62 = arith.constant 0 : index
    %133 = vector.load %arg22[%c0_60, %c0_61, %c0_62] : memref<1x16x64xf32, #tpu.memory_space<vmem>>, vector<1x16x64xf32>
    %134 = vector.shape_cast %133 : vector<1x16x64xf32> to vector<16x64xf32>
    %135 = vector.shape_cast %132 : vector<16x64xf32> to vector<1x16x64xf32>
    tpu.vector_store %arg22[%c0_60, %c0_61, %c0_62], %135 {strides = array<i32>} : memref<1x16x64xf32, #tpu.memory_space<vmem>>, vector<1x16x64xf32>,
    return
  }
  func.func @transform_0(%arg0: i32, %arg1: i32) -> (i32, i32, i32) {
    %c0_i32 = arith.constant 0 : i32
    %c0_i32_0 = arith.constant 0 : i32
    return %arg0, %arg1, %c0_i32 : i32, i32, i32
  }
  func.func @transform_1(%arg0: i32, %arg1: i32) -> (i32, i32, i32) {
    %c0_i32 = arith.constant 0 : i32
    %c0_i32_0 = arith.constant 0 : i32
    %c0_i32_1 = arith.constant 0 : i32
    return %arg0, %c0_i32, %c0_i32_0 : i32, i32, i32
  }
  func.func @transform_2(%arg0: i32, %arg1: i32) -> (i32, i32, i32) {
    %c0_i32 = arith.constant 0 : i32
    %c0_i32_0 = arith.constant 0 : i32
    return %arg0, %arg1, %c0_i32 : i32, i32, i32
  }
  func.func @transform_3(%arg0: i32, %arg1: i32) -> (i32, i32, i32) {
    %c0_i32 = arith.constant 0 : i32
    %c0_i32_0 = arith.constant 0 : i32
    %c0_i32_1 = arith.constant 0 : i32
    return %arg0, %c0_i32, %c0_i32_0 : i32, i32, i32
  }
  func.func @transform_4(%arg0: i32, %arg1: i32) -> (i32, i32, i32, i32) {
    %c0_i32 = arith.constant 0 : i32
    %c0_i32_0 = arith.constant 0 : i32
    %c0_i32_1 = arith.constant 0 : i32
    return %arg0, %c0_i32, %arg1, %c0_i32_0 : i32, i32, i32, i32
  }
  func.func @transform_5(%arg0: i32, %arg1: i32) -> (i32, i32) {
    %c0_i32 = arith.constant 0 : i32
    %c0_i32_0 = arith.constant 0 : i32
    %c0_i32_1 = arith.constant 0 : i32
    return %c0_i32, %c0_i32_0 : i32, i32
  }
  func.func @transform_6(%arg0: i32, %arg1: i32) -> (i32, i32) {
    %c0_i32 = arith.constant 0 : i32
    %c0_i32_0 = arith.constant 0 : i32
    %c0_i32_1 = arith.constant 0 : i32
    return %c0_i32, %c0_i32_0 : i32, i32
  }
  func.func @transform_7(%arg0: i32, %arg1: i32) -> (i32, i32) {
    %c0_i32 = arith.constant 0 : i32
    %c0_i32_0 = arith.constant 0 : i32
    %c0_i32_1 = arith.constant 0 : i32
    return %c0_i32, %c0_i32_0 : i32, i32
  }
  func.func @transform_8(%arg0: i32, %arg1: i32) -> (i32, i32) {
    %c0_i32 = arith.constant 0 : i32
    %c0_i32_0 = arith.constant 0 : i32
    %c0_i32_1 = arith.constant 0 : i32
    return %c0_i32, %c0_i32_0 : i32, i32
  }
  func.func @transform_9(%arg0: i32, %arg1: i32) -> (i32, i32) {
    %c0_i32 = arith.constant 0 : i32
    %c0_i32_0 = arith.constant 0 : i32
    %c0_i32_1 = arith.constant 0 : i32
    return %c0_i32, %c0_i32_0 : i32, i32
  }
  func.func @transform_10(%arg0: i32, %arg1: i32) -> (i32, i32) {
    %c0_i32 = arith.constant 0 : i32
    %c0_i32_0 = arith.constant 0 : i32
    %c0_i32_1 = arith.constant 0 : i32
    return %c0_i32, %c0_i32_0 : i32, i32
  }
  func.func @transform_11(%arg0: i32, %arg1: i32) -> (i32, i32) {
    %c0_i32 = arith.constant 0 : i32
    %c0_i32_0 = arith.constant 0 : i32
    %c0_i32_1 = arith.constant 0 : i32
    return %c0_i32, %c0_i32_0 : i32, i32
  }
  func.func @transform_12(%arg0: i32, %arg1: i32) -> (i32, i32) {
    %c0_i32 = arith.constant 0 : i32
    %c0_i32_0 = arith.constant 0 : i32
    %c0_i32_1 = arith.constant 0 : i32
    return %c0_i32, %c0_i32_0 : i32, i32
  }
  func.func @transform_13(%arg0: i32, %arg1: i32) -> (i32, i32) {
    %c0_i32 = arith.constant 0 : i32
    %c0_i32_0 = arith.constant 0 : i32
    %c0_i32_1 = arith.constant 0 : i32
    return %c0_i32, %c0_i32_0 : i32, i32
  }
  func.func @transform_14(%arg0: i32, %arg1: i32) -> (i32, i32) {
    %c0_i32 = arith.constant 0 : i32
    %c0_i32_0 = arith.constant 0 : i32
    %c0_i32_1 = arith.constant 0 : i32
    return %c0_i32, %c0_i32_0 : i32, i32
  }
  func.func @transform_15(%arg0: i32, %arg1: i32) -> (i32, i32) {
    %c0_i32 = arith.constant 0 : i32
    %c0_i32_0 = arith.constant 0 : i32
    %c0_i32_1 = arith.constant 0 : i32
    return %c0_i32, %c0_i32_0 : i32, i32
  }
  func.func @transform_16(%arg0: i32, %arg1: i32) -> (i32, i32) {
    %c0_i32 = arith.constant 0 : i32
    %c0_i32_0 = arith.constant 0 : i32
    %c0_i32_1 = arith.constant 0 : i32
    return %c0_i32, %c0_i32_0 : i32, i32
  }
  func.func @transform_17(%arg0: i32, %arg1: i32) -> (i32, i32) {
    %c0_i32 = arith.constant 0 : i32
    %c0_i32_0 = arith.constant 0 : i32
    %c0_i32_1 = arith.constant 0 : i32
    return %c0_i32, %c0_i32_0 : i32, i32
  }
  func.func @transform_18(%arg0: i32, %arg1: i32) -> (i32, i32) {
    %c0_i32 = arith.constant 0 : i32
    %c0_i32_0 = arith.constant 0 : i32
    %c0_i32_1 = arith.constant 0 : i32
    return %c0_i32, %c0_i32_0 : i32, i32
  }
  func.func @transform_19(%arg0: i32, %arg1: i32) -> (i32, i32) {
    %c0_i32 = arith.constant 0 : i32
    %c0_i32_0 = arith.constant 0 : i32
    %c0_i32_1 = arith.constant 0 : i32
    return %c0_i32, %c0_i32_0 : i32, i32
  }
  func.func @transform_20(%arg0: i32, %arg1: i32) -> (i32, i32, i32) {
    %c0_i32 = arith.constant 0 : i32
    %c0_i32_0 = arith.constant 0 : i32
    return %arg0, %arg1, %c0_i32 : i32, i32, i32
  }
}

</mosaic_0001>

<llo_original>
// kernel: tpu_custom_call.1
$region0: #{tpu_custom_call.1}
  #allocation0 [shape = 'u32[]', space=smem, size = 0x4, offset = 0x4, fixed_abs, tag = 'smem constant byte address 0x4 - core index']
  #allocation1 [shape = 'u32[144,128]{1,0:T(1,128)}', space=vmem, size = 0x12000, scoped, tag = 'internal scratch']
  #allocation2 [shape = 'bf16[4,32,16]{2,1,0:T(8,128)(2,1)}', space=vmem, size = 0x8000, scoped, tag = 'scratch operand']
  #allocation3 [shape = 'bf16[4,32,16]{2,1,0:T(8,128)(2,1)}', space=vmem, size = 0x8000, scoped, tag = 'scratch operand']
  %s0 = inlined_call_operand.hbm [shape: f32[2,16,64], index: 0, kind: input, shape index: {}]
  %s1 = inlined_call_operand.vmem [shape: f32[2,32,64], index: 1, kind: input, shape index: {}]
  %s2 = inlined_call_operand.hbm [shape: bf16[2,16,64], index: 2, kind: input, shape index: {}]
  %s3 = inlined_call_operand.hbm [shape: bf16[2,32,64], index: 3, kind: input, shape index: {}]
  %s4 = inlined_call_operand.vmem [shape: bf16[2,4,16,32], index: 4, kind: input, shape index: {}]
  %s5 = inlined_call_operand.vmem [shape: f32[1,64], index: 5, kind: input, shape index: {}]
  %s6 = inlined_call_operand.vmem [shape: f32[1,64], index: 6, kind: input, shape index: {}]
  %s7 = inlined_call_operand.vmem [shape: f32[1,64], index: 7, kind: input, shape index: {}]
  %s8 = inlined_call_operand.vmem [shape: f32[1,64], index: 8, kind: input, shape index: {}]
  %s9 = inlined_call_operand.hbm [shape: bf16[64,64], index: 9, kind: input, shape index: {}]
  %s10 = inlined_call_operand.hbm [shape: bf16[64,64], index: 10, kind: input, shape index: {}]
  %s11 = inlined_call_operand.hbm [shape: bf16[64,64], index: 11, kind: input, shape index: {}]
  %s12 = inlined_call_operand.hbm [shape: bf16[64,64], index: 12, kind: input, shape index: {}]
  %s13 = inlined_call_operand.vmem [shape: f32[1,64], index: 13, kind: input, shape index: {}]
  %s14 = inlined_call_operand.vmem [shape: f32[1,64], index: 14, kind: input, shape index: {}]
  %s15 = inlined_call_operand.vmem [shape: f32[1,64], index: 15, kind: input, shape index: {}]
  %s16 = inlined_call_operand.vmem [shape: bf16[64,256], index: 16, kind: input, shape index: {}]
  %s17 = inlined_call_operand.vmem [shape: f32[1,256], index: 17, kind: input, shape index: {}]
  %s18 = inlined_call_operand.vmem [shape: bf16[256,64], index: 18, kind: input, shape index: {}]
  %s19 = inlined_call_operand.vmem [shape: f32[1,64], index: 19, kind: input, shape index: {}]
  %s20 = inlined_call_operand.hbm [shape: f32[2,16,64], index: 20, kind: output, shape index: {}]
  %s21 = sld [smem:[#allocation0]]
  $region145: #{tpu_custom_call.1} parent=0
    _
  %s23 = ssub.s32 1, %s21
  %s24 = scalar_select 0, %s23, %s21
  $region1: #{tpu_custom_call.1} parent=0
    #allocation4 [shape = 'u8[16384]{0}', space=vmem, size = 0x4000, scoped, tag = 'input window, operand 0']
    #allocation5 [shape = 's32[2]{0}', space=sflag, size = 0x8, scoped, tag = 'scoped memory for tpu_custom_call.1']
    #allocation6 [shape = 's32[2]{0}', space=sflag, size = 0x8, scoped, tag = 'scoped memory for tpu_custom_call.1']
    #allocation7 [shape = 'u8[8192]{0}', space=vmem, size = 0x2000, scoped, tag = 'input window, operand 2']
    #allocation8 [shape = 's32[2]{0}', space=sflag, size = 0x8, scoped, tag = 'scoped memory for tpu_custom_call.1']
    #allocation9 [shape = 'u8[16384]{0}', space=vmem, size = 0x4000, scoped, tag = 'input window, operand 3']
    #allocation10 [shape = 'u8[16384]{0}', space=vmem, size = 0x4000, scoped, tag = 'input window, operand 9, single buffered']
    #allocation11 [shape = 's32[1]{0}', space=sflag, size = 0x4, scoped, tag = 'scoped memory for tpu_custom_call.1']
    #allocation12 [shape = 'u8[16384]{0}', space=vmem, size = 0x4000, scoped, tag = 'input window, operand 10, single buffered']
    #allocation13 [shape = 'u8[16384]{0}', space=vmem, size = 0x4000, scoped, tag = 'input window, operand 11, single buffered']
    #allocation14 [shape = 's32[1]{0}', space=sflag, size = 0x4, scoped, tag = 'scoped memory for tpu_custom_call.1']
    #allocation15 [shape = 'u8[16384]{0}', space=vmem, size = 0x4000, scoped, tag = 'input window, operand 12, single buffered']
    #allocation16 [shape = 'u8[16384]{0}', space=vmem, size = 0x4000, scoped, tag = 'output window, operand 0']
    %25 = vsyncpa [#allocation5], 0
    %s26 = scalar_lea.sflag [#allocation5], 1
    %27 = vsyncpa %s26, 0
    %28 = vsyncpa [#allocation8], 0
    %s29 = scalar_lea.sflag [#allocation8], 1
    %30 = vsyncpa %s29, 0
    %31 = vsyncpa [#allocation11], 0
    %32 = vsyncpa [#allocation14], 0
    %33 = vsyncpa [#allocation6], 0
    %s34 = scalar_lea.sflag [#allocation6], 1
    %35 = vsyncpa %s34, 0
    loop: start=0, step=1, limit=4
    $region2: #{tpu_custom_call.1} parent=1 // loop_pre_header
      _
    $region3: #{tpu_custom_call.1} parent=1 // loop_header
      %s37 = sphi 0, %s41
      %p38 = scmp.ge.s32.totalorder %s37, 4
      %s44 = sphi 0, %s56
      %s45 = sphi 0, %s52
      %s46 = sphi 0, %s44
      %s47 = sphi 0, %s45
      %s48 = sphi 0, %s46
      %s49 = sphi 0, %s47
      %s61 = sphi 0, %s63
      %s64 = sphi 0, %s61
      %s65 = sphi 0, %s64
      %s81 = sphi 0, %s65
      %s87 = sphi 0, %s89
      %s90 = sphi 0, %s87
      %s91 = sphi 0, %s90
      %s107 = sphi 0, %s91
      %s115 = sphi 0, %s117
      %s118 = sphi 0, %s115
      %s119 = sphi 0, %s118
      %s135 = sphi 0, %s119
      %s141 = sphi 0, %s143
      %s144 = sphi 0, %s141
      %s145 = sphi 0, %s144
      %s161 = sphi 0, %s145
      %s169 = sphi 0, %s171
      %s172 = sphi 0, %s169
      %s173 = sphi 0, %s172
      %s189 = sphi 0, %s173
      %s193 = sphi 0, %s193
      %s195 = sphi 0, %s193
      %s196 = sphi 0, %s195
      %s210 = sphi 0, %s196
      %s214 = sphi 0, %s214
      %s216 = sphi 0, %s214
      %s217 = sphi 0, %s216
      %s231 = sphi 0, %s217
      %s235 = sphi 0, %s235
      %s237 = sphi 0, %s235
      %s238 = sphi 0, %s237
      %s252 = sphi 0, %s238
      %s256 = sphi 0, %s256
      %s258 = sphi 0, %s256
      %s259 = sphi 0, %s258
      %s273 = sphi 0, %s259
      %s277 = sphi 0, %s277
      %s279 = sphi 0, %s277
      %s280 = sphi 0, %s279
      %s294 = sphi 0, %s280
      %s298 = sphi 0, %s298
      %s300 = sphi 0, %s298
      %s301 = sphi 0, %s300
      %s315 = sphi 0, %s301
      %s319 = sphi 0, %s319
      %s321 = sphi 0, %s319
      %s322 = sphi 0, %s321
      %s336 = sphi 0, %s322
      %s340 = sphi 0, %s340
      %s342 = sphi 0, %s340
      %s343 = sphi 0, %s342
      %s357 = sphi 0, %s343
      %s361 = sphi 0, %s361
      %s363 = sphi 0, %s361
      %s364 = sphi 0, %s363
      %s378 = sphi 0, %s364
      %s382 = sphi 0, %s382
      %s384 = sphi 0, %s382
      %s385 = sphi 0, %s384
      %s399 = sphi 0, %s385
      %s403 = sphi 0, %s403
      %s405 = sphi 0, %s403
      %s406 = sphi 0, %s405
      %s420 = sphi 0, %s406
      %s424 = sphi 0, %s424
      %s426 = sphi 0, %s424
      %s427 = sphi 0, %s426
      %s441 = sphi 0, %s427
      %s445 = sphi 0, %s445
      %s447 = sphi 0, %s445
      %s448 = sphi 0, %s447
      %s462 = sphi 0, %s448
      %s466 = sphi 0, %s466
      %s468 = sphi 0, %s466
      %s469 = sphi 0, %s468
      %s483 = sphi 0, %s469
      %s487 = sphi 0, %s487
      %s489 = sphi 0, %s487
      %s490 = sphi 0, %s489
      %s504 = sphi 0, %s490
      %s512 = sphi 0, %s514
      %s515 = sphi 0, %s512
      %s516 = sphi 0, %s515
      %s532 = sphi 0, %s516
    $region4: #{tpu_custom_call.1} parent=1 // loop_header_branch
      %40 = sbr.rel (%p38) target = $region8
    $region5: #{tpu_custom_call.1} parent=1 // loop_body
      %s42 = ssub.s32 %s37, 1
      %s43 = ssub.s32 %s37, 2
      %s50 = sadd.s32 1, %s45
      %p51 = scmp.ge.s32.totalorder %s50, 1
      %s52 = scalar_select %p51, 0, %s50
      %s53 = sadd.s32 1, %s44
      %s54 = scalar_select %p51, %s53, %s44
      %p55 = scmp.ge.s32.totalorder %s54, 2
      %s56 = scalar_select %p55, 0, %s54
      %s57 = ssub.s32 %s44, %s56
      %s58 = ssub.s32 %s45, %s52
      %s59 = sor.u32 %s57, %s58
      %p60 = scmp.eq.s32.totalorder %s59, 0
      %s62 = sadd.s32 %s61, 1
      %s63 = scalar_select %p60, %s61, %s62
      %p66 = pneg %p60
      %p67 = scmp.eq.s32.totalorder %s37, 1
      %p68 = por %p66, %p67
      %p69 = scmp.ne.s32.totalorder %s61, %s64
      %p70 = scmp.eq.s32.totalorder %s37, 0
      %p71 = por %p69, %p70
      %p72 = scmp.ne.s32.totalorder %s61, %s64
      %p73 = scmp.eq.s32.totalorder %s42, 1
      %p74 = por %p72, %p73
      %p75 = scmp.ne.s32.totalorder %s64, %s65
      %p76 = scmp.eq.s32.totalorder %s42, 0
      %p77 = por %p75, %p76
      %p78 = scmp.ne.s32.totalorder %s64, %s65
      %p79 = scmp.eq.s32.totalorder %s43, 1
      %p80 = por %p78, %p79
      %p82 = scmp.ne.s32.totalorder %s65, %s81
      %p83 = scmp.eq.s32.totalorder %s43, 0
      %p84 = por %p82, %p83
      %s85 = ssub.s32 %s44, %s56
      %p86 = scmp.eq.s32.totalorder %s85, 0
      %s88 = sadd.s32 %s87, 1
      %s89 = scalar_select %p86, %s87, %s88
      %p92 = pneg %p86
      %p93 = scmp.eq.s32.totalorder %s37, 1
      %p94 = por %p92, %p93
      %p95 = scmp.ne.s32.totalorder %s87, %s90
      %p96 = scmp.eq.s32.totalorder %s37, 0
      %p97 = por %p95, %p96
      %p98 = scmp.ne.s32.totalorder %s87, %s90
      %p99 = scmp.eq.s32.totalorder %s42, 1
      %p100 = por %p98, %p99
      %p101 = scmp.ne.s32.totalorder %s90, %s91
      %p102 = scmp.eq.s32.totalorder %s42, 0
      %p103 = por %p101, %p102
      %p104 = scmp.ne.s32.totalorder %s90, %s91
      %p105 = scmp.eq.s32.totalorder %s43, 1
      %p106 = por %p104, %p105
      %p108 = scmp.ne.s32.totalorder %s91, %s107
      %p109 = scmp.eq.s32.totalorder %s43, 0
      %p110 = por %p108, %p109
      %s111 = ssub.s32 %s44, %s56
      %s112 = ssub.s32 %s45, %s52
      %s113 = sor.u32 %s111, %s112
      %p114 = scmp.eq.s32.totalorder %s113, 0
      %s116 = sadd.s32 %s115, 1
      %s117 = scalar_select %p114, %s115, %s116
      %p120 = pneg %p114
      %p121 = scmp.eq.s32.totalorder %s37, 1
      %p122 = por %p120, %p121
      %p123 = scmp.ne.s32.totalorder %s115, %s118
      %p124 = scmp.eq.s32.totalorder %s37, 0
      %p125 = por %p123, %p124
      %p126 = scmp.ne.s32.totalorder %s115, %s118
      %p127 = scmp.eq.s32.totalorder %s42, 1
      %p128 = por %p126, %p127
      %p129 = scmp.ne.s32.totalorder %s118, %s119
      %p130 = scmp.eq.s32.totalorder %s42, 0
      %p131 = por %p129, %p130
      %p132 = scmp.ne.s32.totalorder %s118, %s119
      %p133 = scmp.eq.s32.totalorder %s43, 1
      %p134 = por %p132, %p133
      %p136 = scmp.ne.s32.totalorder %s119, %s135
      %p137 = scmp.eq.s32.totalorder %s43, 0
      %p138 = por %p136, %p137
      %s139 = ssub.s32 %s44, %s56
      %p140 = scmp.eq.s32.totalorder %s139, 0
      %s142 = sadd.s32 %s141, 1
      %s143 = scalar_select %p140, %s141, %s142
      %p146 = pneg %p140
      %p147 = scmp.eq.s32.totalorder %s37, 1
      %p148 = por %p146, %p147
      %p149 = scmp.ne.s32.totalorder %s141, %s144
      %p150 = scmp.eq.s32.totalorder %s37, 0
      %p151 = por %p149, %p150
      %p152 = scmp.ne.s32.totalorder %s141, %s144
      %p153 = scmp.eq.s32.totalorder %s42, 1
      %p154 = por %p152, %p153
      %p155 = scmp.ne.s32.totalorder %s144, %s145
      %p156 = scmp.eq.s32.totalorder %s42, 0
      %p157 = por %p155, %p156
      %p158 = scmp.ne.s32.totalorder %s144, %s145
      %p159 = scmp.eq.s32.totalorder %s43, 1
      %p160 = por %p158, %p159
      %p162 = scmp.ne.s32.totalorder %s145, %s161
      %p163 = scmp.eq.s32.totalorder %s43, 0
      %p164 = por %p162, %p163
      %s165 = ssub.s32 %s44, %s56
      %s166 = ssub.s32 %s45, %s52
      %s167 = sor.u32 %s165, %s166
      %p168 = scmp.eq.s32.totalorder %s167, 0
      %s170 = sadd.s32 %s169, 1
      %s171 = scalar_select %p168, %s169, %s170
      %p174 = pneg %p168
      %p175 = scmp.eq.s32.totalorder %s37, 1
      %p176 = por %p174, %p175
      %p177 = scmp.ne.s32.totalorder %s169, %s172
      %p178 = scmp.eq.s32.totalorder %s37, 0
      %p179 = por %p177, %p178
      %p180 = scmp.ne.s32.totalorder %s169, %s172
      %p181 = scmp.eq.s32.totalorder %s42, 1
      %p182 = por %p180, %p181
      %p183 = scmp.ne.s32.totalorder %s172, %s173
      %p184 = scmp.eq.s32.totalorder %s42, 0
      %p185 = por %p183, %p184
      %p186 = scmp.ne.s32.totalorder %s172, %s173
      %p187 = scmp.eq.s32.totalorder %s43, 1
      %p188 = por %p186, %p187
      %p190 = scmp.ne.s32.totalorder %s173, %s189
      %p191 = scmp.eq.s32.totalorder %s43, 0
      %p192 = por %p190, %p191
      %s194 = sadd.s32 %s193, 1
      %p197 = scmp.eq.s32.totalorder %s37, 1
      %p198 = scmp.ne.s32.totalorder %s193, %s195
      %p199 = scmp.eq.s32.totalorder %s37, 0
      %p200 = por %p198, %p199
      %p201 = scmp.ne.s32.totalorder %s193, %s195
      %p202 = scmp.eq.s32.totalorder %s42, 1
      %p203 = por %p201, %p202
      %p204 = scmp.ne.s32.totalorder %s195, %s196
      %p205 = scmp.eq.s32.totalorder %s42, 0
      %p206 = por %p204, %p205
      %p207 = scmp.ne.s32.totalorder %s195, %s196
      %p208 = scmp.eq.s32.totalorder %s43, 1
      %p209 = por %p207, %p208
      %p211 = scmp.ne.s32.totalorder %s196, %s210
      %p212 = scmp.eq.s32.totalorder %s43, 0
      %p213 = por %p211, %p212
      %s215 = sadd.s32 %s214, 1
      %p218 = scmp.eq.s32.totalorder %s37, 1
      %p219 = scmp.ne.s32.totalorder %s214, %s216
      %p220 = scmp.eq.s32.totalorder %s37, 0
      %p221 = por %p219, %p220
      %p222 = scmp.ne.s32.totalorder %s214, %s216
      %p223 = scmp.eq.s32.totalorder %s42, 1
      %p224 = por %p222, %p223
      %p225 = scmp.ne.s32.totalorder %s216, %s217
      %p226 = scmp.eq.s32.totalorder %s42, 0
      %p227 = por %p225, %p226
      %p228 = scmp.ne.s32.totalorder %s216, %s217
      %p229 = scmp.eq.s32.totalorder %s43, 1
      %p230 = por %p228, %p229
      %p232 = scmp.ne.s32.totalorder %s217, %s231
      %p233 = scmp.eq.s32.totalorder %s43, 0
      %p234 = por %p232, %p233
      %s236 = sadd.s32 %s235, 1
      %p239 = scmp.eq.s32.totalorder %s37, 1
      %p240 = scmp.ne.s32.totalorder %s235, %s237
      %p241 = scmp.eq.s32.totalorder %s37, 0
      %p242 = por %p240, %p241
      %p243 = scmp.ne.s32.totalorder %s235, %s237
      %p244 = scmp.eq.s32.totalorder %s42, 1
      %p245 = por %p243, %p244
      %p246 = scmp.ne.s32.totalorder %s237, %s238
      %p247 = scmp.eq.s32.totalorder %s42, 0
      %p248 = por %p246, %p247
      %p249 = scmp.ne.s32.totalorder %s237, %s238
      %p250 = scmp.eq.s32.totalorder %s43, 1
      %p251 = por %p249, %p250
      %p253 = scmp.ne.s32.totalorder %s238, %s252
      %p254 = scmp.eq.s32.totalorder %s43, 0
      %p255 = por %p253, %p254
      %s257 = sadd.s32 %s256, 1
      %p260 = scmp.eq.s32.totalorder %s37, 1
      %p261 = scmp.ne.s32.totalorder %s256, %s258
      %p262 = scmp.eq.s32.totalorder %s37, 0
      %p263 = por %p261, %p262
      %p264 = scmp.ne.s32.totalorder %s256, %s258
      %p265 = scmp.eq.s32.totalorder %s42, 1
      %p266 = por %p264, %p265
      %p267 = scmp.ne.s32.totalorder %s258, %s259
      %p268 = scmp.eq.s32.totalorder %s42, 0
      %p269 = por %p267, %p268
      %p270 = scmp.ne.s32.totalorder %s258, %s259
      %p271 = scmp.eq.s32.totalorder %s43, 1
      %p272 = por %p270, %p271
      %p274 = scmp.ne.s32.totalorder %s259, %s273
      %p275 = scmp.eq.s32.totalorder %s43, 0
      %p276 = por %p274, %p275
      %s278 = sadd.s32 %s277, 1
      %p281 = scmp.eq.s32.totalorder %s37, 1
      %p282 = scmp.ne.s32.totalorder %s277, %s279
      %p283 = scmp.eq.s32.totalorder %s37, 0
      %p284 = por %p282, %p283
      %p285 = scmp.ne.s32.totalorder %s277, %s279
      %p286 = scmp.eq.s32.totalorder %s42, 1
      %p287 = por %p285, %p286
      %p288 = scmp.ne.s32.totalorder %s279, %s280
      %p289 = scmp.eq.s32.totalorder %s42, 0
      %p290 = por %p288, %p289
      %p291 = scmp.ne.s32.totalorder %s279, %s280
      %p292 = scmp.eq.s32.totalorder %s43, 1
      %p293 = por %p291, %p292
      %p295 = scmp.ne.s32.totalorder %s280, %s294
      %p296 = scmp.eq.s32.totalorder %s43, 0
      %p297 = por %p295, %p296
      %s299 = sadd.s32 %s298, 1
      %p302 = scmp.eq.s32.totalorder %s37, 1
      %p303 = scmp.ne.s32.totalorder %s298, %s300
      %p304 = scmp.eq.s32.totalorder %s37, 0
      %p305 = por %p303, %p304
      %p306 = scmp.ne.s32.totalorder %s298, %s300
      %p307 = scmp.eq.s32.totalorder %s42, 1
      %p308 = por %p306, %p307
      %p309 = scmp.ne.s32.totalorder %s300, %s301
      %p310 = scmp.eq.s32.totalorder %s42, 0
      %p311 = por %p309, %p310
      %p312 = scmp.ne.s32.totalorder %s300, %s301
      %p313 = scmp.eq.s32.totalorder %s43, 1
      %p314 = por %p312, %p313
      %p316 = scmp.ne.s32.totalorder %s301, %s315
      %p317 = scmp.eq.s32.totalorder %s43, 0
      %p318 = por %p316, %p317
      %s320 = sadd.s32 %s319, 1
      %p323 = scmp.eq.s32.totalorder %s37, 1
      %p324 = scmp.ne.s32.totalorder %s319, %s321
      %p325 = scmp.eq.s32.totalorder %s37, 0
      %p326 = por %p324, %p325
      %p327 = scmp.ne.s32.totalorder %s319, %s321
      %p328 = scmp.eq.s32.totalorder %s42, 1
      %p329 = por %p327, %p328
      %p330 = scmp.ne.s32.totalorder %s321, %s322
      %p331 = scmp.eq.s32.totalorder %s42, 0
      %p332 = por %p330, %p331
      %p333 = scmp.ne.s32.totalorder %s321, %s322
      %p334 = scmp.eq.s32.totalorder %s43, 1
      %p335 = por %p333, %p334
      %p337 = scmp.ne.s32.totalorder %s322, %s336
      %p338 = scmp.eq.s32.totalorder %s43, 0
      %p339 = por %p337, %p338
      %s341 = sadd.s32 %s340, 1
      %p344 = scmp.eq.s32.totalorder %s37, 1
      %p345 = scmp.ne.s32.totalorder %s340, %s342
      %p346 = scmp.eq.s32.totalorder %s37, 0
      %p347 = por %p345, %p346
      %p348 = scmp.ne.s32.totalorder %s340, %s342
      %p349 = scmp.eq.s32.totalorder %s42, 1
      %p350 = por %p348, %p349
      %p351 = scmp.ne.s32.totalorder %s342, %s343
      %p352 = scmp.eq.s32.totalorder %s42, 0
      %p353 = por %p351, %p352
      %p354 = scmp.ne.s32.totalorder %s342, %s343
      %p355 = scmp.eq.s32.totalorder %s43, 1
      %p356 = por %p354, %p355
      %p358 = scmp.ne.s32.totalorder %s343, %s357
      %p359 = scmp.eq.s32.totalorder %s43, 0
      %p360 = por %p358, %p359
      %s362 = sadd.s32 %s361, 1
      %p365 = scmp.eq.s32.totalorder %s37, 1
      %p366 = scmp.ne.s32.totalorder %s361, %s363
      %p367 = scmp.eq.s32.totalorder %s37, 0
      %p368 = por %p366, %p367
      %p369 = scmp.ne.s32.totalorder %s361, %s363
      %p370 = scmp.eq.s32.totalorder %s42, 1
      %p371 = por %p369, %p370
      %p372 = scmp.ne.s32.totalorder %s363, %s364
      %p373 = scmp.eq.s32.totalorder %s42, 0
      %p374 = por %p372, %p373
      %p375 = scmp.ne.s32.totalorder %s363, %s364
      %p376 = scmp.eq.s32.totalorder %s43, 1
      %p377 = por %p375, %p376
      %p379 = scmp.ne.s32.totalorder %s364, %s378
      %p380 = scmp.eq.s32.totalorder %s43, 0
      %p381 = por %p379, %p380
      %s383 = sadd.s32 %s382, 1
      %p386 = scmp.eq.s32.totalorder %s37, 1
      %p387 = scmp.ne.s32.totalorder %s382, %s384
      %p388 = scmp.eq.s32.totalorder %s37, 0
      %p389 = por %p387, %p388
      %p390 = scmp.ne.s32.totalorder %s382, %s384
      %p391 = scmp.eq.s32.totalorder %s42, 1
      %p392 = por %p390, %p391
      %p393 = scmp.ne.s32.totalorder %s384, %s385
      %p394 = scmp.eq.s32.totalorder %s42, 0
      %p395 = por %p393, %p394
      %p396 = scmp.ne.s32.totalorder %s384, %s385
      %p397 = scmp.eq.s32.totalorder %s43, 1
      %p398 = por %p396, %p397
      %p400 = scmp.ne.s32.totalorder %s385, %s399
      %p401 = scmp.eq.s32.totalorder %s43, 0
      %p402 = por %p400, %p401
      %s404 = sadd.s32 %s403, 1
      %p407 = scmp.eq.s32.totalorder %s37, 1
      %p408 = scmp.ne.s32.totalorder %s403, %s405
      %p409 = scmp.eq.s32.totalorder %s37, 0
      %p410 = por %p408, %p409
      %p411 = scmp.ne.s32.totalorder %s403, %s405
      %p412 = scmp.eq.s32.totalorder %s42, 1
      %p413 = por %p411, %p412
      %p414 = scmp.ne.s32.totalorder %s405, %s406
      %p415 = scmp.eq.s32.totalorder %s42, 0
      %p416 = por %p414, %p415
      %p417 = scmp.ne.s32.totalorder %s405, %s406
      %p418 = scmp.eq.s32.totalorder %s43, 1
      %p419 = por %p417, %p418
      %p421 = scmp.ne.s32.totalorder %s406, %s420
      %p422 = scmp.eq.s32.totalorder %s43, 0
      %p423 = por %p421, %p422
      %s425 = sadd.s32 %s424, 1
      %p428 = scmp.eq.s32.totalorder %s37, 1
      %p429 = scmp.ne.s32.totalorder %s424, %s426
      %p430 = scmp.eq.s32.totalorder %s37, 0
      %p431 = por %p429, %p430
      %p432 = scmp.ne.s32.totalorder %s424, %s426
      %p433 = scmp.eq.s32.totalorder %s42, 1
      %p434 = por %p432, %p433
      %p435 = scmp.ne.s32.totalorder %s426, %s427
      %p436 = scmp.eq.s32.totalorder %s42, 0
      %p437 = por %p435, %p436
      %p438 = scmp.ne.s32.totalorder %s426, %s427
      %p439 = scmp.eq.s32.totalorder %s43, 1
      %p440 = por %p438, %p439
      %p442 = scmp.ne.s32.totalorder %s427, %s441
      %p443 = scmp.eq.s32.totalorder %s43, 0
      %p444 = por %p442, %p443
      %s446 = sadd.s32 %s445, 1
      %p449 = scmp.eq.s32.totalorder %s37, 1
      %p450 = scmp.ne.s32.totalorder %s445, %s447
      %p451 = scmp.eq.s32.totalorder %s37, 0
      %p452 = por %p450, %p451
      %p453 = scmp.ne.s32.totalorder %s445, %s447
      %p454 = scmp.eq.s32.totalorder %s42, 1
      %p455 = por %p453, %p454
      %p456 = scmp.ne.s32.totalorder %s447, %s448
      %p457 = scmp.eq.s32.totalorder %s42, 0
      %p458 = por %p456, %p457
      %p459 = scmp.ne.s32.totalorder %s447, %s448
      %p460 = scmp.eq.s32.totalorder %s43, 1
      %p461 = por %p459, %p460
      %p463 = scmp.ne.s32.totalorder %s448, %s462
      %p464 = scmp.eq.s32.totalorder %s43, 0
      %p465 = por %p463, %p464
      %s467 = sadd.s32 %s466, 1
      %p470 = scmp.eq.s32.totalorder %s37, 1
      %p471 = scmp.ne.s32.totalorder %s466, %s468
      %p472 = scmp.eq.s32.totalorder %s37, 0
      %p473 = por %p471, %p472
      %p474 = scmp.ne.s32.totalorder %s466, %s468
      %p475 = scmp.eq.s32.totalorder %s42, 1
      %p476 = por %p474, %p475
      %p477 = scmp.ne.s32.totalorder %s468, %s469
      %p478 = scmp.eq.s32.totalorder %s42, 0
      %p479 = por %p477, %p478
      %p480 = scmp.ne.s32.totalorder %s468, %s469
      %p481 = scmp.eq.s32.totalorder %s43, 1
      %p482 = por %p480, %p481
      %p484 = scmp.ne.s32.totalorder %s469, %s483
      %p485 = scmp.eq.s32.totalorder %s43, 0
      %p486 = por %p484, %p485
      %s488 = sadd.s32 %s487, 1
      %p491 = scmp.eq.s32.totalorder %s37, 1
      %p492 = scmp.ne.s32.totalorder %s487, %s489
      %p493 = scmp.eq.s32.totalorder %s37, 0
      %p494 = por %p492, %p493
      %p495 = scmp.ne.s32.totalorder %s487, %s489
      %p496 = scmp.eq.s32.totalorder %s42, 1
      %p497 = por %p495, %p496
      %p498 = scmp.ne.s32.totalorder %s489, %s490
      %p499 = scmp.eq.s32.totalorder %s42, 0
      %p500 = por %p498, %p499
      %p501 = scmp.ne.s32.totalorder %s489, %s490
      %p502 = scmp.eq.s32.totalorder %s43, 1
      %p503 = por %p501, %p502
      %p505 = scmp.ne.s32.totalorder %s490, %s504
      %p506 = scmp.eq.s32.totalorder %s43, 0
      %p507 = por %p505, %p506
      %s508 = ssub.s32 %s44, %s56
      %s509 = ssub.s32 %s45, %s52
      %s510 = sor.u32 %s508, %s509
      %p511 = scmp.eq.s32.totalorder %s510, 0
      %s513 = sadd.s32 %s512, 1
      %s514 = scalar_select %p511, %s512, %s513
      %p517 = pneg %p511
      %p518 = scmp.eq.s32.totalorder %s37, 1
      %p519 = por %p517, %p518
      %p520 = scmp.ne.s32.totalorder %s512, %s515
      %p521 = scmp.eq.s32.totalorder %s37, 0
      %p522 = por %p520, %p521
      %p523 = scmp.ne.s32.totalorder %s512, %s515
      %p524 = scmp.eq.s32.totalorder %s42, 1
      %p525 = por %p523, %p524
      %p526 = scmp.ne.s32.totalorder %s515, %s516
      %p527 = scmp.eq.s32.totalorder %s42, 0
      %p528 = por %p526, %p527
      %p529 = scmp.ne.s32.totalorder %s515, %s516
      %p530 = scmp.eq.s32.totalorder %s43, 1
      %p531 = por %p529, %p530
      %p533 = scmp.ne.s32.totalorder %s516, %s532
      %p534 = scmp.eq.s32.totalorder %s43, 0
      %p535 = por %p533, %p534
      %p536 = scmp.le.s32.totalorder 1, %s37
      %p537 = scmp.lt.s32.totalorder %s37, 3
      %p538 = pnand %p536, %p537
      %p539 = pneg %p538
      // Predicated region
      $region9: #{tpu_custom_call.1} parent=5 // pred_check
        _
      $region10: #{tpu_custom_call.1} parent=5 // pred_check_branch
        %541 = sbr.rel (%p538) target = $region12
      $region11: #{tpu_custom_call.1} parent=5 // pred_region
        %s542 = ssub.s32 %s37, 1
        // Predicated region
        $region13: #{tpu_custom_call.1} parent=11 // pred_check
          %p543 = pneg %p206
        $region14: #{tpu_custom_call.1} parent=11 // pred_check_branch
          %545 = sbr.rel (%p543) target = $region16
        $region15: #{tpu_custom_call.1} parent=11 // pred_region
          _
        $region16: #{tpu_custom_call.1} parent=11 // pred_fallthru
          _
        // Predicated region
        $region17: #{tpu_custom_call.1} parent=11 // pred_check
          %p546 = pneg %p227
        $region18: #{tpu_custom_call.1} parent=11 // pred_check_branch
          %548 = sbr.rel (%p546) target = $region20
        $region19: #{tpu_custom_call.1} parent=11 // pred_region
          _
        $region20: #{tpu_custom_call.1} parent=11 // pred_fallthru
          _
        // Predicated region
        $region21: #{tpu_custom_call.1} parent=11 // pred_check
          %p549 = pneg %p248
        $region22: #{tpu_custom_call.1} parent=11 // pred_check_branch
          %551 = sbr.rel (%p549) target = $region24
        $region23: #{tpu_custom_call.1} parent=11 // pred_region
          _
        $region24: #{tpu_custom_call.1} parent=11 // pred_fallthru
          _
        // Predicated region
        $region25: #{tpu_custom_call.1} parent=11 // pred_check
          %p552 = pneg %p269
        $region26: #{tpu_custom_call.1} parent=11 // pred_check_branch
          %554 = sbr.rel (%p552) target = $region28
        $region27: #{tpu_custom_call.1} parent=11 // pred_region
          _
        $region28: #{tpu_custom_call.1} parent=11 // pred_fallthru
          _
        // Predicated region
        $region29: #{tpu_custom_call.1} parent=11 // pred_check
          %p555 = pneg %p290
        $region30: #{tpu_custom_call.1} parent=11 // pred_check_branch
          %557 = sbr.rel (%p555) target = $region32
        $region31: #{tpu_custom_call.1} parent=11 // pred_region
          %s559 = ssub.s32 512, 512
          %560 = vsyncadd [#allocation11], %s559
          %s561 = sshll.u32 [#allocation10], 4
          %s562 = int_to_ptr.vmem [resolvable:$true] %s561
          %567 = dma.hbm_to_vmem [thread:$0]  %s9, 512, %s562, [#allocation11], 64, 64, 4
        $region32: #{tpu_custom_call.1} parent=11 // pred_fallthru
          _
        // Predicated region
        $region33: #{tpu_custom_call.1} parent=11 // pred_check
          %p568 = pneg %p311
        $region34: #{tpu_custom_call.1} parent=11 // pred_check_branch
          %570 = sbr.rel (%p568) target = $region36
        $region35: #{tpu_custom_call.1} parent=11 // pred_region
          %s572 = ssub.s32 512, 512
          %573 = vsyncadd [#allocation11], %s572
          %s574 = sshll.u32 [#allocation12], 4
          %s575 = int_to_ptr.vmem [resolvable:$true] %s574
          %580 = dma.hbm_to_vmem [thread:$0]  %s10, 512, %s575, [#allocation11], 64, 64, 4
        $region36: #{tpu_custom_call.1} parent=11 // pred_fallthru
          _
        // Predicated region
        $region37: #{tpu_custom_call.1} parent=11 // pred_check
          %p581 = pneg %p332
        $region38: #{tpu_custom_call.1} parent=11 // pred_check_branch
          %583 = sbr.rel (%p581) target = $region40
        $region39: #{tpu_custom_call.1} parent=11 // pred_region
          %s585 = ssub.s32 512, 512
          %586 = vsyncadd [#allocation14], %s585
          %s587 = sshll.u32 [#allocation13], 4
          %s588 = int_to_ptr.vmem [resolvable:$true] %s587
          %593 = dma.hbm_to_vmem [thread:$0]  %s11, 512, %s588, [#allocation14], 64, 64, 4
        $region40: #{tpu_custom_call.1} parent=11 // pred_fallthru
          _
        // Predicated region
        $region41: #{tpu_custom_call.1} parent=11 // pred_check
          %p594 = pneg %p353
        $region42: #{tpu_custom_call.1} parent=11 // pred_check_branch
          %596 = sbr.rel (%p594) target = $region44
        $region43: #{tpu_custom_call.1} parent=11 // pred_region
          %s598 = ssub.s32 512, 512
          %599 = vsyncadd [#allocation14], %s598
          %s600 = sshll.u32 [#allocation15], 4
          %s601 = int_to_ptr.vmem [resolvable:$true] %s600
          %606 = dma.hbm_to_vmem [thread:$0]  %s12, 512, %s601, [#allocation14], 64, 64, 4
        $region44: #{tpu_custom_call.1} parent=11 // pred_fallthru
          _
        // Predicated region
        $region45: #{tpu_custom_call.1} parent=11 // pred_check
          %p607 = pneg %p374
        $region46: #{tpu_custom_call.1} parent=11 // pred_check_branch
          %609 = sbr.rel (%p607) target = $region48
        $region47: #{tpu_custom_call.1} parent=11 // pred_region
          _
        $region48: #{tpu_custom_call.1} parent=11 // pred_fallthru
          _
        // Predicated region
        $region49: #{tpu_custom_call.1} parent=11 // pred_check
          %p610 = pneg %p395
        $region50: #{tpu_custom_call.1} parent=11 // pred_check_branch
          %612 = sbr.rel (%p610) target = $region52
        $region51: #{tpu_custom_call.1} parent=11 // pred_region
          _
        $region52: #{tpu_custom_call.1} parent=11 // pred_fallthru
          _
        // Predicated region
        $region53: #{tpu_custom_call.1} parent=11 // pred_check
          %p613 = pneg %p416
        $region54: #{tpu_custom_call.1} parent=11 // pred_check_branch
          %615 = sbr.rel (%p613) target = $region56
        $region55: #{tpu_custom_call.1} parent=11 // pred_region
          _
        $region56: #{tpu_custom_call.1} parent=11 // pred_fallthru
          _
        // Predicated region
        $region57: #{tpu_custom_call.1} parent=11 // pred_check
          %p616 = pneg %p437
        $region58: #{tpu_custom_call.1} parent=11 // pred_check_branch
          %618 = sbr.rel (%p616) target = $region60
        $region59: #{tpu_custom_call.1} parent=11 // pred_region
          _
        $region60: #{tpu_custom_call.1} parent=11 // pred_fallthru
          _
        // Predicated region
        $region61: #{tpu_custom_call.1} parent=11 // pred_check
          %p619 = pneg %p458
        $region62: #{tpu_custom_call.1} parent=11 // pred_check_branch
          %621 = sbr.rel (%p619) target = $region64
        $region63: #{tpu_custom_call.1} parent=11 // pred_region
          _
        $region64: #{tpu_custom_call.1} parent=11 // pred_fallthru
          _
        // Predicated region
        $region65: #{tpu_custom_call.1} parent=11 // pred_check
          %p622 = pneg %p479
        $region66: #{tpu_custom_call.1} parent=11 // pred_check_branch
          %624 = sbr.rel (%p622) target = $region68
        $region67: #{tpu_custom_call.1} parent=11 // pred_region
          _
        $region68: #{tpu_custom_call.1} parent=11 // pred_fallthru
          _
        // Predicated region
        $region69: #{tpu_custom_call.1} parent=11 // pred_check
          %p625 = pneg %p500
        $region70: #{tpu_custom_call.1} parent=11 // pred_check_branch
          %627 = sbr.rel (%p625) target = $region72
        $region71: #{tpu_custom_call.1} parent=11 // pred_region
          _
        $region72: #{tpu_custom_call.1} parent=11 // pred_fallthru
          _
      $region12: #{tpu_custom_call.1} parent=5 // pred_fallthru
        _
      %p628 = scmp.lt.s32.totalorder %s37, 2
      // Predicated region
      $region73: #{tpu_custom_call.1} parent=5 // pred_check
        %p629 = pneg %p628
      $region74: #{tpu_custom_call.1} parent=5 // pred_check_branch
        %631 = sbr.rel (%p629) target = $region76
      $region75: #{tpu_custom_call.1} parent=5 // pred_region
        // Predicated region
        $region77: #{tpu_custom_call.1} parent=75 // pred_check
          %p632 = pneg %p71
        $region78: #{tpu_custom_call.1} parent=75 // pred_check_branch
          %634 = sbr.rel (%p632) target = $region80
        $region79: #{tpu_custom_call.1} parent=75 // pred_region
          %s635 = sand.u32 %s61, 1
          %s636 = scalar_lea.sflag [#allocation5], %s635
          %s637 = sand.u32 %s61, 1
          %s638 = smul.addr %s637, 16
          %s639 = scalar_lea.vmem [#allocation4], %s638
          %s640 = smul.u32 2, %s45
          %s642 = ssub.s32 256, 256
          %643 = vsyncadd %s636, %s642
          %s644 = smul.addr %s44, 2
          %s645 = sadd.s32 %s640, %s644
          %s646 = smul.addr %s645, 128
          %s647 = scalar_lea.hbm %s0, %s646
          %s648 = sshll.u32 %s639, 4
          %s649 = int_to_ptr.vmem [resolvable:$true] %s648
          %654 = dma.hbm_to_vmem [thread:$0]  %s647, 256, %s649, %s636, 128, 128, 8
        $region80: #{tpu_custom_call.1} parent=75 // pred_fallthru
          _
        // Predicated region
        $region81: #{tpu_custom_call.1} parent=75 // pred_check
          %p655 = pneg %p97
        $region82: #{tpu_custom_call.1} parent=75 // pred_check_branch
          %657 = sbr.rel (%p655) target = $region84
        $region83: #{tpu_custom_call.1} parent=75 // pred_region
          %p658 = scmp.lt.s32.totalorder %s44, 1
          %s659 = scalar_select %p658, %s44, 1
          %s660 = smul.addr %s659, 4
          %s661 = smul.addr %s660, 8
          %s662 = scalar_lea.vmem %s1, %s661
        $region84: #{tpu_custom_call.1} parent=75 // pred_fallthru
          _
        // Predicated region
        $region85: #{tpu_custom_call.1} parent=75 // pred_check
          %p663 = pneg %p125
        $region86: #{tpu_custom_call.1} parent=75 // pred_check_branch
          %665 = sbr.rel (%p663) target = $region88
        $region87: #{tpu_custom_call.1} parent=75 // pred_region
          %s666 = sand.u32 %s37, 1
          %s667 = scalar_lea.sflag [#allocation8], %s666
          %s668 = sand.u32 %s115, 1
          %s669 = smul.addr %s668, 8
          %s670 = scalar_lea.vmem [#allocation7], %s669
          %s671 = smul.u32 2, %s45
          %s673 = ssub.s32 128, 128
          %674 = vsyncadd %s667, %s673
          %s675 = smul.addr %s44, 2
          %s676 = sadd.s32 %s671, %s675
          %s677 = smul.addr %s676, 64
          %s678 = scalar_lea.hbm %s2, %s677
          %s679 = sshll.u32 %s670, 4
          %s680 = int_to_ptr.vmem [resolvable:$true] %s679
          %685 = dma.hbm_to_vmem [thread:$0]  %s678, 128, %s680, %s667, 64, 64, 4
        $region88: #{tpu_custom_call.1} parent=75 // pred_fallthru
          _
        // Predicated region
        $region89: #{tpu_custom_call.1} parent=75 // pred_check
          %p686 = pneg %p151
        $region90: #{tpu_custom_call.1} parent=75 // pred_check_branch
          %688 = sbr.rel (%p686) target = $region92
        $region91: #{tpu_custom_call.1} parent=75 // pred_region
          %s689 = sand.u32 %s37, 1
          %s690 = scalar_lea.sflag [#allocation8], %s689
          %s691 = sand.u32 %s141, 1
          %s692 = smul.addr %s691, 16
          %s693 = scalar_lea.vmem [#allocation9], %s692
          %s695 = ssub.s32 256, 256
          %696 = vsyncadd %s690, %s695
          %s697 = smul.addr %s44, 4
          %s698 = smul.addr %s697, 64
          %s699 = scalar_lea.hbm %s3, %s698
          %s700 = sshll.u32 %s693, 4
          %s701 = int_to_ptr.vmem [resolvable:$true] %s700
          %706 = dma.hbm_to_vmem [thread:$0]  %s699, 256, %s701, %s690, 64, 64, 4
        $region92: #{tpu_custom_call.1} parent=75 // pred_fallthru
          _
        // Predicated region
        $region93: #{tpu_custom_call.1} parent=75 // pred_check
          %p707 = pneg %p179
        $region94: #{tpu_custom_call.1} parent=75 // pred_check_branch
          %709 = sbr.rel (%p707) target = $region96
        $region95: #{tpu_custom_call.1} parent=75 // pred_region
          %s710 = smul.u32 2, %s45
          %p711 = scmp.lt.s32.totalorder %s44, 1
          %s712 = scalar_select %p711, %s44, 1
          %p713 = scmp.lt.s32.totalorder %s710, 1
          %s714 = scalar_select %p713, %s710, 1
          %s715 = smul.addr %s712, 8
          %s716 = sadd.s32 %s714, %s715
          %s717 = smul.addr %s716, 4
          %s718 = scalar_lea.vmem %s4, %s717
          %s719 = smul.u32 2, %s45
        $region96: #{tpu_custom_call.1} parent=75 // pred_fallthru
          _
      $region76: #{tpu_custom_call.1} parent=5 // pred_fallthru
        _
      %p720 = scmp.le.s32.totalorder 1, %s37
      %p721 = scmp.lt.s32.totalorder %s37, 3
      %p722 = pnand %p720, %p721
      %p723 = pneg %p722
      // Predicated region
      $region97: #{tpu_custom_call.1} parent=5 // pred_check
        _
      $region98: #{tpu_custom_call.1} parent=5 // pred_check_branch
        %725 = sbr.rel (%p722) target = $region100
      $region99: #{tpu_custom_call.1} parent=5 // pred_region
        %s726 = ssub.s32 %s37, 1
        %s727 = sand.u32 %s64, 1
        %s728 = scalar_lea.sflag [#allocation5], %s727
        %s729 = sand.u32 %s64, 1
        %s730 = smul.addr %s729, 16
        %s731 = scalar_lea.vmem [#allocation4], %s730
        // Predicated region
        $region101: #{tpu_custom_call.1} parent=99 // pred_check
          %p732 = pneg %p77
        $region102: #{tpu_custom_call.1} parent=99 // pred_check_branch
          %734 = sbr.rel (%p732) target = $region104
        $region103: #{tpu_custom_call.1} parent=99 // pred_region
          %735 = dma.done %s728, 256
        $region104: #{tpu_custom_call.1} parent=99 // pred_fallthru
          _
        %s736 = sand.u32 %s42, 1
        %s737 = scalar_lea.sflag [#allocation8], %s736
        %s738 = sand.u32 %s118, 1
        %s739 = smul.addr %s738, 8
        %s740 = scalar_lea.vmem [#allocation7], %s739
        // Predicated region
        $region105: #{tpu_custom_call.1} parent=99 // pred_check
          %p741 = pneg %p131
        $region106: #{tpu_custom_call.1} parent=99 // pred_check_branch
          %743 = sbr.rel (%p741) target = $region108
        $region107: #{tpu_custom_call.1} parent=99 // pred_region
          %744 = dma.done %s737, 128
        $region108: #{tpu_custom_call.1} parent=99 // pred_fallthru
          _
        %s745 = sand.u32 %s42, 1
        %s746 = scalar_lea.sflag [#allocation8], %s745
        %s747 = sand.u32 %s144, 1
        %s748 = smul.addr %s747, 16
        %s749 = scalar_lea.vmem [#allocation9], %s748
        // Predicated region
        $region109: #{tpu_custom_call.1} parent=99 // pred_check
          %p750 = pneg %p157
        $region110: #{tpu_custom_call.1} parent=99 // pred_check_branch
          %752 = sbr.rel (%p750) target = $region112
        $region111: #{tpu_custom_call.1} parent=99 // pred_region
          %753 = dma.done %s746, 256
        $region112: #{tpu_custom_call.1} parent=99 // pred_fallthru
          _
        // Predicated region
        $region113: #{tpu_custom_call.1} parent=99 // pred_check
          %p754 = pneg %p290
        $region114: #{tpu_custom_call.1} parent=99 // pred_check_branch
          %756 = sbr.rel (%p754) target = $region116
        $region115: #{tpu_custom_call.1} parent=99 // pred_region
          %757 = dma.done [#allocation11], 512
        $region116: #{tpu_custom_call.1} parent=99 // pred_fallthru
          _
        // Predicated region
        $region117: #{tpu_custom_call.1} parent=99 // pred_check
          %p758 = pneg %p311
        $region118: #{tpu_custom_call.1} parent=99 // pred_check_branch
          %760 = sbr.rel (%p758) target = $region120
        $region119: #{tpu_custom_call.1} parent=99 // pred_region
          %761 = dma.done [#allocation11], 512
        $region120: #{tpu_custom_call.1} parent=99 // pred_fallthru
          _
        // Predicated region
        $region121: #{tpu_custom_call.1} parent=99 // pred_check
          %p762 = pneg %p332
        $region122: #{tpu_custom_call.1} parent=99 // pred_check_branch
          %764 = sbr.rel (%p762) target = $region124
        $region123: #{tpu_custom_call.1} parent=99 // pred_region
          %765 = dma.done [#allocation14], 512
        $region124: #{tpu_custom_call.1} parent=99 // pred_fallthru
          _
        // Predicated region
        $region125: #{tpu_custom_call.1} parent=99 // pred_check
          %p766 = pneg %p353
        $region126: #{tpu_custom_call.1} parent=99 // pred_check_branch
          %768 = sbr.rel (%p766) target = $region128
        $region127: #{tpu_custom_call.1} parent=99 // pred_region
          %769 = dma.done [#allocation14], 512
        $region128: #{tpu_custom_call.1} parent=99 // pred_fallthru
          _
        %s770 = sand.u32 %s64, 1
        %s771 = scalar_lea.sflag [#allocation5], %s770
        %s772 = sand.u32 %s64, 1
        %s773 = smul.addr %s772, 16
        %s774 = scalar_lea.vmem [#allocation4], %s773
        %p775 = pneg %p77
        %p776 = pneg %p74
        %p777 = scmp.lt.s32.totalorder %s46, 1
        %s778 = scalar_select %p777, %s46, 1
        %s779 = smul.addr %s778, 4
        %s780 = smul.addr %s779, 8
        %s781 = scalar_lea.vmem %s1, %s780
        %p782 = pneg %p103
        %p783 = pneg %p100
        %s784 = sand.u32 %s42, 1
        %s785 = scalar_lea.sflag [#allocation8], %s784
        %s786 = sand.u32 %s118, 1
        %s787 = smul.addr %s786, 8
        %s788 = scalar_lea.vmem [#allocation7], %s787
        %p789 = pneg %p131
        %p790 = pneg %p128
        %s791 = sand.u32 %s42, 1
        %s792 = scalar_lea.sflag [#allocation8], %s791
        %s793 = sand.u32 %s144, 1
        %s794 = smul.addr %s793, 16
        %s795 = scalar_lea.vmem [#allocation9], %s794
        %p796 = pneg %p157
        %p797 = pneg %p154
        %s798 = smul.u32 2, %s47
        %p799 = scmp.lt.s32.totalorder %s46, 1
        %s800 = scalar_select %p799, %s46, 1
        %p801 = scmp.lt.s32.totalorder %s798, 1
        %s802 = scalar_select %p801, %s798, 1
        %s803 = smul.addr %s800, 8
        %s804 = sadd.s32 %s802, %s803
        %s805 = smul.addr %s804, 4
        %s806 = scalar_lea.vmem %s4, %s805
        %p807 = pneg %p185
        %p808 = pneg %p182
        %p809 = pneg %p206
        %p810 = pneg %p203
        %p811 = pneg %p227
        %p812 = pneg %p224
        %p813 = pneg %p248
        %p814 = pneg %p245
        %p815 = pneg %p269
        %p816 = pneg %p266
        %p817 = pneg %p290
        %p818 = pneg %p287
        %p819 = pneg %p311
        %p820 = pneg %p308
        %p821 = pneg %p332
        %p822 = pneg %p329
        %p823 = pneg %p353
        %p824 = pneg %p350
        %p825 = pneg %p374
        %p826 = pneg %p371
        %p827 = pneg %p395
        %p828 = pneg %p392
        %p829 = pneg %p416
        %p830 = pneg %p413
        %p831 = pneg %p437
        %p832 = pneg %p434
        %p833 = pneg %p458
        %p834 = pneg %p455
        %p835 = pneg %p479
        %p836 = pneg %p476
        %p837 = pneg %p500
        %p838 = pneg %p497
        %p839 = pneg %p528
        %p840 = pneg %p525
        %s841 = sand.u32 %s515, 1
        %s842 = scalar_lea.sflag [#allocation6], %s841
        %s843 = sand.u32 %s515, 1
        %s844 = smul.addr %s843, 16
        %s845 = scalar_lea.vmem [#allocation16], %s844
        %s846 = smul.u32 2, %s47
        %p847 = scmp.lt.s32.totalorder %s46, 1
        %s848 = scalar_select %p847, %s46, 1
        %s849 = smul.addr %s848, 4
        %s850 = smul.addr %s849, 8
        %s851 = scalar_lea.vmem %s1, %s850
        %s852 = smul.u32 2, %s47
        %s853 = smul.u32 2, %s47
        %p854 = scmp.lt.s32.totalorder %s46, 1
        %s855 = scalar_select %p854, %s46, 1
        %p856 = scmp.lt.s32.totalorder %s853, 1
        %s857 = scalar_select %p856, %s853, 1
        %s858 = smul.addr %s855, 8
        %s859 = sadd.s32 %s857, %s858
        %s860 = smul.addr %s859, 4
        %s861 = scalar_lea.vmem %s4, %s860
        %s862 = smul.u32 2, %s47
        %s863 = smul.u32 2, %s47
        %p865 = scmp.eq.s32.totalorder %s47, 0
        // Predicated region
        $region129: #{tpu_custom_call.1} parent=99 // pred_check
          %p866 = pneg %p865
        $region130: #{tpu_custom_call.1} parent=99 // pred_check_branch
          %868 = sbr.rel (%p866) target = $region132
        $region131: #{tpu_custom_call.1} parent=99 // pred_region
          %v869 = vld [vmem:[%s851] sm:$0xff]
          %v870 = vld [vmem:[%s851 + $0x8] sm:$0xff]
          %v871 = vld [vmem:[%s851 + $0x10] sm:$0xff]
          %v872 = vld [vmem:[%s851 + $0x18] sm:$0xff]
          %v873 = vld [vmem:[%s7] sm:$0x1]
          %v874 = vld [vmem:[%s8] sm:$0x1]
          %vm875 = vcmask 523264
          %v876 = vsel %vm875, %v869, 0.0
          %877 = vadd.xlane.f32.xlu0 %v876
          %v878 = vpop.xlane.xlu0 %877
          %v879 = vsel %vm875, %v870, 0.0
          %880 = vadd.xlane.f32.xlu0 %v879
          %v881 = vpop.xlane.xlu0 %880
          %v882 = vsel %vm875, %v871, 0.0
          %883 = vadd.xlane.f32.xlu0 %v882
          %v884 = vpop.xlane.xlu0 %883
          %v885 = vsel %vm875, %v872, 0.0
          %886 = vadd.xlane.f32.xlu0 %v885
          %v887 = vpop.xlane.xlu0 %886
          %v888 = vrcp.pop 64.0
          %v889 = vmul.f32 %v878, %v888
          %v890 = vmul.f32 %v881, %v888
          %v891 = vmul.f32 %v884, %v888
          %v892 = vmul.f32 %v887, %v888
          %v893 = vsub.f32 %v869, %v889
          %v894 = vsub.f32 %v870, %v890
          %v895 = vsub.f32 %v871, %v891
          %v896 = vsub.f32 %v872, %v892
          %v897 = vmul.f32 %v893, %v893
          %v898 = vmul.f32 %v894, %v894
          %v899 = vmul.f32 %v895, %v895
          %v900 = vmul.f32 %v896, %v896
          %v901 = vsel %vm875, %v897, 0.0
          %902 = vadd.xlane.f32.xlu0 %v901
          %v903 = vpop.xlane.xlu0 %902
          %v904 = vsel %vm875, %v898, 0.0
          %905 = vadd.xlane.f32.xlu0 %v904
          %v906 = vpop.xlane.xlu0 %905
          %v907 = vsel %vm875, %v899, 0.0
          %908 = vadd.xlane.f32.xlu0 %v907
          %v909 = vpop.xlane.xlu0 %908
          %v910 = vsel %vm875, %v900, 0.0
          %911 = vadd.xlane.f32.xlu0 %v910
          %v912 = vpop.xlane.xlu0 %911
          %v913 = vmul.f32 %v903, %v888
          %v914 = vmul.f32 %v906, %v888
          %v915 = vmul.f32 %v909, %v888
          %v916 = vmul.f32 %v912, %v888
          %v917 = vadd.f32 %v913, 1e-05
          %v918 = vadd.f32 %v914, 1e-05
          %v919 = vadd.f32 %v915, 1e-05
          %v920 = vadd.f32 %v916, 1e-05
          %v921 = vrsqrt.pop %v917
          %v922 = vrsqrt.pop %v918
          %v923 = vrsqrt.pop %v919
          %v924 = vrsqrt.pop %v920
          %v925 = vmul.f32 %v893, %v921
          %v926 = vmul.f32 %v894, %v922
          %v927 = vmul.f32 %v895, %v923
          %v928 = vmul.f32 %v896, %v924
          %v930 = vlaneseq
          %v931 = vshrl.u32 %v930, 7
          %v932 = vsub.s32 0, %v931
          %v933 = vrot.slane %v873, %v932
          %v935 = vmul.f32 %v925, %v933
          %v936 = vmul.f32 %v926, %v933
          %v937 = vmul.f32 %v927, %v933
          %v938 = vmul.f32 %v928, %v933
          %v940 = vlaneseq
          %v941 = vshrl.u32 %v940, 7
          %v942 = vsub.s32 0, %v941
          %v943 = vrot.slane %v874, %v942
          %v945 = vadd.f32 %v935, %v943
          %v946 = vadd.f32 %v936, %v943
          %v947 = vadd.f32 %v937, %v943
          %v948 = vadd.f32 %v938, %v943
          %v949 = vld [vmem:[%s749] sm:$0xf]
          %v950 = vld [vmem:[%s749 + $0x4] sm:$0xf]
          %v951 = vld [vmem:[%s749 + $0x8] sm:$0xf]
          %v952 = vld [vmem:[%s749 + $0xc] sm:$0xf]
          %v953 = vunpack.c.l.bf16 %v949
          %v954 = vunpack.c.l.bf16 %v950
          %v955 = vunpack.c.l.bf16 %v951
          %v956 = vunpack.c.l.bf16 %v952
          %v957 = vadd.f32 %v945, %v953
          %v958 = vadd.f32 %v946, %v954
          %v959 = vadd.f32 %v947, %v955
          %v960 = vadd.f32 %v948, %v956
          %v961 = vpack.c.bf16 %v958, %v957
          %v962 = vpack.c.bf16 %v960, %v959
          %v963 = vpack.c.bf16 %v946, %v945
          %v964 = vpack.c.bf16 %v948, %v947
          %v965 = vld [vmem:[#allocation12] sm:$0xf]
          %v966 = vld [vmem:[#allocation12 + $0x4] sm:$0xf]
          %v967 = vld [vmem:[#allocation12 + $0x8] sm:$0xf]
          %v968 = vld [vmem:[#allocation12 + $0xc] sm:$0xf]
          %v969 = vld [vmem:[#allocation12 + $0x10] sm:$0xf]
          %v970 = vld [vmem:[#allocation12 + $0x14] sm:$0xf]
          %v971 = vld [vmem:[#allocation12 + $0x18] sm:$0xf]
          %v972 = vld [vmem:[#allocation12 + $0x1c] sm:$0xf]
          %v981 = vunpack.c.l.b16 %v965
          %v982 = vunpack.c.l.b16 %v966
          %v983 = vunpack.c.l.b16 %v967
          %v984 = vunpack.c.l.b16 %v968
          %v985 = vunpack.c.l.b16 %v969
          %v986 = vunpack.c.l.b16 %v970
          %v987 = vunpack.c.l.b16 %v971
          %v988 = vunpack.c.l.b16 %v972
          %v989 = vpack.c.b16 %v982, %v981
          %v990 = vpack.c.b16 %v984, %v983
          %v991 = vpack.c.b16 %v986, %v985
          %v992 = vpack.c.b16 %v988, %v987
          %v998 = vsel %vm875, %v961, 0
          %v1001 = vsel %vm875, %v962, 0
          %1003 = vmatprep.subr.bf16.mxu0 0
          %1004 = vmatpush1.bf16.msra.mxu0 0
          %1005 = vmatprep.subr.bf16.mxu0 0
          %1006 = vmatpush1.bf16.msra.mxu0 0
          %1007 = vmatprep.subr.bf16.mxu0 0
          %1008 = vmatpush1.bf16.msra.mxu0 0
          %1009 = vmatprep.subr.bf16.mxu0 0
          %1010 = vmatpush1.bf16.msra.mxu0 0
          %1011 = vmatprep.subr.bf16.mxu0 0
          %1012 = vmatpush1.bf16.msra.mxu0 %v992
          %1013 = vmatprep.subr.bf16.mxu0 0
          %1014 = vmatpush1.bf16.msra.mxu0 %v991
          %1015 = vmatprep.subr.bf16.mxu0 0
          %1016 = vmatpush1.bf16.msra.mxu0 %v990
          %1017 = vmatprep.subr.bf16.mxu0 0
          %1018 = vmatpush1.bf16.msra.mxu0 %v989
          %1019 = vmatprep.subr.bf16.mxu0 0
          %1020 = vmatpush2.bf16.msra.mxu0 0
          %1021 = vmatprep.subr.bf16.mxu0 0
          %1022 = vmatpush2.bf16.msra.mxu0 0
          %1023 = vmatprep.subr.bf16.mxu0 0
          %1024 = vmatpush2.bf16.msra.mxu0 0
          %1025 = vmatprep.subr.bf16.mxu0 0
          %1026 = vmatpush2.bf16.msra.mxu0 0
          %1027 = vmatprep.subr.bf16.mxu0 0
          %1028 = vmatpush2.bf16.msra.mxu0 0
          %1029 = vmatprep.subr.bf16.mxu0 0
          %1030 = vmatpush2.bf16.msra.mxu0 0
          %1031 = vmatprep.subr.bf16.mxu0 0
          %1032 = vmatpush2.bf16.msra.mxu0 0
          %1033 = vmatprep.subr.bf16.mxu0 0
          %1034 = vmatpush2.bf16.msra.mxu0 0
          %1035 = vmatprep.mubr.bf16.mxu0 0
          %1036 = vmatmul.mubr.bf16.gmra.mxu0 %v998
          %v1037 = vpop.f32.mrf.mxu0
          %v1038 = vadd.f32 0.0, %v1037
          %v1039 = vpop.f32.mrf.mxu0
          %v1040 = vpop.f32.mrf.mxu0
          %v1041 = vadd.f32 0.0, %v1040
          %v1042 = vpop.f32.mrf.mxu0
          %1043 = vmatprep.mubr.bf16.mxu0 0
          %1044 = vmatmul.mubr.bf16.gmra.mxu0 %v1001
          %v1045 = vpop.f32.mrf.mxu0
          %v1046 = vadd.f32 0.0, %v1045
          %v1047 = vpop.f32.mrf.mxu0
          %v1048 = vpop.f32.mrf.mxu0
          %v1049 = vadd.f32 0.0, %v1048
          %v1050 = vpop.f32.mrf.mxu0
          %1051 = vdwg.mxu0
          %v1052 = vpack.c.bf16 %v1041, %v1038
          %v1053 = vpack.c.bf16 %v1049, %v1046
          %v1054 = vld [vmem:[#allocation13] sm:$0xf]
          %v1055 = vld [vmem:[#allocation13 + $0x4] sm:$0xf]
          %v1056 = vld [vmem:[#allocation13 + $0x8] sm:$0xf]
          %v1057 = vld [vmem:[#allocation13 + $0xc] sm:$0xf]
          %v1058 = vld [vmem:[#allocation13 + $0x10] sm:$0xf]
          %v1059 = vld [vmem:[#allocation13 + $0x14] sm:$0xf]
          %v1060 = vld [vmem:[#allocation13 + $0x18] sm:$0xf]
          %v1061 = vld [vmem:[#allocation13 + $0x1c] sm:$0xf]
          %v1070 = vunpack.c.l.b16 %v1054
          %v1071 = vunpack.c.l.b16 %v1055
          %v1072 = vunpack.c.l.b16 %v1056
          %v1073 = vunpack.c.l.b16 %v1057
          %v1074 = vunpack.c.l.b16 %v1058
          %v1075 = vunpack.c.l.b16 %v1059
          %v1076 = vunpack.c.l.b16 %v1060
          %v1077 = vunpack.c.l.b16 %v1061
          %v1078 = vpack.c.b16 %v1071, %v1070
          %v1079 = vpack.c.b16 %v1073, %v1072
          %v1080 = vpack.c.b16 %v1075, %v1074
          %v1081 = vpack.c.b16 %v1077, %v1076
          %v1087 = vsel %vm875, %v963, 0
          %v1090 = vsel %vm875, %v964, 0
          %1092 = vmatprep.subr.bf16.mxu0 0
          %1093 = vmatpush1.bf16.msra.mxu0 0
          %1094 = vmatprep.subr.bf16.mxu0 0
          %1095 = vmatpush1.bf16.msra.mxu0 0
          %1096 = vmatprep.subr.bf16.mxu0 0
          %1097 = vmatpush1.bf16.msra.mxu0 0
          %1098 = vmatprep.subr.bf16.mxu0 0
          %1099 = vmatpush1.bf16.msra.mxu0 0
          %1100 = vmatprep.subr.bf16.mxu0 0
          %1101 = vmatpush1.bf16.msra.mxu0 %v1081
          %1102 = vmatprep.subr.bf16.mxu0 0
          %1103 = vmatpush1.bf16.msra.mxu0 %v1080
          %1104 = vmatprep.subr.bf16.mxu0 0
          %1105 = vmatpush1.bf16.msra.mxu0 %v1079
          %1106 = vmatprep.subr.bf16.mxu0 0
          %1107 = vmatpush1.bf16.msra.mxu0 %v1078
          %1108 = vmatprep.subr.bf16.mxu0 0
          %1109 = vmatpush2.bf16.msra.mxu0 0
          %1110 = vmatprep.subr.bf16.mxu0 0
          %1111 = vmatpush2.bf16.msra.mxu0 0
          %1112 = vmatprep.subr.bf16.mxu0 0
          %1113 = vmatpush2.bf16.msra.mxu0 0
          %1114 = vmatprep.subr.bf16.mxu0 0
          %1115 = vmatpush2.bf16.msra.mxu0 0
          %1116 = vmatprep.subr.bf16.mxu0 0
          %1117 = vmatpush2.bf16.msra.mxu0 0
          %1118 = vmatprep.subr.bf16.mxu0 0
          %1119 = vmatpush2.bf16.msra.mxu0 0
          %1120 = vmatprep.subr.bf16.mxu0 0
          %1121 = vmatpush2.bf16.msra.mxu0 0
          %1122 = vmatprep.subr.bf16.mxu0 0
          %1123 = vmatpush2.bf16.msra.mxu0 0
          %1124 = vmatprep.mubr.bf16.mxu0 0
          %1125 = vmatmul.mubr.bf16.gmra.mxu0 %v1087
          %v1126 = vpop.f32.mrf.mxu0
          %v1127 = vadd.f32 0.0, %v1126
          %v1128 = vpop.f32.mrf.mxu0
          %v1129 = vpop.f32.mrf.mxu0
          %v1130 = vadd.f32 0.0, %v1129
          %v1131 = vpop.f32.mrf.mxu0
          %1132 = vmatprep.mubr.bf16.mxu0 0
          %1133 = vmatmul.mubr.bf16.gmra.mxu0 %v1090
          %v1134 = vpop.f32.mrf.mxu0
          %v1135 = vadd.f32 0.0, %v1134
          %v1136 = vpop.f32.mrf.mxu0
          %v1137 = vpop.f32.mrf.mxu0
          %v1138 = vadd.f32 0.0, %v1137
          %v1139 = vpop.f32.mrf.mxu0
          %1140 = vdwg.mxu0
          %v1141 = vpack.c.bf16 %v1130, %v1127
          %v1142 = vpack.c.bf16 %v1138, %v1135
          %v1145 = vunpack.c.l.b16 %v1052
          %v1146 = vunpack.c.h.b16 %v1052
          %v1147 = vunpack.c.l.b16 %v1053
          %v1148 = vunpack.c.h.b16 %v1053
          %v1149 = vpack.c.b16 %v1145, %v1145
          %v1150 = vpack.c.b16 %v1146, %v1146
          %v1151 = vpack.c.b16 %v1147, %v1147
          %v1152 = vpack.c.b16 %v1148, %v1148
          %vm1157 = vcmask 125952
          %1158 = vst.msk [vmem:[#allocation2] sm:$0xf] %vm1157, %v1149
          %1159 = vst.msk [vmem:[#allocation2 + $0x4] sm:$0xf] %vm1157, %v1150
          %1160 = vst.msk [vmem:[#allocation2 + $0x8] sm:$0xf] %vm1157, %v1151
          %1161 = vst.msk [vmem:[#allocation2 + $0xc] sm:$0xf] %vm1157, %v1152
          %v1164 = vunpack.c.l.b16 %v1141
          %v1165 = vunpack.c.h.b16 %v1141
          %v1166 = vunpack.c.l.b16 %v1142
          %v1167 = vunpack.c.h.b16 %v1142
          %v1168 = vpack.c.b16 %v1164, %v1164
          %v1169 = vpack.c.b16 %v1165, %v1165
          %v1170 = vpack.c.b16 %v1166, %v1166
          %v1171 = vpack.c.b16 %v1167, %v1167
          %1176 = vst.msk [vmem:[#allocation3] sm:$0xf] %vm1157, %v1168
          %1177 = vst.msk [vmem:[#allocation3 + $0x4] sm:$0xf] %vm1157, %v1169
          %1178 = vst.msk [vmem:[#allocation3 + $0x8] sm:$0xf] %vm1157, %v1170
          %1179 = vst.msk [vmem:[#allocation3 + $0xc] sm:$0xf] %vm1157, %v1171
          %1180 = vrot.lane.b32.xlu0 %v1149, 112
          %v1181 = vpop.permute.xlu0 %1180
          %1182 = vrot.lane.b32.xlu0 %v1150, 112
          %v1183 = vpop.permute.xlu0 %1182
          %1184 = vrot.lane.b32.xlu0 %v1151, 112
          %v1185 = vpop.permute.xlu0 %1184
          %1186 = vrot.lane.b32.xlu0 %v1152, 112
          %v1187 = vpop.permute.xlu0 %1186
          %s1192 = scalar_lea.vmem [#allocation2], 16
          %1193 = vst.msk [vmem:[%s1192] sm:$0xf] %vm1157, %v1181
          %1194 = vst.msk [vmem:[%s1192 + $0x4] sm:$0xf] %vm1157, %v1183
          %1195 = vst.msk [vmem:[%s1192 + $0x8] sm:$0xf] %vm1157, %v1185
          %1196 = vst.msk [vmem:[%s1192 + $0xc] sm:$0xf] %vm1157, %v1187
          %1197 = vrot.lane.b32.xlu0 %v1168, 112
          %v1198 = vpop.permute.xlu0 %1197
          %1199 = vrot.lane.b32.xlu0 %v1169, 112
          %v1200 = vpop.permute.xlu0 %1199
          %1201 = vrot.lane.b32.xlu0 %v1170, 112
          %v1202 = vpop.permute.xlu0 %1201
          %1203 = vrot.lane.b32.xlu0 %v1171, 112
          %v1204 = vpop.permute.xlu0 %1203
          %s1209 = scalar_lea.vmem [#allocation3], 16
          %1210 = vst.msk [vmem:[%s1209] sm:$0xf] %vm1157, %v1198
          %1211 = vst.msk [vmem:[%s1209 + $0x4] sm:$0xf] %vm1157, %v1200
          %1212 = vst.msk [vmem:[%s1209 + $0x8] sm:$0xf] %vm1157, %v1202
          %1213 = vst.msk [vmem:[%s1209 + $0xc] sm:$0xf] %vm1157, %v1204
          %1214 = vrot.lane.b32.xlu0 %v1149, 96
          %v1215 = vpop.permute.xlu0 %1214
          %1216 = vrot.lane.b32.xlu0 %v1150, 96
          %v1217 = vpop.permute.xlu0 %1216
          %1218 = vrot.lane.b32.xlu0 %v1151, 96
          %v1219 = vpop.permute.xlu0 %1218
          %1220 = vrot.lane.b32.xlu0 %v1152, 96
          %v1221 = vpop.permute.xlu0 %1220
          %s1226 = scalar_lea.vmem [#allocation2], 32
          %1227 = vst.msk [vmem:[%s1226] sm:$0xf] %vm1157, %v1215
          %1228 = vst.msk [vmem:[%s1226 + $0x4] sm:$0xf] %vm1157, %v1217
          %1229 = vst.msk [vmem:[%s1226 + $0x8] sm:$0xf] %vm1157, %v1219
          %1230 = vst.msk [vmem:[%s1226 + $0xc] sm:$0xf] %vm1157, %v1221
          %1231 = vrot.lane.b32.xlu0 %v1168, 96
          %v1232 = vpop.permute.xlu0 %1231
          %1233 = vrot.lane.b32.xlu0 %v1169, 96
          %v1234 = vpop.permute.xlu0 %1233
          %1235 = vrot.lane.b32.xlu0 %v1170, 96
          %v1236 = vpop.permute.xlu0 %1235
          %1237 = vrot.lane.b32.xlu0 %v1171, 96
          %v1238 = vpop.permute.xlu0 %1237
          %s1243 = scalar_lea.vmem [#allocation3], 32
          %1244 = vst.msk [vmem:[%s1243] sm:$0xf] %vm1157, %v1232
          %1245 = vst.msk [vmem:[%s1243 + $0x4] sm:$0xf] %vm1157, %v1234
          %1246 = vst.msk [vmem:[%s1243 + $0x8] sm:$0xf] %vm1157, %v1236
          %1247 = vst.msk [vmem:[%s1243 + $0xc] sm:$0xf] %vm1157, %v1238
          %1248 = vrot.lane.b32.xlu0 %v1149, 80
          %v1249 = vpop.permute.xlu0 %1248
          %1250 = vrot.lane.b32.xlu0 %v1150, 80
          %v1251 = vpop.permute.xlu0 %1250
          %1252 = vrot.lane.b32.xlu0 %v1151, 80
          %v1253 = vpop.permute.xlu0 %1252
          %1254 = vrot.lane.b32.xlu0 %v1152, 80
          %v1255 = vpop.permute.xlu0 %1254
          %s1260 = scalar_lea.vmem [#allocation2], 48
          %1261 = vst.msk [vmem:[%s1260] sm:$0xf] %vm1157, %v1249
          %1262 = vst.msk [vmem:[%s1260 + $0x4] sm:$0xf] %vm1157, %v1251
          %1263 = vst.msk [vmem:[%s1260 + $0x8] sm:$0xf] %vm1157, %v1253
          %1264 = vst.msk [vmem:[%s1260 + $0xc] sm:$0xf] %vm1157, %v1255
          %1265 = vrot.lane.b32.xlu0 %v1168, 80
          %v1266 = vpop.permute.xlu0 %1265
          %1267 = vrot.lane.b32.xlu0 %v1169, 80
          %v1268 = vpop.permute.xlu0 %1267
          %1269 = vrot.lane.b32.xlu0 %v1170, 80
          %v1270 = vpop.permute.xlu0 %1269
          %1271 = vrot.lane.b32.xlu0 %v1171, 80
          %v1272 = vpop.permute.xlu0 %1271
          %s1277 = scalar_lea.vmem [#allocation3], 48
          %1278 = vst.msk [vmem:[%s1277] sm:$0xf] %vm1157, %v1266
          %1279 = vst.msk [vmem:[%s1277 + $0x4] sm:$0xf] %vm1157, %v1268
          %1280 = vst.msk [vmem:[%s1277 + $0x8] sm:$0xf] %vm1157, %v1270
          %1281 = vst.msk [vmem:[%s1277 + $0xc] sm:$0xf] %vm1157, %v1272
        $region132: #{tpu_custom_call.1} parent=99 // pred_fallthru
          _
        %v1282 = vld [vmem:[%s731] sm:$0xff]
        %v1283 = vld [vmem:[%s731 + $0x8] sm:$0xff]
        %v1284 = vld [vmem:[%s5] sm:$0x1]
        %v1285 = vld [vmem:[%s6] sm:$0x1]
        %vm1286 = vcmask 523264
        %v1287 = vsel %vm1286, %v1282, 0.0
        %1288 = vadd.xlane.f32.xlu0 %v1287
        %v1289 = vpop.xlane.xlu0 %1288
        %v1290 = vsel %vm1286, %v1283, 0.0
        %1291 = vadd.xlane.f32.xlu0 %v1290
        %v1292 = vpop.xlane.xlu0 %1291
        %v1293 = vrcp.pop 64.0
        %v1294 = vmul.f32 %v1289, %v1293
        %v1295 = vmul.f32 %v1292, %v1293
        %v1296 = vsub.f32 %v1282, %v1294
        %v1297 = vsub.f32 %v1283, %v1295
        %v1298 = vmul.f32 %v1296, %v1296
        %v1299 = vmul.f32 %v1297, %v1297
        %v1300 = vsel %vm1286, %v1298, 0.0
        %1301 = vadd.xlane.f32.xlu0 %v1300
        %v1302 = vpop.xlane.xlu0 %1301
        %v1303 = vsel %vm1286, %v1299, 0.0
        %1304 = vadd.xlane.f32.xlu0 %v1303
        %v1305 = vpop.xlane.xlu0 %1304
        %v1306 = vmul.f32 %v1302, %v1293
        %v1307 = vmul.f32 %v1305, %v1293
        %v1308 = vadd.f32 %v1306, 1e-05
        %v1309 = vadd.f32 %v1307, 1e-05
        %v1310 = vrsqrt.pop %v1308
        %v1311 = vrsqrt.pop %v1309
        %v1312 = vmul.f32 %v1296, %v1310
        %v1313 = vmul.f32 %v1297, %v1311
        %v1315 = vlaneseq
        %v1316 = vshrl.u32 %v1315, 7
        %v1317 = vsub.s32 0, %v1316
        %v1318 = vrot.slane %v1284, %v1317
        %v1320 = vmul.f32 %v1312, %v1318
        %v1321 = vmul.f32 %v1313, %v1318
        %v1323 = vlaneseq
        %v1324 = vshrl.u32 %v1323, 7
        %v1325 = vsub.s32 0, %v1324
        %v1326 = vrot.slane %v1285, %v1325
        %v1328 = vadd.f32 %v1320, %v1326
        %v1329 = vadd.f32 %v1321, %v1326
        %v1330 = vld [vmem:[%s740] sm:$0xf]
        %v1331 = vld [vmem:[%s740 + $0x4] sm:$0xf]
        %v1332 = vunpack.c.l.bf16 %v1330
        %v1333 = vunpack.c.l.bf16 %v1331
        %v1334 = vadd.f32 %v1328, %v1332
        %v1335 = vadd.f32 %v1329, %v1333
        %v1336 = vmul.f32 %v1334, 0.25
        %v1337 = vmul.f32 %v1335, 0.25
        %v1338 = vpack.c.bf16 %v1337, %v1336
        %v1339 = vld [vmem:[#allocation10] sm:$0xf]
        %v1340 = vld [vmem:[#allocation10 + $0x4] sm:$0xf]
        %v1341 = vld [vmem:[#allocation10 + $0x8] sm:$0xf]
        %v1342 = vld [vmem:[#allocation10 + $0xc] sm:$0xf]
        %v1343 = vld [vmem:[#allocation10 + $0x10] sm:$0xf]
        %v1344 = vld [vmem:[#allocation10 + $0x14] sm:$0xf]
        %v1345 = vld [vmem:[#allocation10 + $0x18] sm:$0xf]
        %v1346 = vld [vmem:[#allocation10 + $0x1c] sm:$0xf]
        %v1355 = vunpack.c.l.b16 %v1339
        %v1356 = vunpack.c.l.b16 %v1340
        %v1357 = vunpack.c.l.b16 %v1341
        %v1358 = vunpack.c.l.b16 %v1342
        %v1359 = vunpack.c.l.b16 %v1343
        %v1360 = vunpack.c.l.b16 %v1344
        %v1361 = vunpack.c.l.b16 %v1345
        %v1362 = vunpack.c.l.b16 %v1346
        %v1363 = vpack.c.b16 %v1356, %v1355
        %v1364 = vpack.c.b16 %v1358, %v1357
        %v1365 = vpack.c.b16 %v1360, %v1359
        %v1366 = vpack.c.b16 %v1362, %v1361
        %v1372 = vsel %vm1286, %v1338, 0
        %1374 = vmatprep.subr.bf16.mxu0 0
        %1375 = vmatpush1.bf16.msra.mxu0 0
        %1376 = vmatprep.subr.bf16.mxu0 0
        %1377 = vmatpush1.bf16.msra.mxu0 0
        %1378 = vmatprep.subr.bf16.mxu0 0
        %1379 = vmatpush1.bf16.msra.mxu0 0
        %1380 = vmatprep.subr.bf16.mxu0 0
        %1381 = vmatpush1.bf16.msra.mxu0 0
        %1382 = vmatprep.subr.bf16.mxu0 0
        %1383 = vmatpush1.bf16.msra.mxu0 %v1366
        %1384 = vmatprep.subr.bf16.mxu0 0
        %1385 = vmatpush1.bf16.msra.mxu0 %v1365
        %1386 = vmatprep.subr.bf16.mxu0 0
        %1387 = vmatpush1.bf16.msra.mxu0 %v1364
        %1388 = vmatprep.subr.bf16.mxu0 0
        %1389 = vmatpush1.bf16.msra.mxu0 %v1363
        %1390 = vmatprep.subr.bf16.mxu0 0
        %1391 = vmatpush2.bf16.msra.mxu0 0
        %1392 = vmatprep.subr.bf16.mxu0 0
        %1393 = vmatpush2.bf16.msra.mxu0 0
        %1394 = vmatprep.subr.bf16.mxu0 0
        %1395 = vmatpush2.bf16.msra.mxu0 0
        %1396 = vmatprep.subr.bf16.mxu0 0
        %1397 = vmatpush2.bf16.msra.mxu0 0
        %1398 = vmatprep.subr.bf16.mxu0 0
        %1399 = vmatpush2.bf16.msra.mxu0 0
        %1400 = vmatprep.subr.bf16.mxu0 0
        %1401 = vmatpush2.bf16.msra.mxu0 0
        %1402 = vmatprep.subr.bf16.mxu0 0
        %1403 = vmatpush2.bf16.msra.mxu0 0
        %1404 = vmatprep.subr.bf16.mxu0 0
        %1405 = vmatpush2.bf16.msra.mxu0 0
        %1406 = vmatprep.mubr.bf16.mxu0 0
        %1407 = vmatmul.mubr.bf16.gmra.mxu0 %v1372
        %v1408 = vpop.f32.mrf.mxu0
        %v1409 = vadd.f32 0.0, %v1408
        %v1410 = vpop.f32.mrf.mxu0
        %v1411 = vpop.f32.mrf.mxu0
        %v1412 = vadd.f32 0.0, %v1411
        %v1413 = vpop.f32.mrf.mxu0
        %1414 = vdwg.mxu0
        %v1415 = vpack.c.bf16 %v1412, %v1409
        %1417 = vrot.lane.b32.xlu0 %v1415, 112
        %v1418 = vpop.permute.xlu0 %1417
        %1419 = vrot.lane.b32.xlu0 %v1415, 96
        %v1420 = vpop.permute.xlu0 %1419
        %1421 = vrot.lane.b32.xlu0 %v1415, 80
        %v1422 = vpop.permute.xlu0 %1421
        %v1423 = vld [vmem:[#allocation2] sm:$0xf]
        %v1424 = vld [vmem:[#allocation2 + $0x4] sm:$0xf]
        %v1425 = vld [vmem:[#allocation2 + $0x8] sm:$0xf]
        %v1426 = vld [vmem:[#allocation2 + $0xc] sm:$0xf]
        %v1427 = vld [vmem:[#allocation2 + $0x10] sm:$0xf]
        %v1428 = vld [vmem:[#allocation2 + $0x14] sm:$0xf]
        %v1429 = vld [vmem:[#allocation2 + $0x18] sm:$0xf]
        %v1430 = vld [vmem:[#allocation2 + $0x1c] sm:$0xf]
        %v1431 = vld [vmem:[#allocation2 + $0x20] sm:$0xf]
        %v1432 = vld [vmem:[#allocation2 + $0x24] sm:$0xf]
        %v1433 = vld [vmem:[#allocation2 + $0x28] sm:$0xf]
        %v1434 = vld [vmem:[#allocation2 + $0x2c] sm:$0xf]
        %v1435 = vld [vmem:[#allocation2 + $0x30] sm:$0xf]
        %v1436 = vld [vmem:[#allocation2 + $0x34] sm:$0xf]
        %v1437 = vld [vmem:[#allocation2 + $0x38] sm:$0xf]
        %v1438 = vld [vmem:[#allocation2 + $0x3c] sm:$0xf]
        %v1439 = vld [vmem:[%s861] sm:$0xf]
        %v1440 = vld [vmem:[%s861 + $0x4] sm:$0xf]
        %v1441 = vld [vmem:[%s861 + $0x8] sm:$0xf]
        %v1442 = vld [vmem:[%s861 + $0xc] sm:$0xf]
        %v1443 = vld [vmem:[%s861 + $0x10] sm:$0xf]
        %v1444 = vld [vmem:[%s861 + $0x14] sm:$0xf]
        %v1445 = vld [vmem:[%s861 + $0x18] sm:$0xf]
        %v1446 = vld [vmem:[%s861 + $0x1c] sm:$0xf]
        %v1447 = vunpack.c.l.bf16 %v1439
        %v1448 = vunpack.c.l.bf16 %v1440
        %v1449 = vunpack.c.l.bf16 %v1441
        %v1450 = vunpack.c.l.bf16 %v1442
        %v1451 = vunpack.c.l.bf16 %v1443
        %v1452 = vunpack.c.l.bf16 %v1444
        %v1453 = vunpack.c.l.bf16 %v1445
        %v1454 = vunpack.c.l.bf16 %v1446
        %v1459 = vunpack.c.l.b16 %v1423
        %v1460 = vunpack.c.l.b16 %v1424
        %v1461 = vunpack.c.l.b16 %v1425
        %v1462 = vunpack.c.l.b16 %v1426
        %v1463 = vpack.c.b16 %v1460, %v1459
        %v1464 = vpack.c.b16 %v1462, %v1461
        %vm1465 = vcmask 130048
        %v1467 = vsel %vm1465, %v1415, 0
        %v1470 = vsel %vm1465, %v1463, 0
        %v1473 = vsel %vm1465, %v1464, 0
        %1475 = vmatprep.subr.bf16.mxu0 0
        %1476 = vmatpush1.bf16.xpose.msra.mxu0 0
        %1477 = vmatprep.subr.bf16.mxu0 0
        %1478 = vmatpush1.bf16.xpose.msra.mxu0 0
        %1479 = vmatprep.subr.bf16.mxu0 0
        %1480 = vmatpush1.bf16.xpose.msra.mxu0 0
        %1481 = vmatprep.subr.bf16.mxu0 0
        %1482 = vmatpush1.bf16.xpose.msra.mxu0 0
        %1483 = vmatprep.subr.bf16.mxu0 0
        %1484 = vmatpush1.bf16.xpose.msra.mxu0 0
        %1485 = vmatprep.subr.bf16.mxu0 0
        %1486 = vmatpush1.bf16.xpose.msra.mxu0 0
        %1487 = vmatprep.subr.bf16.mxu0 0
        %1488 = vmatpush1.bf16.xpose.msra.mxu0 %v1473
        %1489 = vmatprep.subr.bf16.mxu0 0
        %1490 = vmatpush1.bf16.xpose.msra.mxu0 %v1470
        %1491 = vmatprep.subr.bf16.mxu0 0
        %1492 = vmatpush2.bf16.xpose.msra.mxu0 0
        %1493 = vmatprep.subr.bf16.mxu0 0
        %1494 = vmatpush2.bf16.xpose.msra.mxu0 0
        %1495 = vmatprep.subr.bf16.mxu0 0
        %1496 = vmatpush2.bf16.xpose.msra.mxu0 0
        %1497 = vmatprep.subr.bf16.mxu0 0
        %1498 = vmatpush2.bf16.xpose.msra.mxu0 0
        %1499 = vmatprep.subr.bf16.mxu0 0
        %1500 = vmatpush2.bf16.xpose.msra.mxu0 0
        %1501 = vmatprep.subr.bf16.mxu0 0
        %1502 = vmatpush2.bf16.xpose.msra.mxu0 0
        %1503 = vmatprep.subr.bf16.mxu0 0
        %1504 = vmatpush2.bf16.xpose.msra.mxu0 0
        %1505 = vmatprep.subr.bf16.mxu0 0
        %1506 = vmatpush2.bf16.xpose.msra.mxu0 0
        %1507 = vmatprep.mubr.bf16.mxu0 0
        %1508 = vmatmul.mubr.bf16.gmra.mxu0 %v1467
        %v1509 = vpop.f32.mrf.mxu0
        %v1510 = vadd.f32 %v1447, %v1509
        %v1511 = vpop.f32.mrf.mxu0
        %v1512 = vpop.f32.mrf.mxu0
        %v1513 = vadd.f32 %v1448, %v1512
        %v1514 = vpop.f32.mrf.mxu0
        %1515 = vdwg.mxu0
        %v1520 = vunpack.c.l.b16 %v1427
        %v1521 = vunpack.c.l.b16 %v1428
        %v1522 = vunpack.c.l.b16 %v1429
        %v1523 = vunpack.c.l.b16 %v1430
        %v1524 = vpack.c.b16 %v1521, %v1520
        %v1525 = vpack.c.b16 %v1523, %v1522
        %v1527 = vsel %vm1465, %v1418, 0
        %v1530 = vsel %vm1465, %v1524, 0
        %v1533 = vsel %vm1465, %v1525, 0
        %1535 = vmatprep.subr.bf16.mxu0 0
        %1536 = vmatpush1.bf16.xpose.msra.mxu0 0
        %1537 = vmatprep.subr.bf16.mxu0 0
        %1538 = vmatpush1.bf16.xpose.msra.mxu0 0
        %1539 = vmatprep.subr.bf16.mxu0 0
        %1540 = vmatpush1.bf16.xpose.msra.mxu0 0
        %1541 = vmatprep.subr.bf16.mxu0 0
        %1542 = vmatpush1.bf16.xpose.msra.mxu0 0
        %1543 = vmatprep.subr.bf16.mxu0 0
        %1544 = vmatpush1.bf16.xpose.msra.mxu0 0
        %1545 = vmatprep.subr.bf16.mxu0 0
        %1546 = vmatpush1.bf16.xpose.msra.mxu0 0
        %1547 = vmatprep.subr.bf16.mxu0 0
        %1548 = vmatpush1.bf16.xpose.msra.mxu0 %v1533
        %1549 = vmatprep.subr.bf16.mxu0 0
        %1550 = vmatpush1.bf16.xpose.msra.mxu0 %v1530
        %1551 = vmatprep.subr.bf16.mxu0 0
        %1552 = vmatpush2.bf16.xpose.msra.mxu0 0
        %1553 = vmatprep.subr.bf16.mxu0 0
        %1554 = vmatpush2.bf16.xpose.msra.mxu0 0
        %1555 = vmatprep.subr.bf16.mxu0 0
        %1556 = vmatpush2.bf16.xpose.msra.mxu0 0
        %1557 = vmatprep.subr.bf16.mxu0 0
        %1558 = vmatpush2.bf16.xpose.msra.mxu0 0
        %1559 = vmatprep.subr.bf16.mxu0 0
        %1560 = vmatpush2.bf16.xpose.msra.mxu0 0
        %1561 = vmatprep.subr.bf16.mxu0 0
        %1562 = vmatpush2.bf16.xpose.msra.mxu0 0
        %1563 = vmatprep.subr.bf16.mxu0 0
        %1564 = vmatpush2.bf16.xpose.msra.mxu0 0
        %1565 = vmatprep.subr.bf16.mxu0 0
        %1566 = vmatpush2.bf16.xpose.msra.mxu0 0
        %1567 = vmatprep.mubr.bf16.mxu0 0
        %1568 = vmatmul.mubr.bf16.gmra.mxu0 %v1527
        %v1569 = vpop.f32.mrf.mxu0
        %v1570 = vadd.f32 %v1449, %v1569
        %v1571 = vpop.f32.mrf.mxu0
        %v1572 = vpop.f32.mrf.mxu0
        %v1573 = vadd.f32 %v1450, %v1572
        %v1574 = vpop.f32.mrf.mxu0
        %1575 = vdwg.mxu0
        %v1580 = vunpack.c.l.b16 %v1431
        %v1581 = vunpack.c.l.b16 %v1432
        %v1582 = vunpack.c.l.b16 %v1433
        %v1583 = vunpack.c.l.b16 %v1434
        %v1584 = vpack.c.b16 %v1581, %v1580
        %v1585 = vpack.c.b16 %v1583, %v1582
        %v1587 = vsel %vm1465, %v1420, 0
        %v1590 = vsel %vm1465, %v1584, 0
        %v1593 = vsel %vm1465, %v1585, 0
        %1595 = vmatprep.subr.bf16.mxu0 0
        %1596 = vmatpush1.bf16.xpose.msra.mxu0 0
        %1597 = vmatprep.subr.bf16.mxu0 0
        %1598 = vmatpush1.bf16.xpose.msra.mxu0 0
        %1599 = vmatprep.subr.bf16.mxu0 0
        %1600 = vmatpush1.bf16.xpose.msra.mxu0 0
        %1601 = vmatprep.subr.bf16.mxu0 0
        %1602 = vmatpush1.bf16.xpose.msra.mxu0 0
        %1603 = vmatprep.subr.bf16.mxu0 0
        %1604 = vmatpush1.bf16.xpose.msra.mxu0 0
        %1605 = vmatprep.subr.bf16.mxu0 0
        %1606 = vmatpush1.bf16.xpose.msra.mxu0 0
        %1607 = vmatprep.subr.bf16.mxu0 0
        %1608 = vmatpush1.bf16.xpose.msra.mxu0 %v1593
        %1609 = vmatprep.subr.bf16.mxu0 0
        %1610 = vmatpush1.bf16.xpose.msra.mxu0 %v1590
        %1611 = vmatprep.subr.bf16.mxu0 0
        %1612 = vmatpush2.bf16.xpose.msra.mxu0 0
        %1613 = vmatprep.subr.bf16.mxu0 0
        %1614 = vmatpush2.bf16.xpose.msra.mxu0 0
        %1615 = vmatprep.subr.bf16.mxu0 0
        %1616 = vmatpush2.bf16.xpose.msra.mxu0 0
        %1617 = vmatprep.subr.bf16.mxu0 0
        %1618 = vmatpush2.bf16.xpose.msra.mxu0 0
        %1619 = vmatprep.subr.bf16.mxu0 0
        %1620 = vmatpush2.bf16.xpose.msra.mxu0 0
        %1621 = vmatprep.subr.bf16.mxu0 0
        %1622 = vmatpush2.bf16.xpose.msra.mxu0 0
        %1623 = vmatprep.subr.bf16.mxu0 0
        %1624 = vmatpush2.bf16.xpose.msra.mxu0 0
        %1625 = vmatprep.subr.bf16.mxu0 0
        %1626 = vmatpush2.bf16.xpose.msra.mxu0 0
        %1627 = vmatprep.mubr.bf16.mxu0 0
        %1628 = vmatmul.mubr.bf16.gmra.mxu0 %v1587
        %v1629 = vpop.f32.mrf.mxu0
        %v1630 = vadd.f32 %v1451, %v1629
        %v1631 = vpop.f32.mrf.mxu0
        %v1632 = vpop.f32.mrf.mxu0
        %v1633 = vadd.f32 %v1452, %v1632
        %v1634 = vpop.f32.mrf.mxu0
        %1635 = vdwg.mxu0
        %v1640 = vunpack.c.l.b16 %v1435
        %v1641 = vunpack.c.l.b16 %v1436
        %v1642 = vunpack.c.l.b16 %v1437
        %v1643 = vunpack.c.l.b16 %v1438
        %v1644 = vpack.c.b16 %v1641, %v1640
        %v1645 = vpack.c.b16 %v1643, %v1642
        %v1647 = vsel %vm1465, %v1422, 0
        %v1650 = vsel %vm1465, %v1644, 0
        %v1653 = vsel %vm1465, %v1645, 0
        %1655 = vmatprep.subr.bf16.mxu0 0
        %1656 = vmatpush1.bf16.xpose.msra.mxu0 0
        %1657 = vmatprep.subr.bf16.mxu0 0
        %1658 = vmatpush1.bf16.xpose.msra.mxu0 0
        %1659 = vmatprep.subr.bf16.mxu0 0
        %1660 = vmatpush1.bf16.xpose.msra.mxu0 0
        %1661 = vmatprep.subr.bf16.mxu0 0
        %1662 = vmatpush1.bf16.xpose.msra.mxu0 0
        %1663 = vmatprep.subr.bf16.mxu0 0
        %1664 = vmatpush1.bf16.xpose.msra.mxu0 0
        %1665 = vmatprep.subr.bf16.mxu0 0
        %1666 = vmatpush1.bf16.xpose.msra.mxu0 0
        %1667 = vmatprep.subr.bf16.mxu0 0
        %1668 = vmatpush1.bf16.xpose.msra.mxu0 %v1653
        %1669 = vmatprep.subr.bf16.mxu0 0
        %1670 = vmatpush1.bf16.xpose.msra.mxu0 %v1650
        %1671 = vmatprep.subr.bf16.mxu0 0
        %1672 = vmatpush2.bf16.xpose.msra.mxu0 0
        %1673 = vmatprep.subr.bf16.mxu0 0
        %1674 = vmatpush2.bf16.xpose.msra.mxu0 0
        %1675 = vmatprep.subr.bf16.mxu0 0
        %1676 = vmatpush2.bf16.xpose.msra.mxu0 0
        %1677 = vmatprep.subr.bf16.mxu0 0
        %1678 = vmatpush2.bf16.xpose.msra.mxu0 0
        %1679 = vmatprep.subr.bf16.mxu0 0
        %1680 = vmatpush2.bf16.xpose.msra.mxu0 0
        %1681 = vmatprep.subr.bf16.mxu0 0
        %1682 = vmatpush2.bf16.xpose.msra.mxu0 0
        %1683 = vmatprep.subr.bf16.mxu0 0
        %1684 = vmatpush2.bf16.xpose.msra.mxu0 0
        %1685 = vmatprep.subr.bf16.mxu0 0
        %1686 = vmatpush2.bf16.xpose.msra.mxu0 0
        %1687 = vmatprep.mubr.bf16.mxu0 0
        %1688 = vmatmul.mubr.bf16.gmra.mxu0 %v1647
        %v1689 = vpop.f32.mrf.mxu0
        %v1690 = vadd.f32 %v1453, %v1689
        %v1691 = vpop.f32.mrf.mxu0
        %v1692 = vpop.f32.mrf.mxu0
        %v1693 = vadd.f32 %v1454, %v1692
        %v1694 = vpop.f32.mrf.mxu0
        %1695 = vdwg.mxu0
        %vm1696 = vcmask 261120
        %v1697 = vsel %vm1696, %v1510, -inf
        %1698 = vmax.xlane.f32.xlu0 %v1697
        %v1699 = vpop.xlane.xlu0 %1698
        %v1700 = vsel %vm1696, %v1513, -inf
        %1701 = vmax.xlane.f32.xlu0 %v1700
        %v1702 = vpop.xlane.xlu0 %1701
        %v1703 = vsel %vm1696, %v1570, -inf
        %1704 = vmax.xlane.f32.xlu0 %v1703
        %v1705 = vpop.xlane.xlu0 %1704
        %v1706 = vsel %vm1696, %v1573, -inf
        %1707 = vmax.xlane.f32.xlu0 %v1706
        %v1708 = vpop.xlane.xlu0 %1707
        %v1709 = vsel %vm1696, %v1630, -inf
        %1710 = vmax.xlane.f32.xlu0 %v1709
        %v1711 = vpop.xlane.xlu0 %1710
        %v1712 = vsel %vm1696, %v1633, -inf
        %1713 = vmax.xlane.f32.xlu0 %v1712
        %v1714 = vpop.xlane.xlu0 %1713
        %v1715 = vsel %vm1696, %v1690, -inf
        %1716 = vmax.xlane.f32.xlu0 %v1715
        %v1717 = vpop.xlane.xlu0 %1716
        %v1718 = vsel %vm1696, %v1693, -inf
        %1719 = vmax.xlane.f32.xlu0 %v1718
        %v1720 = vpop.xlane.xlu0 %1719
        %v1721 = vsub.f32 %v1510, %v1699
        %v1722 = vsub.f32 %v1513, %v1702
        %v1723 = vsub.f32 %v1570, %v1705
        %v1724 = vsub.f32 %v1573, %v1708
        %v1725 = vsub.f32 %v1630, %v1711
        %v1726 = vsub.f32 %v1633, %v1714
        %v1727 = vsub.f32 %v1690, %v1717
        %v1728 = vsub.f32 %v1693, %v1720
        %v1729 = vmul.f32 %v1721, 1.442695
        %v1730 = vpow.pop %v1729
        %v1731 = vmul.f32 %v1722, 1.442695
        %v1732 = vpow.pop %v1731
        %v1733 = vmul.f32 %v1723, 1.442695
        %v1734 = vpow.pop %v1733
        %v1735 = vmul.f32 %v1724, 1.442695
        %v1736 = vpow.pop %v1735
        %v1737 = vmul.f32 %v1725, 1.442695
        %v1738 = vpow.pop %v1737
        %v1739 = vmul.f32 %v1726, 1.442695
        %v1740 = vpow.pop %v1739
        %v1741 = vmul.f32 %v1727, 1.442695
        %v1742 = vpow.pop %v1741
        %v1743 = vmul.f32 %v1728, 1.442695
        %v1744 = vpow.pop %v1743
        %v1745 = vsel %vm1696, %v1730, 0.0
        %1746 = vadd.xlane.f32.xlu0 %v1745
        %v1747 = vpop.xlane.xlu0 %1746
        %v1748 = vsel %vm1696, %v1732, 0.0
        %1749 = vadd.xlane.f32.xlu0 %v1748
        %v1750 = vpop.xlane.xlu0 %1749
        %v1751 = vsel %vm1696, %v1734, 0.0
        %1752 = vadd.xlane.f32.xlu0 %v1751
        %v1753 = vpop.xlane.xlu0 %1752
        %v1754 = vsel %vm1696, %v1736, 0.0
        %1755 = vadd.xlane.f32.xlu0 %v1754
        %v1756 = vpop.xlane.xlu0 %1755
        %v1757 = vsel %vm1696, %v1738, 0.0
        %1758 = vadd.xlane.f32.xlu0 %v1757
        %v1759 = vpop.xlane.xlu0 %1758
        %v1760 = vsel %vm1696, %v1740, 0.0
        %1761 = vadd.xlane.f32.xlu0 %v1760
        %v1762 = vpop.xlane.xlu0 %1761
        %v1763 = vsel %vm1696, %v1742, 0.0
        %1764 = vadd.xlane.f32.xlu0 %v1763
        %v1765 = vpop.xlane.xlu0 %1764
        %v1766 = vsel %vm1696, %v1744, 0.0
        %1767 = vadd.xlane.f32.xlu0 %v1766
        %v1768 = vpop.xlane.xlu0 %1767
        %v1769 = vpack.c.bf16 %v1732, %v1730
        %v1770 = vpack.c.bf16 %v1736, %v1734
        %v1771 = vpack.c.bf16 %v1740, %v1738
        %v1772 = vpack.c.bf16 %v1744, %v1742
        %v1773 = vld [vmem:[#allocation3] sm:$0xf]
        %v1774 = vld [vmem:[#allocation3 + $0x4] sm:$0xf]
        %v1775 = vld [vmem:[#allocation3 + $0x8] sm:$0xf]
        %v1776 = vld [vmem:[#allocation3 + $0xc] sm:$0xf]
        %v1777 = vld [vmem:[#allocation3 + $0x10] sm:$0xf]
        %v1778 = vld [vmem:[#allocation3 + $0x14] sm:$0xf]
        %v1779 = vld [vmem:[#allocation3 + $0x18] sm:$0xf]
        %v1780 = vld [vmem:[#allocation3 + $0x1c] sm:$0xf]
        %v1781 = vld [vmem:[#allocation3 + $0x20] sm:$0xf]
        %v1782 = vld [vmem:[#allocation3 + $0x24] sm:$0xf]
        %v1783 = vld [vmem:[#allocation3 + $0x28] sm:$0xf]
        %v1784 = vld [vmem:[#allocation3 + $0x2c] sm:$0xf]
        %v1785 = vld [vmem:[#allocation3 + $0x30] sm:$0xf]
        %v1786 = vld [vmem:[#allocation3 + $0x34] sm:$0xf]
        %v1787 = vld [vmem:[#allocation3 + $0x38] sm:$0xf]
        %v1788 = vld [vmem:[#allocation3 + $0x3c] sm:$0xf]
        %v1793 = vunpack.c.l.b16 %v1773
        %v1794 = vunpack.c.l.b16 %v1774
        %v1795 = vunpack.c.l.b16 %v1775
        %v1796 = vunpack.c.l.b16 %v1776
        %v1797 = vpack.c.b16 %v1794, %v1793
        %v1798 = vpack.c.b16 %v1796, %v1795
        %v1802 = vsel %vm1696, %v1769, 0
        %1804 = vmatprep.subr.bf16.mxu0 0
        %1805 = vmatpush1.bf16.msra.mxu0 0
        %1806 = vmatprep.subr.bf16.mxu0 0
        %1807 = vmatpush1.bf16.msra.mxu0 0
        %1808 = vmatprep.subr.bf16.mxu0 0
        %1809 = vmatpush1.bf16.msra.mxu0 0
        %1810 = vmatprep.subr.bf16.mxu0 0
        %1811 = vmatpush1.bf16.msra.mxu0 0
        %1812 = vmatprep.subr.bf16.mxu0 0
        %1813 = vmatpush1.bf16.msra.mxu0 0
        %1814 = vmatprep.subr.bf16.mxu0 0
        %1815 = vmatpush1.bf16.msra.mxu0 0
        %1816 = vmatprep.subr.bf16.mxu0 0
        %1817 = vmatpush1.bf16.msra.mxu0 %v1798
        %1818 = vmatprep.subr.bf16.mxu0 0
        %1819 = vmatpush1.bf16.msra.mxu0 %v1797
        %1820 = vmatprep.subr.bf16.mxu0 0
        %1821 = vmatpush2.bf16.msra.mxu0 0
        %1822 = vmatprep.subr.bf16.mxu0 0
        %1823 = vmatpush2.bf16.msra.mxu0 0
        %1824 = vmatprep.subr.bf16.mxu0 0
        %1825 = vmatpush2.bf16.msra.mxu0 0
        %1826 = vmatprep.subr.bf16.mxu0 0
        %1827 = vmatpush2.bf16.msra.mxu0 0
        %1828 = vmatprep.subr.bf16.mxu0 0
        %1829 = vmatpush2.bf16.msra.mxu0 0
        %1830 = vmatprep.subr.bf16.mxu0 0
        %1831 = vmatpush2.bf16.msra.mxu0 0
        %1832 = vmatprep.subr.bf16.mxu0 0
        %1833 = vmatpush2.bf16.msra.mxu0 0
        %1834 = vmatprep.subr.bf16.mxu0 0
        %1835 = vmatpush2.bf16.msra.mxu0 0
        %1836 = vmatprep.mubr.bf16.mxu0 0
        %1837 = vmatmul.mubr.bf16.gmra.mxu0 %v1802
        %v1838 = vpop.f32.mrf.mxu0
        %v1839 = vadd.f32 0.0, %v1838
        %v1840 = vpop.f32.mrf.mxu0
        %v1841 = vpop.f32.mrf.mxu0
        %v1842 = vadd.f32 0.0, %v1841
        %v1843 = vpop.f32.mrf.mxu0
        %1844 = vdwg.mxu0
        %v1849 = vunpack.c.l.b16 %v1777
        %v1850 = vunpack.c.l.b16 %v1778
        %v1851 = vunpack.c.l.b16 %v1779
        %v1852 = vunpack.c.l.b16 %v1780
        %v1853 = vpack.c.b16 %v1850, %v1849
        %v1854 = vpack.c.b16 %v1852, %v1851
        %v1858 = vsel %vm1696, %v1770, 0
        %1860 = vmatprep.subr.bf16.mxu0 0
        %1861 = vmatpush1.bf16.msra.mxu0 0
        %1862 = vmatprep.subr.bf16.mxu0 0
        %1863 = vmatpush1.bf16.msra.mxu0 0
        %1864 = vmatprep.subr.bf16.mxu0 0
        %1865 = vmatpush1.bf16.msra.mxu0 0
        %1866 = vmatprep.subr.bf16.mxu0 0
        %1867 = vmatpush1.bf16.msra.mxu0 0
        %1868 = vmatprep.subr.bf16.mxu0 0
        %1869 = vmatpush1.bf16.msra.mxu0 0
        %1870 = vmatprep.subr.bf16.mxu0 0
        %1871 = vmatpush1.bf16.msra.mxu0 0
        %1872 = vmatprep.subr.bf16.mxu0 0
        %1873 = vmatpush1.bf16.msra.mxu0 %v1854
        %1874 = vmatprep.subr.bf16.mxu0 0
        %1875 = vmatpush1.bf16.msra.mxu0 %v1853
        %1876 = vmatprep.subr.bf16.mxu0 0
        %1877 = vmatpush2.bf16.msra.mxu0 0
        %1878 = vmatprep.subr.bf16.mxu0 0
        %1879 = vmatpush2.bf16.msra.mxu0 0
        %1880 = vmatprep.subr.bf16.mxu0 0
        %1881 = vmatpush2.bf16.msra.mxu0 0
        %1882 = vmatprep.subr.bf16.mxu0 0
        %1883 = vmatpush2.bf16.msra.mxu0 0
        %1884 = vmatprep.subr.bf16.mxu0 0
        %1885 = vmatpush2.bf16.msra.mxu0 0
        %1886 = vmatprep.subr.bf16.mxu0 0
        %1887 = vmatpush2.bf16.msra.mxu0 0
        %1888 = vmatprep.subr.bf16.mxu0 0
        %1889 = vmatpush2.bf16.msra.mxu0 0
        %1890 = vmatprep.subr.bf16.mxu0 0
        %1891 = vmatpush2.bf16.msra.mxu0 0
        %1892 = vmatprep.mubr.bf16.mxu0 0
        %1893 = vmatmul.mubr.bf16.gmra.mxu0 %v1858
        %v1894 = vpop.f32.mrf.mxu0
        %v1895 = vadd.f32 0.0, %v1894
        %v1896 = vpop.f32.mrf.mxu0
        %v1897 = vpop.f32.mrf.mxu0
        %v1898 = vadd.f32 0.0, %v1897
        %v1899 = vpop.f32.mrf.mxu0
        %1900 = vdwg.mxu0
        %v1905 = vunpack.c.l.b16 %v1781
        %v1906 = vunpack.c.l.b16 %v1782
        %v1907 = vunpack.c.l.b16 %v1783
        %v1908 = vunpack.c.l.b16 %v1784
        %v1909 = vpack.c.b16 %v1906, %v1905
        %v1910 = vpack.c.b16 %v1908, %v1907
        %v1914 = vsel %vm1696, %v1771, 0
        %1916 = vmatprep.subr.bf16.mxu0 0
        %1917 = vmatpush1.bf16.msra.mxu0 0
        %1918 = vmatprep.subr.bf16.mxu0 0
        %1919 = vmatpush1.bf16.msra.mxu0 0
        %1920 = vmatprep.subr.bf16.mxu0 0
        %1921 = vmatpush1.bf16.msra.mxu0 0
        %1922 = vmatprep.subr.bf16.mxu0 0
        %1923 = vmatpush1.bf16.msra.mxu0 0
        %1924 = vmatprep.subr.bf16.mxu0 0
        %1925 = vmatpush1.bf16.msra.mxu0 0
        %1926 = vmatprep.subr.bf16.mxu0 0
        %1927 = vmatpush1.bf16.msra.mxu0 0
        %1928 = vmatprep.subr.bf16.mxu0 0
        %1929 = vmatpush1.bf16.msra.mxu0 %v1910
        %1930 = vmatprep.subr.bf16.mxu0 0
        %1931 = vmatpush1.bf16.msra.mxu0 %v1909
        %1932 = vmatprep.subr.bf16.mxu0 0
        %1933 = vmatpush2.bf16.msra.mxu0 0
        %1934 = vmatprep.subr.bf16.mxu0 0
        %1935 = vmatpush2.bf16.msra.mxu0 0
        %1936 = vmatprep.subr.bf16.mxu0 0
        %1937 = vmatpush2.bf16.msra.mxu0 0
        %1938 = vmatprep.subr.bf16.mxu0 0
        %1939 = vmatpush2.bf16.msra.mxu0 0
        %1940 = vmatprep.subr.bf16.mxu0 0
        %1941 = vmatpush2.bf16.msra.mxu0 0
        %1942 = vmatprep.subr.bf16.mxu0 0
        %1943 = vmatpush2.bf16.msra.mxu0 0
        %1944 = vmatprep.subr.bf16.mxu0 0
        %1945 = vmatpush2.bf16.msra.mxu0 0
        %1946 = vmatprep.subr.bf16.mxu0 0
        %1947 = vmatpush2.bf16.msra.mxu0 0
        %1948 = vmatprep.mubr.bf16.mxu0 0
        %1949 = vmatmul.mubr.bf16.gmra.mxu0 %v1914
        %v1950 = vpop.f32.mrf.mxu0
        %v1951 = vadd.f32 0.0, %v1950
        %v1952 = vpop.f32.mrf.mxu0
        %v1953 = vpop.f32.mrf.mxu0
        %v1954 = vadd.f32 0.0, %v1953
        %v1955 = vpop.f32.mrf.mxu0
        %1956 = vdwg.mxu0
        %v1961 = vunpack.c.l.b16 %v1785
        %v1962 = vunpack.c.l.b16 %v1786
        %v1963 = vunpack.c.l.b16 %v1787
        %v1964 = vunpack.c.l.b16 %v1788
        %v1965 = vpack.c.b16 %v1962, %v1961
        %v1966 = vpack.c.b16 %v1964, %v1963
        %v1970 = vsel %vm1696, %v1772, 0
        %1972 = vmatprep.subr.bf16.mxu0 0
        %1973 = vmatpush1.bf16.msra.mxu0 0
        %1974 = vmatprep.subr.bf16.mxu0 0
        %1975 = vmatpush1.bf16.msra.mxu0 0
        %1976 = vmatprep.subr.bf16.mxu0 0
        %1977 = vmatpush1.bf16.msra.mxu0 0
        %1978 = vmatprep.subr.bf16.mxu0 0
        %1979 = vmatpush1.bf16.msra.mxu0 0
        %1980 = vmatprep.subr.bf16.mxu0 0
        %1981 = vmatpush1.bf16.msra.mxu0 0
        %1982 = vmatprep.subr.bf16.mxu0 0
        %1983 = vmatpush1.bf16.msra.mxu0 0
        %1984 = vmatprep.subr.bf16.mxu0 0
        %1985 = vmatpush1.bf16.msra.mxu0 %v1966
        %1986 = vmatprep.subr.bf16.mxu0 0
        %1987 = vmatpush1.bf16.msra.mxu0 %v1965
        %1988 = vmatprep.subr.bf16.mxu0 0
        %1989 = vmatpush2.bf16.msra.mxu0 0
        %1990 = vmatprep.subr.bf16.mxu0 0
        %1991 = vmatpush2.bf16.msra.mxu0 0
        %1992 = vmatprep.subr.bf16.mxu0 0
        %1993 = vmatpush2.bf16.msra.mxu0 0
        %1994 = vmatprep.subr.bf16.mxu0 0
        %1995 = vmatpush2.bf16.msra.mxu0 0
        %1996 = vmatprep.subr.bf16.mxu0 0
        %1997 = vmatpush2.bf16.msra.mxu0 0
        %1998 = vmatprep.subr.bf16.mxu0 0
        %1999 = vmatpush2.bf16.msra.mxu0 0
        %2000 = vmatprep.subr.bf16.mxu0 0
        %2001 = vmatpush2.bf16.msra.mxu0 0
        %2002 = vmatprep.subr.bf16.mxu0 0
        %2003 = vmatpush2.bf16.msra.mxu0 0
        %2004 = vmatprep.mubr.bf16.mxu0 0
        %2005 = vmatmul.mubr.bf16.gmra.mxu0 %v1970
        %v2006 = vpop.f32.mrf.mxu0
        %v2007 = vadd.f32 0.0, %v2006
        %v2008 = vpop.f32.mrf.mxu0
        %v2009 = vpop.f32.mrf.mxu0
        %v2010 = vadd.f32 0.0, %v2009
        %v2011 = vpop.f32.mrf.mxu0
        %2012 = vdwg.mxu0
        %v2013 = vrcp.pop %v1747
        %v2014 = vrcp.pop %v1750
        %v2015 = vrcp.pop %v1753
        %v2016 = vrcp.pop %v1756
        %v2017 = vrcp.pop %v1759
        %v2018 = vrcp.pop %v1762
        %v2019 = vrcp.pop %v1765
        %v2020 = vrcp.pop %v1768
        %v2021 = vmul.f32 %v1839, %v2013
        %v2022 = vmul.f32 %v1842, %v2014
        %v2023 = vmul.f32 %v1895, %v2015
        %v2024 = vmul.f32 %v1898, %v2016
        %v2025 = vmul.f32 %v1951, %v2017
        %v2026 = vmul.f32 %v1954, %v2018
        %v2027 = vmul.f32 %v2007, %v2019
        %v2028 = vmul.f32 %v2010, %v2020
        %v2029 = vpack.c.bf16 %v2022, %v2021
        %v2030 = vpack.c.bf16 %v2024, %v2023
        %v2031 = vpack.c.bf16 %v2026, %v2025
        %v2032 = vpack.c.bf16 %v2028, %v2027
        %2034 = vrot.lane.b32.xlu0 %v2030, 16
        %v2035 = vpop.permute.xlu0 %2034
        %2037 = vrot.lane.b32.xlu0 %v2031, 32
        %v2038 = vpop.permute.xlu0 %2037
        %2040 = vrot.lane.b32.xlu0 %v2032, 48
        %v2041 = vpop.permute.xlu0 %2040
        %v2044 = vsel %vm1465, %v2029, %v2035
        %v2046 = vsel %vm1696, %v2044, %v2038
        %vm2047 = vcmask 392192
        %v2049 = vsel %vm2047, %v2046, %v2041
        %v2050 = vld [vmem:[#allocation15] sm:$0xf]
        %v2051 = vld [vmem:[#allocation15 + $0x4] sm:$0xf]
        %v2052 = vld [vmem:[#allocation15 + $0x8] sm:$0xf]
        %v2053 = vld [vmem:[#allocation15 + $0xc] sm:$0xf]
        %v2054 = vld [vmem:[#allocation15 + $0x10] sm:$0xf]
        %v2055 = vld [vmem:[#allocation15 + $0x14] sm:$0xf]
        %v2056 = vld [vmem:[#allocation15 + $0x18] sm:$0xf]
        %v2057 = vld [vmem:[#allocation15 + $0x1c] sm:$0xf]
        %v2058 = vld [vmem:[%s13] sm:$0x1]
        %v2060 = vlaneseq
        %v2061 = vshrl.u32 %v2060, 7
        %v2062 = vsub.s32 0, %v2061
        %v2063 = vrot.slane %v2058, %v2062
        %v2073 = vunpack.c.l.b16 %v2050
        %v2074 = vunpack.c.l.b16 %v2051
        %v2075 = vunpack.c.l.b16 %v2052
        %v2076 = vunpack.c.l.b16 %v2053
        %v2077 = vunpack.c.l.b16 %v2054
        %v2078 = vunpack.c.l.b16 %v2055
        %v2079 = vunpack.c.l.b16 %v2056
        %v2080 = vunpack.c.l.b16 %v2057
        %v2081 = vpack.c.b16 %v2074, %v2073
        %v2082 = vpack.c.b16 %v2076, %v2075
        %v2083 = vpack.c.b16 %v2078, %v2077
        %v2084 = vpack.c.b16 %v2080, %v2079
        %v2089 = vsel %vm1286, %v2049, 0
        %2091 = vmatprep.subr.bf16.mxu0 0
        %2092 = vmatpush1.bf16.msra.mxu0 0
        %2093 = vmatprep.subr.bf16.mxu0 0
        %2094 = vmatpush1.bf16.msra.mxu0 0
        %2095 = vmatprep.subr.bf16.mxu0 0
        %2096 = vmatpush1.bf16.msra.mxu0 0
        %2097 = vmatprep.subr.bf16.mxu0 0
        %2098 = vmatpush1.bf16.msra.mxu0 0
        %2099 = vmatprep.subr.bf16.mxu0 0
        %2100 = vmatpush1.bf16.msra.mxu0 %v2084
        %2101 = vmatprep.subr.bf16.mxu0 0
        %2102 = vmatpush1.bf16.msra.mxu0 %v2083
        %2103 = vmatprep.subr.bf16.mxu0 0
        %2104 = vmatpush1.bf16.msra.mxu0 %v2082
        %2105 = vmatprep.subr.bf16.mxu0 0
        %2106 = vmatpush1.bf16.msra.mxu0 %v2081
        %2107 = vmatprep.subr.bf16.mxu0 0
        %2108 = vmatpush2.bf16.msra.mxu0 0
        %2109 = vmatprep.subr.bf16.mxu0 0
        %2110 = vmatpush2.bf16.msra.mxu0 0
        %2111 = vmatprep.subr.bf16.mxu0 0
        %2112 = vmatpush2.bf16.msra.mxu0 0
        %2113 = vmatprep.subr.bf16.mxu0 0
        %2114 = vmatpush2.bf16.msra.mxu0 0
        %2115 = vmatprep.subr.bf16.mxu0 0
        %2116 = vmatpush2.bf16.msra.mxu0 0
        %2117 = vmatprep.subr.bf16.mxu0 0
        %2118 = vmatpush2.bf16.msra.mxu0 0
        %2119 = vmatprep.subr.bf16.mxu0 0
        %2120 = vmatpush2.bf16.msra.mxu0 0
        %2121 = vmatprep.subr.bf16.mxu0 0
        %2122 = vmatpush2.bf16.msra.mxu0 0
        %2123 = vmatprep.mubr.bf16.mxu0 0
        %2124 = vmatmul.mubr.bf16.gmra.mxu0 %v2089
        %v2125 = vpop.f32.mrf.mxu0
        %v2126 = vadd.f32 %v2063, %v2125
        %v2127 = vpop.f32.mrf.mxu0
        %v2128 = vpop.f32.mrf.mxu0
        %v2129 = vadd.f32 %v2063, %v2128
        %v2130 = vpop.f32.mrf.mxu0
        %2131 = vdwg.mxu0
        %v2132 = vadd.f32 %v1282, %v2126
        %v2133 = vadd.f32 %v1283, %v2129
        %v2134 = vld [vmem:[%s14] sm:$0x1]
        %v2135 = vld [vmem:[%s15] sm:$0x1]
        %v2136 = vsel %vm1286, %v2132, 0.0
        %2137 = vadd.xlane.f32.xlu0 %v2136
        %v2138 = vpop.xlane.xlu0 %2137
        %v2139 = vsel %vm1286, %v2133, 0.0
        %2140 = vadd.xlane.f32.xlu0 %v2139
        %v2141 = vpop.xlane.xlu0 %2140
        %v2142 = vmul.f32 %v2138, %v1293
        %v2143 = vmul.f32 %v2141, %v1293
        %v2144 = vsub.f32 %v2132, %v2142
        %v2145 = vsub.f32 %v2133, %v2143
        %v2146 = vmul.f32 %v2144, %v2144
        %v2147 = vmul.f32 %v2145, %v2145
        %v2148 = vsel %vm1286, %v2146, 0.0
        %2149 = vadd.xlane.f32.xlu0 %v2148
        %v2150 = vpop.xlane.xlu0 %2149
        %v2151 = vsel %vm1286, %v2147, 0.0
        %2152 = vadd.xlane.f32.xlu0 %v2151
        %v2153 = vpop.xlane.xlu0 %2152
        %v2154 = vmul.f32 %v2150, %v1293
        %v2155 = vmul.f32 %v2153, %v1293
        %v2156 = vadd.f32 %v2154, 1e-05
        %v2157 = vadd.f32 %v2155, 1e-05
        %v2158 = vrsqrt.pop %v2156
        %v2159 = vrsqrt.pop %v2157
        %v2160 = vmul.f32 %v2144, %v2158
        %v2161 = vmul.f32 %v2145, %v2159
        %v2163 = vlaneseq
        %v2164 = vshrl.u32 %v2163, 7
        %v2165 = vsub.s32 0, %v2164
        %v2166 = vrot.slane %v2134, %v2165
        %v2168 = vmul.f32 %v2160, %v2166
        %v2169 = vmul.f32 %v2161, %v2166
        %v2171 = vlaneseq
        %v2172 = vshrl.u32 %v2171, 7
        %v2173 = vsub.s32 0, %v2172
        %v2174 = vrot.slane %v2135, %v2173
        %v2176 = vadd.f32 %v2168, %v2174
        %v2177 = vadd.f32 %v2169, %v2174
        %v2178 = vpack.c.bf16 %v2177, %v2176
        %v2179 = vld [vmem:[%s16] sm:$0xff]
        %v2180 = vld [vmem:[%s16 + $0x8] sm:$0xff]
        %v2181 = vld [vmem:[%s16 + $0x10] sm:$0xff]
        %v2182 = vld [vmem:[%s16 + $0x18] sm:$0xff]
        %v2183 = vld [vmem:[%s16 + $0x20] sm:$0xff]
        %v2184 = vld [vmem:[%s16 + $0x28] sm:$0xff]
        %v2185 = vld [vmem:[%s16 + $0x30] sm:$0xff]
        %v2186 = vld [vmem:[%s16 + $0x38] sm:$0xff]
        %v2187 = vld [vmem:[%s17] sm:$0x3]
        %v2189 = vlaneseq
        %v2190 = vshrl.u32 %v2189, 7
        %v2191 = vsub.s32 0, %v2190
        %v2192 = vrot.slane %v2187, %v2191
        %v2193 = vlaneseq
        %v2194 = vshrl.u32 %v2193, 7
        %v2195 = vsub.s32 1, %v2194
        %v2196 = vrot.slane %v2187, %v2195
        %v2207 = vunpack.c.l.b16 %v2179
        %v2208 = vunpack.c.h.b16 %v2179
        %v2209 = vunpack.c.l.b16 %v2180
        %v2210 = vunpack.c.h.b16 %v2180
        %v2211 = vunpack.c.l.b16 %v2181
        %v2212 = vunpack.c.h.b16 %v2181
        %v2213 = vunpack.c.l.b16 %v2182
        %v2214 = vunpack.c.h.b16 %v2182
        %v2215 = vunpack.c.l.b16 %v2183
        %v2216 = vunpack.c.h.b16 %v2183
        %v2217 = vunpack.c.l.b16 %v2184
        %v2218 = vunpack.c.h.b16 %v2184
        %v2219 = vunpack.c.l.b16 %v2185
        %v2220 = vunpack.c.h.b16 %v2185
        %v2221 = vunpack.c.l.b16 %v2186
        %v2222 = vunpack.c.h.b16 %v2186
        %v2223 = vpack.c.b16 %v2209, %v2207
        %v2224 = vpack.c.b16 %v2210, %v2208
        %v2225 = vpack.c.b16 %v2213, %v2211
        %v2226 = vpack.c.b16 %v2214, %v2212
        %v2227 = vpack.c.b16 %v2217, %v2215
        %v2228 = vpack.c.b16 %v2218, %v2216
        %v2229 = vpack.c.b16 %v2221, %v2219
        %v2230 = vpack.c.b16 %v2222, %v2220
        %v2240 = vsel %vm1286, %v2178, 0
        %2242 = vmatprep.subr.bf16.mxu0 0
        %2243 = vmatpush1.bf16.msra.mxu0 0
        %2244 = vmatprep.subr.bf16.mxu0 0
        %2245 = vmatpush1.bf16.msra.mxu0 0
        %2246 = vmatprep.subr.bf16.mxu0 0
        %2247 = vmatpush1.bf16.msra.mxu0 0
        %2248 = vmatprep.subr.bf16.mxu0 0
        %2249 = vmatpush1.bf16.msra.mxu0 0
        %2250 = vmatprep.subr.bf16.mxu0 %v2230
        %2251 = vmatpush1.bf16.msra.mxu0 %v2229
        %2252 = vmatprep.subr.bf16.mxu0 %v2228
        %2253 = vmatpush1.bf16.msra.mxu0 %v2227
        %2254 = vmatprep.subr.bf16.mxu0 %v2226
        %2255 = vmatpush1.bf16.msra.mxu0 %v2225
        %2256 = vmatprep.subr.bf16.mxu0 %v2224
        %2257 = vmatpush1.bf16.msra.mxu0 %v2223
        %2258 = vmatprep.subr.bf16.mxu0 0
        %2259 = vmatpush2.bf16.msra.mxu0 0
        %2260 = vmatprep.subr.bf16.mxu0 0
        %2261 = vmatpush2.bf16.msra.mxu0 0
        %2262 = vmatprep.subr.bf16.mxu0 0
        %2263 = vmatpush2.bf16.msra.mxu0 0
        %2264 = vmatprep.subr.bf16.mxu0 0
        %2265 = vmatpush2.bf16.msra.mxu0 0
        %2266 = vmatprep.subr.bf16.mxu0 0
        %2267 = vmatpush2.bf16.msra.mxu0 0
        %2268 = vmatprep.subr.bf16.mxu0 0
        %2269 = vmatpush2.bf16.msra.mxu0 0
        %2270 = vmatprep.subr.bf16.mxu0 0
        %2271 = vmatpush2.bf16.msra.mxu0 0
        %2272 = vmatprep.subr.bf16.mxu0 0
        %2273 = vmatpush2.bf16.msra.mxu0 0
        %2274 = vmatprep.mubr.bf16.mxu0 0
        %2275 = vmatmul.mubr.bf16.gmra.mxu0 %v2240
        %v2276 = vpop.f32.mrf.mxu0
        %v2277 = vadd.f32 %v2192, %v2276
        %v2278 = vpop.f32.mrf.mxu0
        %v2279 = vadd.f32 %v2196, %v2278
        %v2280 = vpop.f32.mrf.mxu0
        %v2281 = vadd.f32 %v2192, %v2280
        %v2282 = vpop.f32.mrf.mxu0
        %v2283 = vadd.f32 %v2196, %v2282
        %2284 = vdwg.mxu0
        %v2285 = vmul.f32 %v2277, %v2277
        %v2286 = vmul.f32 %v2279, %v2279
        %v2287 = vmul.f32 %v2281, %v2281
        %v2288 = vmul.f32 %v2283, %v2283
        %v2289 = vmul.f32 %v2277, %v2285
        %v2290 = vmul.f32 %v2279, %v2286
        %v2291 = vmul.f32 %v2281, %v2287
        %v2292 = vmul.f32 %v2283, %v2288
        %v2293 = vmul.f32 %v2289, 0.044715
        %v2294 = vmul.f32 %v2290, 0.044715
        %v2295 = vmul.f32 %v2291, 0.044715
        %v2296 = vmul.f32 %v2292, 0.044715
        %v2297 = vadd.f32 %v2277, %v2293
        %v2298 = vadd.f32 %v2279, %v2294
        %v2299 = vadd.f32 %v2281, %v2295
        %v2300 = vadd.f32 %v2283, %v2296
        %v2301 = vmul.f32 %v2297, 0.7978846
        %v2302 = vmul.f32 %v2298, 0.7978846
        %v2303 = vmul.f32 %v2299, 0.7978846
        %v2304 = vmul.f32 %v2300, 0.7978846
        %v2305 = vtanh.pop %v2301
        %v2306 = vtanh.pop %v2302
        %v2307 = vtanh.pop %v2303
        %v2308 = vtanh.pop %v2304
        %v2309 = vadd.f32 %v2305, 1.0
        %v2310 = vadd.f32 %v2306, 1.0
        %v2311 = vadd.f32 %v2307, 1.0
        %v2312 = vadd.f32 %v2308, 1.0
        %v2313 = vmul.f32 %v2309, 0.5
        %v2314 = vmul.f32 %v2310, 0.5
        %v2315 = vmul.f32 %v2311, 0.5
        %v2316 = vmul.f32 %v2312, 0.5
        %v2317 = vmul.f32 %v2277, %v2313
        %v2318 = vmul.f32 %v2279, %v2314
        %v2319 = vmul.f32 %v2281, %v2315
        %v2320 = vmul.f32 %v2283, %v2316
        %v2321 = vpack.c.bf16 %v2319, %v2317
        %v2322 = vpack.c.bf16 %v2320, %v2318
        %v2323 = vld [vmem:[%s18] sm:$0xf]
        %v2324 = vld [vmem:[%s18 + $0x4] sm:$0xf]
        %v2325 = vld [vmem:[%s18 + $0x8] sm:$0xf]
        %v2326 = vld [vmem:[%s18 + $0xc] sm:$0xf]
        %v2327 = vld [vmem:[%s18 + $0x10] sm:$0xf]
        %v2328 = vld [vmem:[%s18 + $0x14] sm:$0xf]
        %v2329 = vld [vmem:[%s18 + $0x18] sm:$0xf]
        %v2330 = vld [vmem:[%s18 + $0x1c] sm:$0xf]
        %v2331 = vld [vmem:[%s18 + $0x20] sm:$0xf]
        %v2332 = vld [vmem:[%s18 + $0x24] sm:$0xf]
        %v2333 = vld [vmem:[%s18 + $0x28] sm:$0xf]
        %v2334 = vld [vmem:[%s18 + $0x2c] sm:$0xf]
        %v2335 = vld [vmem:[%s18 + $0x30] sm:$0xf]
        %v2336 = vld [vmem:[%s18 + $0x34] sm:$0xf]
        %v2337 = vld [vmem:[%s18 + $0x38] sm:$0xf]
        %v2338 = vld [vmem:[%s18 + $0x3c] sm:$0xf]
        %v2339 = vld [vmem:[%s18 + $0x40] sm:$0xf]
        %v2340 = vld [vmem:[%s18 + $0x44] sm:$0xf]
        %v2341 = vld [vmem:[%s18 + $0x48] sm:$0xf]
        %v2342 = vld [vmem:[%s18 + $0x4c] sm:$0xf]
        %v2343 = vld [vmem:[%s18 + $0x50] sm:$0xf]
        %v2344 = vld [vmem:[%s18 + $0x54] sm:$0xf]
        %v2345 = vld [vmem:[%s18 + $0x58] sm:$0xf]
        %v2346 = vld [vmem:[%s18 + $0x5c] sm:$0xf]
        %v2347 = vld [vmem:[%s18 + $0x60] sm:$0xf]
        %v2348 = vld [vmem:[%s18 + $0x64] sm:$0xf]
        %v2349 = vld [vmem:[%s18 + $0x68] sm:$0xf]
        %v2350 = vld [vmem:[%s18 + $0x6c] sm:$0xf]
        %v2351 = vld [vmem:[%s18 + $0x70] sm:$0xf]
        %v2352 = vld [vmem:[%s18 + $0x74] sm:$0xf]
        %v2353 = vld [vmem:[%s18 + $0x78] sm:$0xf]
        %v2354 = vld [vmem:[%s18 + $0x7c] sm:$0xf]
        %v2355 = vld [vmem:[%s19] sm:$0x1]
        %v2357 = vlaneseq
        %v2358 = vshrl.u32 %v2357, 7
        %v2359 = vsub.s32 0, %v2358
        %v2360 = vrot.slane %v2355, %v2359
        %v2394 = vunpack.c.l.b16 %v2323
        %v2395 = vunpack.c.l.b16 %v2324
        %v2396 = vunpack.c.l.b16 %v2325
        %v2397 = vunpack.c.l.b16 %v2326
        %v2398 = vunpack.c.l.b16 %v2327
        %v2399 = vunpack.c.l.b16 %v2328
        %v2400 = vunpack.c.l.b16 %v2329
        %v2401 = vunpack.c.l.b16 %v2330
        %v2402 = vunpack.c.l.b16 %v2331
        %v2403 = vunpack.c.l.b16 %v2332
        %v2404 = vunpack.c.l.b16 %v2333
        %v2405 = vunpack.c.l.b16 %v2334
        %v2406 = vunpack.c.l.b16 %v2335
        %v2407 = vunpack.c.l.b16 %v2336
        %v2408 = vunpack.c.l.b16 %v2337
        %v2409 = vunpack.c.l.b16 %v2338
        %v2410 = vunpack.c.l.b16 %v2339
        %v2411 = vunpack.c.l.b16 %v2340
        %v2412 = vunpack.c.l.b16 %v2341
        %v2413 = vunpack.c.l.b16 %v2342
        %v2414 = vunpack.c.l.b16 %v2343
        %v2415 = vunpack.c.l.b16 %v2344
        %v2416 = vunpack.c.l.b16 %v2345
        %v2417 = vunpack.c.l.b16 %v2346
        %v2418 = vunpack.c.l.b16 %v2347
        %v2419 = vunpack.c.l.b16 %v2348
        %v2420 = vunpack.c.l.b16 %v2349
        %v2421 = vunpack.c.l.b16 %v2350
        %v2422 = vunpack.c.l.b16 %v2351
        %v2423 = vunpack.c.l.b16 %v2352
        %v2424 = vunpack.c.l.b16 %v2353
        %v2425 = vunpack.c.l.b16 %v2354
        %v2426 = vpack.c.b16 %v2395, %v2394
        %v2427 = vpack.c.b16 %v2397, %v2396
        %v2428 = vpack.c.b16 %v2399, %v2398
        %v2429 = vpack.c.b16 %v2401, %v2400
        %v2430 = vpack.c.b16 %v2403, %v2402
        %v2431 = vpack.c.b16 %v2405, %v2404
        %v2432 = vpack.c.b16 %v2407, %v2406
        %v2433 = vpack.c.b16 %v2409, %v2408
        %v2434 = vpack.c.b16 %v2411, %v2410
        %v2435 = vpack.c.b16 %v2413, %v2412
        %v2436 = vpack.c.b16 %v2415, %v2414
        %v2437 = vpack.c.b16 %v2417, %v2416
        %v2438 = vpack.c.b16 %v2419, %v2418
        %v2439 = vpack.c.b16 %v2421, %v2420
        %v2440 = vpack.c.b16 %v2423, %v2422
        %v2441 = vpack.c.b16 %v2425, %v2424
        %2458 = vmatprep.subr.bf16.mxu0 0
        %2459 = vmatpush1.bf16.msra.mxu0 %v2433
        %2460 = vmatprep.subr.bf16.mxu0 0
        %2461 = vmatpush1.bf16.msra.mxu0 %v2432
        %2462 = vmatprep.subr.bf16.mxu0 0
        %2463 = vmatpush1.bf16.msra.mxu0 %v2431
        %2464 = vmatprep.subr.bf16.mxu0 0
        %2465 = vmatpush1.bf16.msra.mxu0 %v2430
        %2466 = vmatprep.subr.bf16.mxu0 0
        %2467 = vmatpush1.bf16.msra.mxu0 %v2429
        %2468 = vmatprep.subr.bf16.mxu0 0
        %2469 = vmatpush1.bf16.msra.mxu0 %v2428
        %2470 = vmatprep.subr.bf16.mxu0 0
        %2471 = vmatpush1.bf16.msra.mxu0 %v2427
        %2472 = vmatprep.subr.bf16.mxu0 0
        %2473 = vmatpush1.bf16.msra.mxu0 %v2426
        %2474 = vmatprep.subr.bf16.mxu0 0
        %2475 = vmatpush2.bf16.msra.mxu0 %v2441
        %2476 = vmatprep.subr.bf16.mxu0 0
        %2477 = vmatpush2.bf16.msra.mxu0 %v2440
        %2478 = vmatprep.subr.bf16.mxu0 0
        %2479 = vmatpush2.bf16.msra.mxu0 %v2439
        %2480 = vmatprep.subr.bf16.mxu0 0
        %2481 = vmatpush2.bf16.msra.mxu0 %v2438
        %2482 = vmatprep.subr.bf16.mxu0 0
        %2483 = vmatpush2.bf16.msra.mxu0 %v2437
        %2484 = vmatprep.subr.bf16.mxu0 0
        %2485 = vmatpush2.bf16.msra.mxu0 %v2436
        %2486 = vmatprep.subr.bf16.mxu0 0
        %2487 = vmatpush2.bf16.msra.mxu0 %v2435
        %2488 = vmatprep.subr.bf16.mxu0 0
        %2489 = vmatpush2.bf16.msra.mxu0 %v2434
        %2490 = vmatprep.mubr.bf16.mxu0 %v2322
        %2491 = vmatmul.mubr.bf16.gmra.mxu0 %v2321
        %v2492 = vpop.f32.mrf.mxu0
        %v2493 = vadd.f32 %v2360, %v2492
        %v2494 = vpop.f32.mrf.mxu0
        %v2495 = vpop.f32.mrf.mxu0
        %v2496 = vadd.f32 %v2360, %v2495
        %v2497 = vpop.f32.mrf.mxu0
        %2498 = vdwg.mxu0
        %v2499 = vadd.f32 %v2132, %v2493
        %v2500 = vadd.f32 %v2133, %v2496
        %2501 = vst.msk [vmem:[%s845] sm:$0xff] %vm1286, %v2499
        %2502 = vst.msk [vmem:[%s845 + $0x8] sm:$0xff] %vm1286, %v2500
        %s2503 = sand.u32 %s515, 1
        %s2504 = scalar_lea.sflag [#allocation6], %s2503
        %s2505 = sand.u32 %s515, 1
        %s2506 = smul.addr %s2505, 16
        %s2507 = scalar_lea.vmem [#allocation16], %s2506
        // Predicated region
        $region133: #{tpu_custom_call.1} parent=99 // pred_check
          %p2508 = pneg %p525
        $region134: #{tpu_custom_call.1} parent=99 // pred_check_branch
          %2510 = sbr.rel (%p2508) target = $region136
        $region135: #{tpu_custom_call.1} parent=99 // pred_region
          %s2511 = smul.u32 2, %s47
          %s2513 = ssub.s32 256, 256
          %2514 = vsyncadd %s2504, %s2513
          %s2515 = smul.addr %s46, 2
          %s2516 = sadd.s32 %s2511, %s2515
          %s2517 = smul.addr %s2516, 128
          %s2518 = scalar_lea.hbm %s20, %s2517
          %s2519 = sshll.u32 %s2507, 4
          %s2520 = int_to_ptr.vmem [resolvable:$true] %s2519
          %2525 = dma.vmem_to_hbm [thread:$0]  %s2520, 256, %s2518, %s2504, 128, 128, 8
        $region136: #{tpu_custom_call.1} parent=99 // pred_fallthru
          _
      $region100: #{tpu_custom_call.1} parent=5 // pred_fallthru
        _
      %p2526 = scmp.le.s32.totalorder 2, %s37
      // Predicated region
      $region137: #{tpu_custom_call.1} parent=5 // pred_check
        %p2527 = pneg %p2526
      $region138: #{tpu_custom_call.1} parent=5 // pred_check_branch
        %2529 = sbr.rel (%p2527) target = $region140
      $region139: #{tpu_custom_call.1} parent=5 // pred_region
        %s2530 = ssub.s32 %s37, 2
        // Predicated region
        $region141: #{tpu_custom_call.1} parent=139 // pred_check
          %p2531 = pneg %p531
        $region142: #{tpu_custom_call.1} parent=139 // pred_check_branch
          %2533 = sbr.rel (%p2531) target = $region144
        $region143: #{tpu_custom_call.1} parent=139 // pred_region
          %s2534 = sand.u32 %s516, 1
          %s2535 = scalar_lea.sflag [#allocation6], %s2534
          %s2536 = sand.u32 %s516, 1
          %s2537 = smul.addr %s2536, 16
          %s2538 = scalar_lea.vmem [#allocation16], %s2537
          %2539 = dma.done %s2535, 256
        $region144: #{tpu_custom_call.1} parent=139 // pred_fallthru
          _
      $region140: #{tpu_custom_call.1} parent=5 // pred_fallthru
        _
    $region6: #{tpu_custom_call.1} parent=1 // loop_footer
      %s41 = sadd.s32 1, %s37
    $region7: #{tpu_custom_call.1} parent=1 // loop_footer_branch
      %36 = sbr.rel target = $region3
    $region8: #{tpu_custom_call.1} parent=1 // loop_exit
      _
    %2540 = vsyncpa [#allocation5], 1
    %s2541 = scalar_lea.sflag [#allocation5], 1
    %2542 = vsyncpa %s2541, 1
    %2543 = vsyncpa [#allocation8], 1
    %s2544 = scalar_lea.sflag [#allocation8], 1
    %2545 = vsyncpa %s2544, 1
    %2546 = vsyncpa [#allocation11], 1
    %2547 = vsyncpa [#allocation14], 1
    %2548 = vsyncpa [#allocation6], 1
    %s2549 = scalar_lea.sflag [#allocation6], 1
    %2550 = vsyncpa %s2549, 1

</llo_original>
